<compile_context>
chip_gen: v6e
topology: v6e:2x2x1
jax: 0.10.0
libtpu: 0.0.40
codegen_flags: <defaults>
</compile_context>

<pallas_src>
import functools

import jax
import jax.numpy as jnp
from jax.experimental import pallas as pl
from jax.experimental.pallas import tpu as pltpu


# ------------------------------- helpers ----------------------------------- #

def _pad_to(x, m):
    return ((x + m - 1) // m) * m


def sinusoidal_pe(seq_len, d_model):
    """Matches PositionalEmbedding.pos: interleaved sin/cos."""
    even_i = jnp.arange(0, d_model, 2, dtype=jnp.float32)
    denominator = jnp.power(10000.0, even_i / d_model)
    position = jnp.arange(seq_len, dtype=jnp.float32).reshape(seq_len, 1)
    even_pe = jnp.sin(position / denominator)
    odd_pe = jnp.cos(position / denominator)
    stacked = jnp.stack([even_pe, odd_pe], axis=2)       # [S, D/2, 2]
    return stacked.reshape(seq_len, d_model)             # [S, D]


# --------------------------- fused forward kernel --------------------------- #

def _modelg1_kernel(x_ref, tok_ref,
                    ln1g_ref, ln1b_ref, wqkv_ref, bqkv_ref, wout_ref, bout_ref,
                    ln2g_ref, ln2b_ref, w1_ref, b1_ref, w2_ref, b2_ref,
                    lw_ref, lb_ref, o_ref, *, num_layers, nheads):
    """One grid step == one batch element's full forward, activation resident in VMEM."""
    S, D = x_ref.shape[1], x_ref.shape[2]
    Dh = D // nheads
    scale = 1.0 / float(Dh) ** 0.5

    x = x_ref[0].astype(jnp.float32)                     # [S, D] residual stream (f32)

    # Additive attention mask built in-kernel: causal (j > i) OR key-padding (tok == 0).
    row = jax.lax.broadcasted_iota(jnp.int32, (S, S), 0)
    col = jax.lax.broadcasted_iota(jnp.int32, (S, S), 1)
    pad_key = tok_ref[0] == 0                            # [1, S] bool, broadcasts over rows
    masked = (col > row) | pad_key                       # [S, S] bool
    # Large finite negative (not -inf) keeps any fully-masked row NaN-free.
    mask_add = jnp.where(masked, -1e30, 0.0).astype(jnp.float32)

    def layer_norm(v, g, b):                             # f32 stats, eps matches nn.LayerNorm
        mu = jnp.mean(v, axis=-1, keepdims=True)
        var = jnp.mean(jnp.square(v - mu), axis=-1, keepdims=True)
        return (v - mu) * jax.lax.rsqrt(var + 1e-5) * g + b

    for l in range(num_layers):                          # static unroll (small L)
        # -------- self-attention block (norm_first) --------
        h = layer_norm(x, ln1g_ref[l], ln1b_ref[l]).astype(jnp.bfloat16)
        qkv = jnp.dot(h, wqkv_ref[l], preferred_element_type=jnp.float32) + bqkv_ref[l]
        qkv = qkv.astype(jnp.bfloat16)                   # [S, 3D]
        wo_l = wout_ref[l]                               # [H, Dh, D] bf16 out-proj blocks
        attn = x + bout_ref[l]                           # residual + out-proj bias (f32)
        for hd in range(nheads):                         # static unroll (small H)
            s0 = hd * Dh
            q_h = qkv[:, s0:s0 + Dh]
            k_h = qkv[:, D + s0:D + s0 + Dh]
            v_h = qkv[:, 2 * D + s0:2 * D + s0 + Dh]
            # q @ k^T without materializing a transpose: contract the last dims.
            s = jax.lax.dot_general(q_h, k_h, (((1,), (1,)), ((), ())),
                                    preferred_element_type=jnp.float32)
            s = s * scale + mask_add
            p = jnp.exp(s - jnp.max(s, axis=-1, keepdims=True))
            inv = pl.reciprocal(jnp.sum(p, axis=-1, keepdims=True), approx=True)
            o_h = jnp.dot(p.astype(jnp.bfloat16), v_h,
                          preferred_element_type=jnp.float32) * inv     # [S, Dh] f32
            # Push the head straight through its out-proj slice (no lane concatenate).
            attn = attn + jnp.dot(o_h.astype(jnp.bfloat16), wo_l[hd],
                                  preferred_element_type=jnp.float32)
        x = attn

        # -------- feed-forward block (norm_first) --------
        h = layer_norm(x, ln2g_ref[l], ln2b_ref[l]).astype(jnp.bfloat16)
        f = jnp.dot(h, w1_ref[l], preferred_element_type=jnp.float32) + b1_ref[l]
        f = jnp.maximum(f, 0.0).astype(jnp.bfloat16)     # ReLU
        x = x + jnp.dot(f, w2_ref[l], preferred_element_type=jnp.float32) + b2_ref[l]

    # -------- LM head (vocab padded to a lane-dense multiple of 128 at init) --------
    logits = jnp.dot(x.astype(jnp.bfloat16), lw_ref[...],
                     preferred_element_type=jnp.float32) + lb_ref[...]
    o_ref[0] = logits                                    # single lane-dense [S, Vp] store


# ------------------------------ params / wrapper ----------------------------- #

def init_params(key, vocab_size, d_model, nhead, num_layers, dim_ff):
    """Weights stored once, at init, in kernel-ready layouts (bf16, stacked over layers,
    out-proj pre-split per head, LM head pre-padded to a 128-lane-dense width)."""
    D, F, L, H = d_model, dim_ff, num_layers, nhead
    Dh = D // H
    Vp = _pad_to(max(vocab_size, 128), 128)
    keys = jax.random.split(key, 2 + L)

    emb = jax.random.normal(keys[0], (vocab_size, D), jnp.float32) * 0.02
    emb = emb.at[0].set(0.0)                             # padding_idx = 0

    def w(k, shape, scale=0.05):
        return (jax.random.normal(k, shape, jnp.float32) * scale).astype(jnp.bfloat16)

    lks = [jax.random.split(keys[2 + l], 6) for l in range(L)]
    params = dict(
        embedding=emb,
        ln1_g=jnp.ones((L, 1, D), jnp.float32),
        ln1_b=jnp.zeros((L, 1, D), jnp.float32),
        ln2_g=jnp.ones((L, 1, D), jnp.float32),
        ln2_b=jnp.zeros((L, 1, D), jnp.float32),
        wqkv=jnp.stack([w(lks[l][0], (D, 3 * D)) for l in range(L)]),      # [L, D, 3D]
        bqkv=jnp.zeros((L, 1, 3 * D), jnp.float32),
        wout=jnp.stack([w(lks[l][1], (H, Dh, D)) for l in range(L)]),      # [L, H, Dh, D]
        bout=jnp.zeros((L, 1, D), jnp.float32),
        w1=jnp.stack([w(lks[l][2], (D, F)) for l in range(L)]),            # [L, D, F]
        b1=jnp.stack([jax.random.normal(lks[l][3], (1, F), jnp.float32) * 0.01
                      for l in range(L)]),
        w2=jnp.stack([w(lks[l][4], (F, D)) for l in range(L)]),            # [L, F, D]
        b2=jnp.stack([jax.random.normal(lks[l][5], (1, D), jnp.float32) * 0.01
                      for l in range(L)]),
    )
    lw = jax.random.normal(keys[1], (D, vocab_size), jnp.float32) * 0.05
    params["lout_w"] = (jnp.zeros((D, Vp), jnp.float32)
                        .at[:, :vocab_size].set(lw).astype(jnp.bfloat16))  # [D, Vp]
    params["lout_b"] = jnp.zeros((1, Vp), jnp.float32)
    return params


_WEIGHT_ORDER = ("ln1_g", "ln1_b", "wqkv", "bqkv", "wout", "bout",
                 "ln2_g", "ln2_b", "w1", "b1", "w2", "b2", "lout_w", "lout_b")


def model_forward(params, tokens, pos_enc, *, nhead, vocab_size):
    """ModelG1.forward: embedding + PE -> fused pre-LN encoder + LM head kernel."""
    B, S = tokens.shape
    D = params["embedding"].shape[1]
    Vp = params["lout_w"].shape[1]
    L = params["wqkv"].shape[0]

    # Embedding lookup + positional encoding (dropout = identity): one XLA gather.
    x = (params["embedding"][tokens] + pos_enc[None]).astype(jnp.float32)   # [B, S, D]
    tok = tokens.reshape(B, 1, S).astype(jnp.int32)

    def rep(shape):                                        # weight blocks: fetched once
        zeros = (0,) * len(shape)
        return pl.BlockSpec(shape, lambda b, _z=zeros: _z)

    weights = [params[k] for k in _WEIGHT_ORDER]
    in_specs = ([pl.BlockSpec((1, S, D), lambda b: (b, 0, 0)),
                 pl.BlockSpec((1, 1, S), lambda b: (b, 0, 0))]
                + [rep(wgt.shape) for wgt in weights])

    logits = pl.pallas_call(
        functools.partial(_modelg1_kernel, num_layers=L, nheads=nhead),
        out_shape=jax.ShapeDtypeStruct((B, S, Vp), jnp.float32),
        grid=(B,),
        in_specs=in_specs,
        out_specs=pl.BlockSpec((1, S, Vp), lambda b: (b, 0, 0)),
        compiler_params=pltpu.CompilerParams(dimension_semantics=("parallel",)),
    )(x, tok, *weights)

    return logits[:, :, :vocab_size]


# ----------------------------------- main ----------------------------------- #

if __name__ == "__main__":
    VOCAB, D_MODEL, NHEAD, NUM_LAYERS, DIM_FF = 40, 32, 4, 2, 64
    B, S = 2, 8

    key = jax.random.PRNGKey(0)
    pkey, tkey = jax.random.split(key)
    params = init_params(pkey, VOCAB, D_MODEL, NHEAD, NUM_LAYERS, DIM_FF)

    # Hoisted constants (not rebuilt every forward call).
    pos_enc = sinusoidal_pe(S, D_MODEL)                   # [S, D]

    tokens = jax.random.randint(tkey, (B, S), 1, VOCAB, dtype=jnp.int32)
    tokens = tokens.at[0, -2:].set(0)                     # pad tokens at tail of seq 0

    fwd = jax.jit(functools.partial(model_forward, nhead=NHEAD, vocab_size=VOCAB))
    logits = fwd(params, tokens, pos_enc)
    jax.block_until_ready(logits)

    assert logits.shape == (B, S, VOCAB), logits.shape
    assert bool(jnp.all(jnp.isfinite(logits)))
    print("KERNEL_OK")
</pallas_src>

<mosaic_0001>
module attributes {stable_mosaic.version = 11 : i64} {
  func.func @_modelg1_kernel(%arg0: i32, %arg1: memref<1x8x32xf32, #tpu.memory_space<vmem>>, %arg2: memref<1x1x8xi32, #tpu.memory_space<vmem>>, %arg3: memref<2x1x32xf32, #tpu.memory_space<vmem>>, %arg4: memref<2x1x32xf32, #tpu.memory_space<vmem>>, %arg5: memref<2x32x96xbf16, #tpu.memory_space<vmem>>, %arg6: memref<2x1x96xf32, #tpu.memory_space<vmem>>, %arg7: memref<2x4x8x32xbf16, #tpu.memory_space<vmem>>, %arg8: memref<2x1x32xf32, #tpu.memory_space<vmem>>, %arg9: memref<2x1x32xf32, #tpu.memory_space<vmem>>, %arg10: memref<2x1x32xf32, #tpu.memory_space<vmem>>, %arg11: memref<2x32x64xbf16, #tpu.memory_space<vmem>>, %arg12: memref<2x1x64xf32, #tpu.memory_space<vmem>>, %arg13: memref<2x64x32xbf16, #tpu.memory_space<vmem>>, %arg14: memref<2x1x32xf32, #tpu.memory_space<vmem>>, %arg15: memref<32x128xbf16, #tpu.memory_space<vmem>>, %arg16: memref<1x128xf32, #tpu.memory_space<vmem>>, %arg17: memref<1x8x128xf32, #tpu.memory_space<vmem>>) attributes {dimension_semantics = [#tpu.dimension_semantics<parallel>], iteration_bounds = array<i64: 2>, scalar_prefetch = 0 : i64, scratch_operands = 0 : i64, tpu.core_type = #tpu.core_type<tc>, window_params = [{transform_indices = @transform_0, window_bounds = array<i64: 1, 8, 32>}, {transform_indices = @transform_1, window_bounds = array<i64: 1, 1, 8>}, {pipeline_mode = #tpu.pipeline_mode<synchronous>, transform_indices = @transform_2, window_bounds = array<i64: 2, 1, 32>}, {pipeline_mode = #tpu.pipeline_mode<synchronous>, transform_indices = @transform_3, window_bounds = array<i64: 2, 1, 32>}, {pipeline_mode = #tpu.pipeline_mode<synchronous>, transform_indices = @transform_4, window_bounds = array<i64: 2, 32, 96>}, {pipeline_mode = #tpu.pipeline_mode<synchronous>, transform_indices = @transform_5, window_bounds = array<i64: 2, 1, 96>}, {pipeline_mode = #tpu.pipeline_mode<synchronous>, transform_indices = @transform_6, window_bounds = array<i64: 2, 4, 8, 32>}, {pipeline_mode = #tpu.pipeline_mode<synchronous>, transform_indices = @transform_7, window_bounds = array<i64: 2, 1, 32>}, {pipeline_mode = #tpu.pipeline_mode<synchronous>, transform_indices = @transform_8, window_bounds = array<i64: 2, 1, 32>}, {pipeline_mode = #tpu.pipeline_mode<synchronous>, transform_indices = @transform_9, window_bounds = array<i64: 2, 1, 32>}, {pipeline_mode = #tpu.pipeline_mode<synchronous>, transform_indices = @transform_10, window_bounds = array<i64: 2, 32, 64>}, {pipeline_mode = #tpu.pipeline_mode<synchronous>, transform_indices = @transform_11, window_bounds = array<i64: 2, 1, 64>}, {pipeline_mode = #tpu.pipeline_mode<synchronous>, transform_indices = @transform_12, window_bounds = array<i64: 2, 64, 32>}, {pipeline_mode = #tpu.pipeline_mode<synchronous>, transform_indices = @transform_13, window_bounds = array<i64: 2, 1, 32>}, {pipeline_mode = #tpu.pipeline_mode<synchronous>, transform_indices = @transform_14, window_bounds = array<i64: 32, 128>}, {pipeline_mode = #tpu.pipeline_mode<synchronous>, transform_indices = @transform_15, window_bounds = array<i64: 1, 128>}, {transform_indices = @transform_16, window_bounds = array<i64: 1, 8, 128>}]} {
    %c0 = arith.constant 0 : index
    %c0_0 = arith.constant 0 : index
    %c0_1 = arith.constant 0 : index
    %0 = vector.load %arg1[%c0, %c0_0, %c0_1] : memref<1x8x32xf32, #tpu.memory_space<vmem>>, vector<1x8x32xf32>
    %1 = vector.shape_cast %0 : vector<1x8x32xf32> to vector<8x32xf32>
    %2 = tpu.iota {dimensions = array<i32: 0>} : vector<8x8xi32>
    %3 = tpu.iota {dimensions = array<i32: 1>} : vector<8x8xi32>
    %c0_2 = arith.constant 0 : index
    %c0_3 = arith.constant 0 : index
    %c0_4 = arith.constant 0 : index
    %4 = vector.load %arg2[%c0_2, %c0_3, %c0_4] : memref<1x1x8xi32, #tpu.memory_space<vmem>>, vector<1x1x8xi32>
    %5 = vector.shape_cast %4 : vector<1x1x8xi32> to vector<1x8xi32>
    %c0_i32 = arith.constant 0 : i32
    %6 = vector.broadcast %c0_i32 : i32 to vector<1x8xi32>
    %7 = arith.cmpi eq, %5, %6 : vector<1x8xi32>
    %8 = arith.cmpi sgt, %3, %2 : vector<8x8xi32>
    %9 = vector.broadcast %7 : vector<1x8xi1> to vector<8x8xi1>
    %10 = arith.ori %8, %9 : vector<8x8xi1>
    %cst = arith.constant -1.000000e+30 : f32
    %cst_5 = arith.constant 0.000000e+00 : f32
    %11 = vector.broadcast %cst : f32 to vector<8x8xf32>
    %12 = vector.broadcast %cst_5 : f32 to vector<8x8xf32>
    %13 = arith.select %10, %11, %12 : vector<8x8xi1>, vector<8x8xf32>
    %c0_6 = arith.constant 0 : index
    %c0_7 = arith.constant 0 : index
    %c0_8 = arith.constant 0 : index
    %14 = vector.load %arg3[%c0_6, %c0_7, %c0_8] : memref<2x1x32xf32, #tpu.memory_space<vmem>>, vector<1x1x32xf32>
    %15 = vector.shape_cast %14 : vector<1x1x32xf32> to vector<1x32xf32>
    %c0_9 = arith.constant 0 : index
    %c0_10 = arith.constant 0 : index
    %c0_11 = arith.constant 0 : index
    %16 = vector.load %arg4[%c0_9, %c0_10, %c0_11] : memref<2x1x32xf32, #tpu.memory_space<vmem>>, vector<1x1x32xf32>
    %17 = vector.shape_cast %16 : vector<1x1x32xf32> to vector<1x32xf32>
    %cst_12 = arith.constant dense<0.000000e+00> : vector<8xf32>
    %18 = vector.multi_reduction <add>, %1, %cst_12 [1] : vector<8x32xf32> to vector<8xf32>
    %19 = vector.shape_cast %18 : vector<8xf32> to vector<8x1xf32>
    %cst_13 = arith.constant 3.200000e+01 : f32
    %20 = vector.broadcast %cst_13 : f32 to vector<8x1xf32>
    %21 = arith.divf %19, %20 : vector<8x1xf32>
    %22 = vector.broadcast %21 : vector<8x1xf32> to vector<8x32xf32>
    %23 = arith.subf %1, %22 : vector<8x32xf32>
    %24 = arith.mulf %23, %23 : vector<8x32xf32>
    %cst_14 = arith.constant dense<0.000000e+00> : vector<8xf32>
    %25 = vector.multi_reduction <add>, %24, %cst_14 [1] : vector<8x32xf32> to vector<8xf32>
    %26 = vector.shape_cast %25 : vector<8xf32> to vector<8x1xf32>
    %cst_15 = arith.constant 3.200000e+01 : f32
    %27 = vector.broadcast %cst_15 : f32 to vector<8x1xf32>
    %28 = arith.divf %26, %27 : vector<8x1xf32>
    %29 = vector.broadcast %21 : vector<8x1xf32> to vector<8x32xf32>
    %30 = arith.subf %1, %29 : vector<8x32xf32>
    %cst_16 = arith.constant 9.99999974E-6 : f32
    %31 = vector.broadcast %cst_16 : f32 to vector<8x1xf32>
    %32 = arith.addf %28, %31 : vector<8x1xf32>
    %33 = math.rsqrt %32 : vector<8x1xf32>
    %34 = vector.broadcast %33 : vector<8x1xf32> to vector<8x32xf32>
    %35 = arith.mulf %30, %34 : vector<8x32xf32>
    %36 = vector.broadcast %15 : vector<1x32xf32> to vector<8x32xf32>
    %37 = arith.mulf %35, %36 : vector<8x32xf32>
    %38 = vector.broadcast %17 : vector<1x32xf32> to vector<8x32xf32>
    %39 = arith.addf %37, %38 : vector<8x32xf32>
    %40 = arith.truncf %39 : vector<8x32xf32> to vector<8x32xbf16>
    %c0_17 = arith.constant 0 : index
    %c0_18 = arith.constant 0 : index
    %c0_19 = arith.constant 0 : index
    %41 = vector.load %arg5[%c0_17, %c0_18, %c0_19] : memref<2x32x96xbf16, #tpu.memory_space<vmem>>, vector<1x32x96xbf16>
    %42 = vector.shape_cast %41 : vector<1x32x96xbf16> to vector<32x96xbf16>
    %cst_20 = arith.constant dense<0.000000e+00> : vector<8x96xf32>
    %43 = tpu.matmul %40, %42, %cst_20 {dimension_numbers = #tpu.dot_dimension_numbers<[1], [0], [0], [1], [0, 0, 1, 1], [], []>} : vector<8x32xbf16>, vector<32x96xbf16>, vector<8x96xf32> -> vector<8x96xf32>
    %c0_21 = arith.constant 0 : index
    %c0_22 = arith.constant 0 : index
    %c0_23 = arith.constant 0 : index
    %44 = vector.load %arg6[%c0_21, %c0_22, %c0_23] : memref<2x1x96xf32, #tpu.memory_space<vmem>>, vector<1x1x96xf32>
    %45 = vector.shape_cast %44 : vector<1x1x96xf32> to vector<1x96xf32>
    %46 = vector.broadcast %45 : vector<1x96xf32> to vector<8x96xf32>
    %47 = arith.addf %43, %46 : vector<8x96xf32>
    %48 = arith.truncf %47 : vector<8x96xf32> to vector<8x96xbf16>
    %c0_24 = arith.constant 0 : index
    %c0_25 = arith.constant 0 : index
    %c0_26 = arith.constant 0 : index
    %c0_27 = arith.constant 0 : index
    %49 = vector.load %arg7[%c0_24, %c0_25, %c0_26, %c0_27] : memref<2x4x8x32xbf16, #tpu.memory_space<vmem>>, vector<1x4x8x32xbf16>
    %50 = vector.shape_cast %49 : vector<1x4x8x32xbf16> to vector<4x8x32xbf16>
    %c0_28 = arith.constant 0 : index
    %c0_29 = arith.constant 0 : index
    %c0_30 = arith.constant 0 : index
    %51 = vector.load %arg8[%c0_28, %c0_29, %c0_30] : memref<2x1x32xf32, #tpu.memory_space<vmem>>, vector<1x1x32xf32>
    %52 = vector.shape_cast %51 : vector<1x1x32xf32> to vector<1x32xf32>
    %53 = vector.broadcast %52 : vector<1x32xf32> to vector<8x32xf32>
    %54 = arith.addf %1, %53 : vector<8x32xf32>
    %55 = vector.extract_strided_slice %48 {offsets = [0, 0], sizes = [8, 8], strides = [1, 1]} : vector<8x96xbf16> to vector<8x8xbf16>
    %56 = vector.extract_strided_slice %48 {offsets = [0, 32], sizes = [8, 8], strides = [1, 1]} : vector<8x96xbf16> to vector<8x8xbf16>
    %57 = vector.extract_strided_slice %48 {offsets = [0, 64], sizes = [8, 8], strides = [1, 1]} : vector<8x96xbf16> to vector<8x8xbf16>
    %cst_31 = arith.constant dense<0.000000e+00> : vector<8x8xf32>
    %58 = tpu.matmul %55, %56, %cst_31 {dimension_numbers = #tpu.dot_dimension_numbers<[1], [1], [0], [0], [0, 0, 1, 0], [], []>} : vector<8x8xbf16>, vector<8x8xbf16>, vector<8x8xf32> -> vector<8x8xf32>
    %cst_32 = arith.constant 0.353553385 : f32
    %59 = vector.broadcast %cst_32 : f32 to vector<8x8xf32>
    %60 = arith.mulf %58, %59 : vector<8x8xf32>
    %61 = arith.addf %60, %13 : vector<8x8xf32>
    %cst_33 = arith.constant dense<0xFF800000> : vector<8xf32>
    %62 = vector.multi_reduction <maximumf>, %61, %cst_33 [1] : vector<8x8xf32> to vector<8xf32>
    %63 = vector.shape_cast %62 : vector<8xf32> to vector<8x1xf32>
    %64 = vector.broadcast %63 : vector<8x1xf32> to vector<8x8xf32>
    %65 = arith.subf %61, %64 : vector<8x8xf32>
    %66 = math.exp %65 : vector<8x8xf32>
    %cst_34 = arith.constant dense<0.000000e+00> : vector<8xf32>
    %67 = vector.multi_reduction <add>, %66, %cst_34 [1] : vector<8x8xf32> to vector<8xf32>
    %68 = vector.shape_cast %67 : vector<8xf32> to vector<8x1xf32>
    %69 = tpu.reciprocal %68 {approx = true} : vector<8x1xf32> -> vector<8x1xf32>
    %70 = arith.truncf %66 : vector<8x8xf32> to vector<8x8xbf16>
    %cst_35 = arith.constant dense<0.000000e+00> : vector<8x8xf32>
    %71 = tpu.matmul %70, %57, %cst_35 {dimension_numbers = #tpu.dot_dimension_numbers<[1], [0], [0], [1], [0, 0, 1, 1], [], []>} : vector<8x8xbf16>, vector<8x8xbf16>, vector<8x8xf32> -> vector<8x8xf32>
    %72 = vector.broadcast %69 : vector<8x1xf32> to vector<8x8xf32>
    %73 = arith.mulf %71, %72 : vector<8x8xf32>
    %74 = arith.truncf %73 : vector<8x8xf32> to vector<8x8xbf16>
    %75 = vector.extract_strided_slice %50 {offsets = [0, 0, 0], sizes = [1, 8, 32], strides = [1, 1, 1]} : vector<4x8x32xbf16> to vector<1x8x32xbf16>
    %76 = vector.shape_cast %75 : vector<1x8x32xbf16> to vector<8x32xbf16>
    %cst_36 = arith.constant dense<0.000000e+00> : vector<8x32xf32>
    %77 = tpu.matmul %74, %76, %cst_36 {dimension_numbers = #tpu.dot_dimension_numbers<[1], [0], [0], [1], [0, 0, 1, 1], [], []>} : vector<8x8xbf16>, vector<8x32xbf16>, vector<8x32xf32> -> vector<8x32xf32>
    %78 = arith.addf %54, %77 : vector<8x32xf32>
    %79 = vector.extract_strided_slice %48 {offsets = [0, 8], sizes = [8, 8], strides = [1, 1]} : vector<8x96xbf16> to vector<8x8xbf16>
    %80 = vector.extract_strided_slice %48 {offsets = [0, 40], sizes = [8, 8], strides = [1, 1]} : vector<8x96xbf16> to vector<8x8xbf16>
    %81 = vector.extract_strided_slice %48 {offsets = [0, 72], sizes = [8, 8], strides = [1, 1]} : vector<8x96xbf16> to vector<8x8xbf16>
    %cst_37 = arith.constant dense<0.000000e+00> : vector<8x8xf32>
    %82 = tpu.matmul %79, %80, %cst_37 {dimension_numbers = #tpu.dot_dimension_numbers<[1], [1], [0], [0], [0, 0, 1, 0], [], []>} : vector<8x8xbf16>, vector<8x8xbf16>, vector<8x8xf32> -> vector<8x8xf32>
    %cst_38 = arith.constant 0.353553385 : f32
    %83 = vector.broadcast %cst_38 : f32 to vector<8x8xf32>
    %84 = arith.mulf %82, %83 : vector<8x8xf32>
    %85 = arith.addf %84, %13 : vector<8x8xf32>
    %cst_39 = arith.constant dense<0xFF800000> : vector<8xf32>
    %86 = vector.multi_reduction <maximumf>, %85, %cst_39 [1] : vector<8x8xf32> to vector<8xf32>
    %87 = vector.shape_cast %86 : vector<8xf32> to vector<8x1xf32>
    %88 = vector.broadcast %87 : vector<8x1xf32> to vector<8x8xf32>
    %89 = arith.subf %85, %88 : vector<8x8xf32>
    %90 = math.exp %89 : vector<8x8xf32>
    %cst_40 = arith.constant dense<0.000000e+00> : vector<8xf32>
    %91 = vector.multi_reduction <add>, %90, %cst_40 [1] : vector<8x8xf32> to vector<8xf32>
    %92 = vector.shape_cast %91 : vector<8xf32> to vector<8x1xf32>
    %93 = tpu.reciprocal %92 {approx = true} : vector<8x1xf32> -> vector<8x1xf32>
    %94 = arith.truncf %90 : vector<8x8xf32> to vector<8x8xbf16>
    %cst_41 = arith.constant dense<0.000000e+00> : vector<8x8xf32>
    %95 = tpu.matmul %94, %81, %cst_41 {dimension_numbers = #tpu.dot_dimension_numbers<[1], [0], [0], [1], [0, 0, 1, 1], [], []>} : vector<8x8xbf16>, vector<8x8xbf16>, vector<8x8xf32> -> vector<8x8xf32>
    %96 = vector.broadcast %93 : vector<8x1xf32> to vector<8x8xf32>
    %97 = arith.mulf %95, %96 : vector<8x8xf32>
    %98 = arith.truncf %97 : vector<8x8xf32> to vector<8x8xbf16>
    %99 = vector.extract_strided_slice %50 {offsets = [1, 0, 0], sizes = [1, 8, 32], strides = [1, 1, 1]} : vector<4x8x32xbf16> to vector<1x8x32xbf16>
    %100 = vector.shape_cast %99 : vector<1x8x32xbf16> to vector<8x32xbf16>
    %cst_42 = arith.constant dense<0.000000e+00> : vector<8x32xf32>
    %101 = tpu.matmul %98, %100, %cst_42 {dimension_numbers = #tpu.dot_dimension_numbers<[1], [0], [0], [1], [0, 0, 1, 1], [], []>} : vector<8x8xbf16>, vector<8x32xbf16>, vector<8x32xf32> -> vector<8x32xf32>
    %102 = arith.addf %78, %101 : vector<8x32xf32>
    %103 = vector.extract_strided_slice %48 {offsets = [0, 16], sizes = [8, 8], strides = [1, 1]} : vector<8x96xbf16> to vector<8x8xbf16>
    %104 = vector.extract_strided_slice %48 {offsets = [0, 48], sizes = [8, 8], strides = [1, 1]} : vector<8x96xbf16> to vector<8x8xbf16>
    %105 = vector.extract_strided_slice %48 {offsets = [0, 80], sizes = [8, 8], strides = [1, 1]} : vector<8x96xbf16> to vector<8x8xbf16>
    %cst_43 = arith.constant dense<0.000000e+00> : vector<8x8xf32>
    %106 = tpu.matmul %103, %104, %cst_43 {dimension_numbers = #tpu.dot_dimension_numbers<[1], [1], [0], [0], [0, 0, 1, 0], [], []>} : vector<8x8xbf16>, vector<8x8xbf16>, vector<8x8xf32> -> vector<8x8xf32>
    %cst_44 = arith.constant 0.353553385 : f32
    %107 = vector.broadcast %cst_44 : f32 to vector<8x8xf32>
    %108 = arith.mulf %106, %107 : vector<8x8xf32>
    %109 = arith.addf %108, %13 : vector<8x8xf32>
    %cst_45 = arith.constant dense<0xFF800000> : vector<8xf32>
    %110 = vector.multi_reduction <maximumf>, %109, %cst_45 [1] : vector<8x8xf32> to vector<8xf32>
    %111 = vector.shape_cast %110 : vector<8xf32> to vector<8x1xf32>
    %112 = vector.broadcast %111 : vector<8x1xf32> to vector<8x8xf32>
    %113 = arith.subf %109, %112 : vector<8x8xf32>
    %114 = math.exp %113 : vector<8x8xf32>
    %cst_46 = arith.constant dense<0.000000e+00> : vector<8xf32>
    %115 = vector.multi_reduction <add>, %114, %cst_46 [1] : vector<8x8xf32> to vector<8xf32>
    %116 = vector.shape_cast %115 : vector<8xf32> to vector<8x1xf32>
    %117 = tpu.reciprocal %116 {approx = true} : vector<8x1xf32> -> vector<8x1xf32>
    %118 = arith.truncf %114 : vector<8x8xf32> to vector<8x8xbf16>
    %cst_47 = arith.constant dense<0.000000e+00> : vector<8x8xf32>
    %119 = tpu.matmul %118, %105, %cst_47 {dimension_numbers = #tpu.dot_dimension_numbers<[1], [0], [0], [1], [0, 0, 1, 1], [], []>} : vector<8x8xbf16>, vector<8x8xbf16>, vector<8x8xf32> -> vector<8x8xf32>
    %120 = vector.broadcast %117 : vector<8x1xf32> to vector<8x8xf32>
    %121 = arith.mulf %119, %120 : vector<8x8xf32>
    %122 = arith.truncf %121 : vector<8x8xf32> to vector<8x8xbf16>
    %123 = vector.extract_strided_slice %50 {offsets = [2, 0, 0], sizes = [1, 8, 32], strides = [1, 1, 1]} : vector<4x8x32xbf16> to vector<1x8x32xbf16>
    %124 = vector.shape_cast %123 : vector<1x8x32xbf16> to vector<8x32xbf16>
    %cst_48 = arith.constant dense<0.000000e+00> : vector<8x32xf32>
    %125 = tpu.matmul %122, %124, %cst_48 {dimension_numbers = #tpu.dot_dimension_numbers<[1], [0], [0], [1], [0, 0, 1, 1], [], []>} : vector<8x8xbf16>, vector<8x32xbf16>, vector<8x32xf32> -> vector<8x32xf32>
    %126 = arith.addf %102, %125 : vector<8x32xf32>
    %127 = vector.extract_strided_slice %48 {offsets = [0, 24], sizes = [8, 8], strides = [1, 1]} : vector<8x96xbf16> to vector<8x8xbf16>
    %128 = vector.extract_strided_slice %48 {offsets = [0, 56], sizes = [8, 8], strides = [1, 1]} : vector<8x96xbf16> to vector<8x8xbf16>
    %129 = vector.extract_strided_slice %48 {offsets = [0, 88], sizes = [8, 8], strides = [1, 1]} : vector<8x96xbf16> to vector<8x8xbf16>
    %cst_49 = arith.constant dense<0.000000e+00> : vector<8x8xf32>
    %130 = tpu.matmul %127, %128, %cst_49 {dimension_numbers = #tpu.dot_dimension_numbers<[1], [1], [0], [0], [0, 0, 1, 0], [], []>} : vector<8x8xbf16>, vector<8x8xbf16>, vector<8x8xf32> -> vector<8x8xf32>
    %cst_50 = arith.constant 0.353553385 : f32
    %131 = vector.broadcast %cst_50 : f32 to vector<8x8xf32>
    %132 = arith.mulf %130, %131 : vector<8x8xf32>
    %133 = arith.addf %132, %13 : vector<8x8xf32>
    %cst_51 = arith.constant dense<0xFF800000> : vector<8xf32>
    %134 = vector.multi_reduction <maximumf>, %133, %cst_51 [1] : vector<8x8xf32> to vector<8xf32>
    %135 = vector.shape_cast %134 : vector<8xf32> to vector<8x1xf32>
    %136 = vector.broadcast %135 : vector<8x1xf32> to vector<8x8xf32>
    %137 = arith.subf %133, %136 : vector<8x8xf32>
    %138 = math.exp %137 : vector<8x8xf32>
    %cst_52 = arith.constant dense<0.000000e+00> : vector<8xf32>
    %139 = vector.multi_reduction <add>, %138, %cst_52 [1] : vector<8x8xf32> to vector<8xf32>
    %140 = vector.shape_cast %139 : vector<8xf32> to vector<8x1xf32>
    %141 = tpu.reciprocal %140 {approx = true} : vector<8x1xf32> -> vector<8x1xf32>
    %142 = arith.truncf %138 : vector<8x8xf32> to vector<8x8xbf16>
    %cst_53 = arith.constant dense<0.000000e+00> : vector<8x8xf32>
    %143 = tpu.matmul %142, %129, %cst_53 {dimension_numbers = #tpu.dot_dimension_numbers<[1], [0], [0], [1], [0, 0, 1, 1], [], []>} : vector<8x8xbf16>, vector<8x8xbf16>, vector<8x8xf32> -> vector<8x8xf32>
    %144 = vector.broadcast %141 : vector<8x1xf32> to vector<8x8xf32>
    %145 = arith.mulf %143, %144 : vector<8x8xf32>
    %146 = arith.truncf %145 : vector<8x8xf32> to vector<8x8xbf16>
    %147 = vector.extract_strided_slice %50 {offsets = [3, 0, 0], sizes = [1, 8, 32], strides = [1, 1, 1]} : vector<4x8x32xbf16> to vector<1x8x32xbf16>
    %148 = vector.shape_cast %147 : vector<1x8x32xbf16> to vector<8x32xbf16>
    %cst_54 = arith.constant dense<0.000000e+00> : vector<8x32xf32>
    %149 = tpu.matmul %146, %148, %cst_54 {dimension_numbers = #tpu.dot_dimension_numbers<[1], [0], [0], [1], [0, 0, 1, 1], [], []>} : vector<8x8xbf16>, vector<8x32xbf16>, vector<8x32xf32> -> vector<8x32xf32>
    %150 = arith.addf %126, %149 : vector<8x32xf32>
    %c0_55 = arith.constant 0 : index
    %c0_56 = arith.constant 0 : index
    %c0_57 = arith.constant 0 : index
    %151 = vector.load %arg9[%c0_55, %c0_56, %c0_57] : memref<2x1x32xf32, #tpu.memory_space<vmem>>, vector<1x1x32xf32>
    %152 = vector.shape_cast %151 : vector<1x1x32xf32> to vector<1x32xf32>
    %c0_58 = arith.constant 0 : index
    %c0_59 = arith.constant 0 : index
    %c0_60 = arith.constant 0 : index
    %153 = vector.load %arg10[%c0_58, %c0_59, %c0_60] : memref<2x1x32xf32, #tpu.memory_space<vmem>>, vector<1x1x32xf32>
    %154 = vector.shape_cast %153 : vector<1x1x32xf32> to vector<1x32xf32>
    %cst_61 = arith.constant dense<0.000000e+00> : vector<8xf32>
    %155 = vector.multi_reduction <add>, %150, %cst_61 [1] : vector<8x32xf32> to vector<8xf32>
    %156 = vector.shape_cast %155 : vector<8xf32> to vector<8x1xf32>
    %cst_62 = arith.constant 3.200000e+01 : f32
    %157 = vector.broadcast %cst_62 : f32 to vector<8x1xf32>
    %158 = arith.divf %156, %157 : vector<8x1xf32>
    %159 = vector.broadcast %158 : vector<8x1xf32> to vector<8x32xf32>
    %160 = arith.subf %150, %159 : vector<8x32xf32>
    %161 = arith.mulf %160, %160 : vector<8x32xf32>
    %cst_63 = arith.constant dense<0.000000e+00> : vector<8xf32>
    %162 = vector.multi_reduction <add>, %161, %cst_63 [1] : vector<8x32xf32> to vector<8xf32>
    %163 = vector.shape_cast %162 : vector<8xf32> to vector<8x1xf32>
    %cst_64 = arith.constant 3.200000e+01 : f32
    %164 = vector.broadcast %cst_64 : f32 to vector<8x1xf32>
    %165 = arith.divf %163, %164 : vector<8x1xf32>
    %166 = vector.broadcast %158 : vector<8x1xf32> to vector<8x32xf32>
    %167 = arith.subf %150, %166 : vector<8x32xf32>
    %cst_65 = arith.constant 9.99999974E-6 : f32
    %168 = vector.broadcast %cst_65 : f32 to vector<8x1xf32>
    %169 = arith.addf %165, %168 : vector<8x1xf32>
    %170 = math.rsqrt %169 : vector<8x1xf32>
    %171 = vector.broadcast %170 : vector<8x1xf32> to vector<8x32xf32>
    %172 = arith.mulf %167, %171 : vector<8x32xf32>
    %173 = vector.broadcast %152 : vector<1x32xf32> to vector<8x32xf32>
    %174 = arith.mulf %172, %173 : vector<8x32xf32>
    %175 = vector.broadcast %154 : vector<1x32xf32> to vector<8x32xf32>
    %176 = arith.addf %174, %175 : vector<8x32xf32>
    %177 = arith.truncf %176 : vector<8x32xf32> to vector<8x32xbf16>
    %c0_66 = arith.constant 0 : index
    %c0_67 = arith.constant 0 : index
    %c0_68 = arith.constant 0 : index
    %178 = vector.load %arg11[%c0_66, %c0_67, %c0_68] : memref<2x32x64xbf16, #tpu.memory_space<vmem>>, vector<1x32x64xbf16>
    %179 = vector.shape_cast %178 : vector<1x32x64xbf16> to vector<32x64xbf16>
    %cst_69 = arith.constant dense<0.000000e+00> : vector<8x64xf32>
    %180 = tpu.matmul %177, %179, %cst_69 {dimension_numbers = #tpu.dot_dimension_numbers<[1], [0], [0], [1], [0, 0, 1, 1], [], []>} : vector<8x32xbf16>, vector<32x64xbf16>, vector<8x64xf32> -> vector<8x64xf32>
    %c0_70 = arith.constant 0 : index
    %c0_71 = arith.constant 0 : index
    %c0_72 = arith.constant 0 : index
    %181 = vector.load %arg12[%c0_70, %c0_71, %c0_72] : memref<2x1x64xf32, #tpu.memory_space<vmem>>, vector<1x1x64xf32>
    %182 = vector.shape_cast %181 : vector<1x1x64xf32> to vector<1x64xf32>
    %183 = vector.broadcast %182 : vector<1x64xf32> to vector<8x64xf32>
    %184 = arith.addf %180, %183 : vector<8x64xf32>
    %cst_73 = arith.constant 0.000000e+00 : f32
    %185 = vector.broadcast %cst_73 : f32 to vector<8x64xf32>
    %186 = arith.maximumf %184, %185 : vector<8x64xf32>
    %187 = arith.truncf %186 : vector<8x64xf32> to vector<8x64xbf16>
    %c0_74 = arith.constant 0 : index
    %c0_75 = arith.constant 0 : index
    %c0_76 = arith.constant 0 : index
    %188 = vector.load %arg13[%c0_74, %c0_75, %c0_76] : memref<2x64x32xbf16, #tpu.memory_space<vmem>>, vector<1x64x32xbf16>
    %189 = vector.shape_cast %188 : vector<1x64x32xbf16> to vector<64x32xbf16>
    %cst_77 = arith.constant dense<0.000000e+00> : vector<8x32xf32>
    %190 = tpu.matmul %187, %189, %cst_77 {dimension_numbers = #tpu.dot_dimension_numbers<[1], [0], [0], [1], [0, 0, 1, 1], [], []>} : vector<8x64xbf16>, vector<64x32xbf16>, vector<8x32xf32> -> vector<8x32xf32>
    %191 = arith.addf %150, %190 : vector<8x32xf32>
    %c0_78 = arith.constant 0 : index
    %c0_79 = arith.constant 0 : index
    %c0_80 = arith.constant 0 : index
    %192 = vector.load %arg14[%c0_78, %c0_79, %c0_80] : memref<2x1x32xf32, #tpu.memory_space<vmem>>, vector<1x1x32xf32>
    %193 = vector.shape_cast %192 : vector<1x1x32xf32> to vector<1x32xf32>
    %194 = vector.broadcast %193 : vector<1x32xf32> to vector<8x32xf32>
    %195 = arith.addf %191, %194 : vector<8x32xf32>
    %c1 = arith.constant 1 : index
    %c0_81 = arith.constant 0 : index
    %c0_82 = arith.constant 0 : index
    %196 = vector.load %arg3[%c1, %c0_81, %c0_82] : memref<2x1x32xf32, #tpu.memory_space<vmem>>, vector<1x1x32xf32>
    %197 = vector.shape_cast %196 : vector<1x1x32xf32> to vector<1x32xf32>
    %c1_83 = arith.constant 1 : index
    %c0_84 = arith.constant 0 : index
    %c0_85 = arith.constant 0 : index
    %198 = vector.load %arg4[%c1_83, %c0_84, %c0_85] : memref<2x1x32xf32, #tpu.memory_space<vmem>>, vector<1x1x32xf32>
    %199 = vector.shape_cast %198 : vector<1x1x32xf32> to vector<1x32xf32>
    %cst_86 = arith.constant dense<0.000000e+00> : vector<8xf32>
    %200 = vector.multi_reduction <add>, %195, %cst_86 [1] : vector<8x32xf32> to vector<8xf32>
    %201 = vector.shape_cast %200 : vector<8xf32> to vector<8x1xf32>
    %cst_87 = arith.constant 3.200000e+01 : f32
    %202 = vector.broadcast %cst_87 : f32 to vector<8x1xf32>
    %203 = arith.divf %201, %202 : vector<8x1xf32>
    %204 = vector.broadcast %203 : vector<8x1xf32> to vector<8x32xf32>
    %205 = arith.subf %195, %204 : vector<8x32xf32>
    %206 = arith.mulf %205, %205 : vector<8x32xf32>
    %cst_88 = arith.constant dense<0.000000e+00> : vector<8xf32>
    %207 = vector.multi_reduction <add>, %206, %cst_88 [1] : vector<8x32xf32> to vector<8xf32>
    %208 = vector.shape_cast %207 : vector<8xf32> to vector<8x1xf32>
    %cst_89 = arith.constant 3.200000e+01 : f32
    %209 = vector.broadcast %cst_89 : f32 to vector<8x1xf32>
    %210 = arith.divf %208, %209 : vector<8x1xf32>
    %211 = vector.broadcast %203 : vector<8x1xf32> to vector<8x32xf32>
    %212 = arith.subf %195, %211 : vector<8x32xf32>
    %cst_90 = arith.constant 9.99999974E-6 : f32
    %213 = vector.broadcast %cst_90 : f32 to vector<8x1xf32>
    %214 = arith.addf %210, %213 : vector<8x1xf32>
    %215 = math.rsqrt %214 : vector<8x1xf32>
    %216 = vector.broadcast %215 : vector<8x1xf32> to vector<8x32xf32>
    %217 = arith.mulf %212, %216 : vector<8x32xf32>
    %218 = vector.broadcast %197 : vector<1x32xf32> to vector<8x32xf32>
    %219 = arith.mulf %217, %218 : vector<8x32xf32>
    %220 = vector.broadcast %199 : vector<1x32xf32> to vector<8x32xf32>
    %221 = arith.addf %219, %220 : vector<8x32xf32>
    %222 = arith.truncf %221 : vector<8x32xf32> to vector<8x32xbf16>
    %c1_91 = arith.constant 1 : index
    %c0_92 = arith.constant 0 : index
    %c0_93 = arith.constant 0 : index
    %223 = vector.load %arg5[%c1_91, %c0_92, %c0_93] : memref<2x32x96xbf16, #tpu.memory_space<vmem>>, vector<1x32x96xbf16>
    %224 = vector.shape_cast %223 : vector<1x32x96xbf16> to vector<32x96xbf16>
    %cst_94 = arith.constant dense<0.000000e+00> : vector<8x96xf32>
    %225 = tpu.matmul %222, %224, %cst_94 {dimension_numbers = #tpu.dot_dimension_numbers<[1], [0], [0], [1], [0, 0, 1, 1], [], []>} : vector<8x32xbf16>, vector<32x96xbf16>, vector<8x96xf32> -> vector<8x96xf32>
    %c1_95 = arith.constant 1 : index
    %c0_96 = arith.constant 0 : index
    %c0_97 = arith.constant 0 : index
    %226 = vector.load %arg6[%c1_95, %c0_96, %c0_97] : memref<2x1x96xf32, #tpu.memory_space<vmem>>, vector<1x1x96xf32>
    %227 = vector.shape_cast %226 : vector<1x1x96xf32> to vector<1x96xf32>
    %228 = vector.broadcast %227 : vector<1x96xf32> to vector<8x96xf32>
    %229 = arith.addf %225, %228 : vector<8x96xf32>
    %230 = arith.truncf %229 : vector<8x96xf32> to vector<8x96xbf16>
    %c1_98 = arith.constant 1 : index
    %c0_99 = arith.constant 0 : index
    %c0_100 = arith.constant 0 : index
    %c0_101 = arith.constant 0 : index
    %231 = vector.load %arg7[%c1_98, %c0_99, %c0_100, %c0_101] : memref<2x4x8x32xbf16, #tpu.memory_space<vmem>>, vector<1x4x8x32xbf16>
    %232 = vector.shape_cast %231 : vector<1x4x8x32xbf16> to vector<4x8x32xbf16>
    %c1_102 = arith.constant 1 : index
    %c0_103 = arith.constant 0 : index
    %c0_104 = arith.constant 0 : index
    %233 = vector.load %arg8[%c1_102, %c0_103, %c0_104] : memref<2x1x32xf32, #tpu.memory_space<vmem>>, vector<1x1x32xf32>
    %234 = vector.shape_cast %233 : vector<1x1x32xf32> to vector<1x32xf32>
    %235 = vector.broadcast %234 : vector<1x32xf32> to vector<8x32xf32>
    %236 = arith.addf %195, %235 : vector<8x32xf32>
    %237 = vector.extract_strided_slice %230 {offsets = [0, 0], sizes = [8, 8], strides = [1, 1]} : vector<8x96xbf16> to vector<8x8xbf16>
    %238 = vector.extract_strided_slice %230 {offsets = [0, 32], sizes = [8, 8], strides = [1, 1]} : vector<8x96xbf16> to vector<8x8xbf16>
    %239 = vector.extract_strided_slice %230 {offsets = [0, 64], sizes = [8, 8], strides = [1, 1]} : vector<8x96xbf16> to vector<8x8xbf16>
    %cst_105 = arith.constant dense<0.000000e+00> : vector<8x8xf32>
    %240 = tpu.matmul %237, %238, %cst_105 {dimension_numbers = #tpu.dot_dimension_numbers<[1], [1], [0], [0], [0, 0, 1, 0], [], []>} : vector<8x8xbf16>, vector<8x8xbf16>, vector<8x8xf32> -> vector<8x8xf32>
    %cst_106 = arith.constant 0.353553385 : f32
    %241 = vector.broadcast %cst_106 : f32 to vector<8x8xf32>
    %242 = arith.mulf %240, %241 : vector<8x8xf32>
    %243 = arith.addf %242, %13 : vector<8x8xf32>
    %cst_107 = arith.constant dense<0xFF800000> : vector<8xf32>
    %244 = vector.multi_reduction <maximumf>, %243, %cst_107 [1] : vector<8x8xf32> to vector<8xf32>
    %245 = vector.shape_cast %244 : vector<8xf32> to vector<8x1xf32>
    %246 = vector.broadcast %245 : vector<8x1xf32> to vector<8x8xf32>
    %247 = arith.subf %243, %246 : vector<8x8xf32>
    %248 = math.exp %247 : vector<8x8xf32>
    %cst_108 = arith.constant dense<0.000000e+00> : vector<8xf32>
    %249 = vector.multi_reduction <add>, %248, %cst_108 [1] : vector<8x8xf32> to vector<8xf32>
    %250 = vector.shape_cast %249 : vector<8xf32> to vector<8x1xf32>
    %251 = tpu.reciprocal %250 {approx = true} : vector<8x1xf32> -> vector<8x1xf32>
    %252 = arith.truncf %248 : vector<8x8xf32> to vector<8x8xbf16>
    %cst_109 = arith.constant dense<0.000000e+00> : vector<8x8xf32>
    %253 = tpu.matmul %252, %239, %cst_109 {dimension_numbers = #tpu.dot_dimension_numbers<[1], [0], [0], [1], [0, 0, 1, 1], [], []>} : vector<8x8xbf16>, vector<8x8xbf16>, vector<8x8xf32> -> vector<8x8xf32>
    %254 = vector.broadcast %251 : vector<8x1xf32> to vector<8x8xf32>
    %255 = arith.mulf %253, %254 : vector<8x8xf32>
    %256 = arith.truncf %255 : vector<8x8xf32> to vector<8x8xbf16>
    %257 = vector.extract_strided_slice %232 {offsets = [0, 0, 0], sizes = [1, 8, 32], strides = [1, 1, 1]} : vector<4x8x32xbf16> to vector<1x8x32xbf16>
    %258 = vector.shape_cast %257 : vector<1x8x32xbf16> to vector<8x32xbf16>
    %cst_110 = arith.constant dense<0.000000e+00> : vector<8x32xf32>
    %259 = tpu.matmul %256, %258, %cst_110 {dimension_numbers = #tpu.dot_dimension_numbers<[1], [0], [0], [1], [0, 0, 1, 1], [], []>} : vector<8x8xbf16>, vector<8x32xbf16>, vector<8x32xf32> -> vector<8x32xf32>
    %260 = arith.addf %236, %259 : vector<8x32xf32>
    %261 = vector.extract_strided_slice %230 {offsets = [0, 8], sizes = [8, 8], strides = [1, 1]} : vector<8x96xbf16> to vector<8x8xbf16>
    %262 = vector.extract_strided_slice %230 {offsets = [0, 40], sizes = [8, 8], strides = [1, 1]} : vector<8x96xbf16> to vector<8x8xbf16>
    %263 = vector.extract_strided_slice %230 {offsets = [0, 72], sizes = [8, 8], strides = [1, 1]} : vector<8x96xbf16> to vector<8x8xbf16>
    %cst_111 = arith.constant dense<0.000000e+00> : vector<8x8xf32>
    %264 = tpu.matmul %261, %262, %cst_111 {dimension_numbers = #tpu.dot_dimension_numbers<[1], [1], [0], [0], [0, 0, 1, 0], [], []>} : vector<8x8xbf16>, vector<8x8xbf16>, vector<8x8xf32> -> vector<8x8xf32>
    %cst_112 = arith.constant 0.353553385 : f32
    %265 = vector.broadcast %cst_112 : f32 to vector<8x8xf32>
    %266 = arith.mulf %264, %265 : vector<8x8xf32>
    %267 = arith.addf %266, %13 : vector<8x8xf32>
    %cst_113 = arith.constant dense<0xFF800000> : vector<8xf32>
    %268 = vector.multi_reduction <maximumf>, %267, %cst_113 [1] : vector<8x8xf32> to vector<8xf32>
    %269 = vector.shape_cast %268 : vector<8xf32> to vector<8x1xf32>
    %270 = vector.broadcast %269 : vector<8x1xf32> to vector<8x8xf32>
    %271 = arith.subf %267, %270 : vector<8x8xf32>
    %272 = math.exp %271 : vector<8x8xf32>
    %cst_114 = arith.constant dense<0.000000e+00> : vector<8xf32>
    %273 = vector.multi_reduction <add>, %272, %cst_114 [1] : vector<8x8xf32> to vector<8xf32>
    %274 = vector.shape_cast %273 : vector<8xf32> to vector<8x1xf32>
    %275 = tpu.reciprocal %274 {approx = true} : vector<8x1xf32> -> vector<8x1xf32>
    %276 = arith.truncf %272 : vector<8x8xf32> to vector<8x8xbf16>
    %cst_115 = arith.constant dense<0.000000e+00> : vector<8x8xf32>
    %277 = tpu.matmul %276, %263, %cst_115 {dimension_numbers = #tpu.dot_dimension_numbers<[1], [0], [0], [1], [0, 0, 1, 1], [], []>} : vector<8x8xbf16>, vector<8x8xbf16>, vector<8x8xf32> -> vector<8x8xf32>
    %278 = vector.broadcast %275 : vector<8x1xf32> to vector<8x8xf32>
    %279 = arith.mulf %277, %278 : vector<8x8xf32>
    %280 = arith.truncf %279 : vector<8x8xf32> to vector<8x8xbf16>
    %281 = vector.extract_strided_slice %232 {offsets = [1, 0, 0], sizes = [1, 8, 32], strides = [1, 1, 1]} : vector<4x8x32xbf16> to vector<1x8x32xbf16>
    %282 = vector.shape_cast %281 : vector<1x8x32xbf16> to vector<8x32xbf16>
    %cst_116 = arith.constant dense<0.000000e+00> : vector<8x32xf32>
    %283 = tpu.matmul %280, %282, %cst_116 {dimension_numbers = #tpu.dot_dimension_numbers<[1], [0], [0], [1], [0, 0, 1, 1], [], []>} : vector<8x8xbf16>, vector<8x32xbf16>, vector<8x32xf32> -> vector<8x32xf32>
    %284 = arith.addf %260, %283 : vector<8x32xf32>
    %285 = vector.extract_strided_slice %230 {offsets = [0, 16], sizes = [8, 8], strides = [1, 1]} : vector<8x96xbf16> to vector<8x8xbf16>
    %286 = vector.extract_strided_slice %230 {offsets = [0, 48], sizes = [8, 8], strides = [1, 1]} : vector<8x96xbf16> to vector<8x8xbf16>
    %287 = vector.extract_strided_slice %230 {offsets = [0, 80], sizes = [8, 8], strides = [1, 1]} : vector<8x96xbf16> to vector<8x8xbf16>
    %cst_117 = arith.constant dense<0.000000e+00> : vector<8x8xf32>
    %288 = tpu.matmul %285, %286, %cst_117 {dimension_numbers = #tpu.dot_dimension_numbers<[1], [1], [0], [0], [0, 0, 1, 0], [], []>} : vector<8x8xbf16>, vector<8x8xbf16>, vector<8x8xf32> -> vector<8x8xf32>
    %cst_118 = arith.constant 0.353553385 : f32
    %289 = vector.broadcast %cst_118 : f32 to vector<8x8xf32>
    %290 = arith.mulf %288, %289 : vector<8x8xf32>
    %291 = arith.addf %290, %13 : vector<8x8xf32>
    %cst_119 = arith.constant dense<0xFF800000> : vector<8xf32>
    %292 = vector.multi_reduction <maximumf>, %291, %cst_119 [1] : vector<8x8xf32> to vector<8xf32>
    %293 = vector.shape_cast %292 : vector<8xf32> to vector<8x1xf32>
    %294 = vector.broadcast %293 : vector<8x1xf32> to vector<8x8xf32>
    %295 = arith.subf %291, %294 : vector<8x8xf32>
    %296 = math.exp %295 : vector<8x8xf32>
    %cst_120 = arith.constant dense<0.000000e+00> : vector<8xf32>
    %297 = vector.multi_reduction <add>, %296, %cst_120 [1] : vector<8x8xf32> to vector<8xf32>
    %298 = vector.shape_cast %297 : vector<8xf32> to vector<8x1xf32>
    %299 = tpu.reciprocal %298 {approx = true} : vector<8x1xf32> -> vector<8x1xf32>
    %300 = arith.truncf %296 : vector<8x8xf32> to vector<8x8xbf16>
    %cst_121 = arith.constant dense<0.000000e+00> : vector<8x8xf32>
    %301 = tpu.matmul %300, %287, %cst_121 {dimension_numbers = #tpu.dot_dimension_numbers<[1], [0], [0], [1], [0, 0, 1, 1], [], []>} : vector<8x8xbf16>, vector<8x8xbf16>, vector<8x8xf32> -> vector<8x8xf32>
    %302 = vector.broadcast %299 : vector<8x1xf32> to vector<8x8xf32>
    %303 = arith.mulf %301, %302 : vector<8x8xf32>
    %304 = arith.truncf %303 : vector<8x8xf32> to vector<8x8xbf16>
    %305 = vector.extract_strided_slice %232 {offsets = [2, 0, 0], sizes = [1, 8, 32], strides = [1, 1, 1]} : vector<4x8x32xbf16> to vector<1x8x32xbf16>
    %306 = vector.shape_cast %305 : vector<1x8x32xbf16> to vector<8x32xbf16>
    %cst_122 = arith.constant dense<0.000000e+00> : vector<8x32xf32>
    %307 = tpu.matmul %304, %306, %cst_122 {dimension_numbers = #tpu.dot_dimension_numbers<[1], [0], [0], [1], [0, 0, 1, 1], [], []>} : vector<8x8xbf16>, vector<8x32xbf16>, vector<8x32xf32> -> vector<8x32xf32>
    %308 = arith.addf %284, %307 : vector<8x32xf32>
    %309 = vector.extract_strided_slice %230 {offsets = [0, 24], sizes = [8, 8], strides = [1, 1]} : vector<8x96xbf16> to vector<8x8xbf16>
    %310 = vector.extract_strided_slice %230 {offsets = [0, 56], sizes = [8, 8], strides = [1, 1]} : vector<8x96xbf16> to vector<8x8xbf16>
    %311 = vector.extract_strided_slice %230 {offsets = [0, 88], sizes = [8, 8], strides = [1, 1]} : vector<8x96xbf16> to vector<8x8xbf16>
    %cst_123 = arith.constant dense<0.000000e+00> : vector<8x8xf32>
    %312 = tpu.matmul %309, %310, %cst_123 {dimension_numbers = #tpu.dot_dimension_numbers<[1], [1], [0], [0], [0, 0, 1, 0], [], []>} : vector<8x8xbf16>, vector<8x8xbf16>, vector<8x8xf32> -> vector<8x8xf32>
    %cst_124 = arith.constant 0.353553385 : f32
    %313 = vector.broadcast %cst_124 : f32 to vector<8x8xf32>
    %314 = arith.mulf %312, %313 : vector<8x8xf32>
    %315 = arith.addf %314, %13 : vector<8x8xf32>
    %cst_125 = arith.constant dense<0xFF800000> : vector<8xf32>
    %316 = vector.multi_reduction <maximumf>, %315, %cst_125 [1] : vector<8x8xf32> to vector<8xf32>
    %317 = vector.shape_cast %316 : vector<8xf32> to vector<8x1xf32>
    %318 = vector.broadcast %317 : vector<8x1xf32> to vector<8x8xf32>
    %319 = arith.subf %315, %318 : vector<8x8xf32>
    %320 = math.exp %319 : vector<8x8xf32>
    %cst_126 = arith.constant dense<0.000000e+00> : vector<8xf32>
    %321 = vector.multi_reduction <add>, %320, %cst_126 [1] : vector<8x8xf32> to vector<8xf32>
    %322 = vector.shape_cast %321 : vector<8xf32> to vector<8x1xf32>
    %323 = tpu.reciprocal %322 {approx = true} : vector<8x1xf32> -> vector<8x1xf32>
    %324 = arith.truncf %320 : vector<8x8xf32> to vector<8x8xbf16>
    %cst_127 = arith.constant dense<0.000000e+00> : vector<8x8xf32>
    %325 = tpu.matmul %324, %311, %cst_127 {dimension_numbers = #tpu.dot_dimension_numbers<[1], [0], [0], [1], [0, 0, 1, 1], [], []>} : vector<8x8xbf16>, vector<8x8xbf16>, vector<8x8xf32> -> vector<8x8xf32>
    %326 = vector.broadcast %323 : vector<8x1xf32> to vector<8x8xf32>
    %327 = arith.mulf %325, %326 : vector<8x8xf32>
    %328 = arith.truncf %327 : vector<8x8xf32> to vector<8x8xbf16>
    %329 = vector.extract_strided_slice %232 {offsets = [3, 0, 0], sizes = [1, 8, 32], strides = [1, 1, 1]} : vector<4x8x32xbf16> to vector<1x8x32xbf16>
    %330 = vector.shape_cast %329 : vector<1x8x32xbf16> to vector<8x32xbf16>
    %cst_128 = arith.constant dense<0.000000e+00> : vector<8x32xf32>
    %331 = tpu.matmul %328, %330, %cst_128 {dimension_numbers = #tpu.dot_dimension_numbers<[1], [0], [0], [1], [0, 0, 1, 1], [], []>} : vector<8x8xbf16>, vector<8x32xbf16>, vector<8x32xf32> -> vector<8x32xf32>
    %332 = arith.addf %308, %331 : vector<8x32xf32>
    %c1_129 = arith.constant 1 : index
    %c0_130 = arith.constant 0 : index
    %c0_131 = arith.constant 0 : index
    %333 = vector.load %arg9[%c1_129, %c0_130, %c0_131] : memref<2x1x32xf32, #tpu.memory_space<vmem>>, vector<1x1x32xf32>
    %334 = vector.shape_cast %333 : vector<1x1x32xf32> to vector<1x32xf32>
    %c1_132 = arith.constant 1 : index
    %c0_133 = arith.constant 0 : index
    %c0_134 = arith.constant 0 : index
    %335 = vector.load %arg10[%c1_132, %c0_133, %c0_134] : memref<2x1x32xf32, #tpu.memory_space<vmem>>, vector<1x1x32xf32>
    %336 = vector.shape_cast %335 : vector<1x1x32xf32> to vector<1x32xf32>
    %cst_135 = arith.constant dense<0.000000e+00> : vector<8xf32>
    %337 = vector.multi_reduction <add>, %332, %cst_135 [1] : vector<8x32xf32> to vector<8xf32>
    %338 = vector.shape_cast %337 : vector<8xf32> to vector<8x1xf32>
    %cst_136 = arith.constant 3.200000e+01 : f32
    %339 = vector.broadcast %cst_136 : f32 to vector<8x1xf32>
    %340 = arith.divf %338, %339 : vector<8x1xf32>
    %341 = vector.broadcast %340 : vector<8x1xf32> to vector<8x32xf32>
    %342 = arith.subf %332, %341 : vector<8x32xf32>
    %343 = arith.mulf %342, %342 : vector<8x32xf32>
    %cst_137 = arith.constant dense<0.000000e+00> : vector<8xf32>
    %344 = vector.multi_reduction <add>, %343, %cst_137 [1] : vector<8x32xf32> to vector<8xf32>
    %345 = vector.shape_cast %344 : vector<8xf32> to vector<8x1xf32>
    %cst_138 = arith.constant 3.200000e+01 : f32
    %346 = vector.broadcast %cst_138 : f32 to vector<8x1xf32>
    %347 = arith.divf %345, %346 : vector<8x1xf32>
    %348 = vector.broadcast %340 : vector<8x1xf32> to vector<8x32xf32>
    %349 = arith.subf %332, %348 : vector<8x32xf32>
    %cst_139 = arith.constant 9.99999974E-6 : f32
    %350 = vector.broadcast %cst_139 : f32 to vector<8x1xf32>
    %351 = arith.addf %347, %350 : vector<8x1xf32>
    %352 = math.rsqrt %351 : vector<8x1xf32>
    %353 = vector.broadcast %352 : vector<8x1xf32> to vector<8x32xf32>
    %354 = arith.mulf %349, %353 : vector<8x32xf32>
    %355 = vector.broadcast %334 : vector<1x32xf32> to vector<8x32xf32>
    %356 = arith.mulf %354, %355 : vector<8x32xf32>
    %357 = vector.broadcast %336 : vector<1x32xf32> to vector<8x32xf32>
    %358 = arith.addf %356, %357 : vector<8x32xf32>
    %359 = arith.truncf %358 : vector<8x32xf32> to vector<8x32xbf16>
    %c1_140 = arith.constant 1 : index
    %c0_141 = arith.constant 0 : index
    %c0_142 = arith.constant 0 : index
    %360 = vector.load %arg11[%c1_140, %c0_141, %c0_142] : memref<2x32x64xbf16, #tpu.memory_space<vmem>>, vector<1x32x64xbf16>
    %361 = vector.shape_cast %360 : vector<1x32x64xbf16> to vector<32x64xbf16>
    %cst_143 = arith.constant dense<0.000000e+00> : vector<8x64xf32>
    %362 = tpu.matmul %359, %361, %cst_143 {dimension_numbers = #tpu.dot_dimension_numbers<[1], [0], [0], [1], [0, 0, 1, 1], [], []>} : vector<8x32xbf16>, vector<32x64xbf16>, vector<8x64xf32> -> vector<8x64xf32>
    %c1_144 = arith.constant 1 : index
    %c0_145 = arith.constant 0 : index
    %c0_146 = arith.constant 0 : index
    %363 = vector.load %arg12[%c1_144, %c0_145, %c0_146] : memref<2x1x64xf32, #tpu.memory_space<vmem>>, vector<1x1x64xf32>
    %364 = vector.shape_cast %363 : vector<1x1x64xf32> to vector<1x64xf32>
    %365 = vector.broadcast %364 : vector<1x64xf32> to vector<8x64xf32>
    %366 = arith.addf %362, %365 : vector<8x64xf32>
    %cst_147 = arith.constant 0.000000e+00 : f32
    %367 = vector.broadcast %cst_147 : f32 to vector<8x64xf32>
    %368 = arith.maximumf %366, %367 : vector<8x64xf32>
    %369 = arith.truncf %368 : vector<8x64xf32> to vector<8x64xbf16>
    %c1_148 = arith.constant 1 : index
    %c0_149 = arith.constant 0 : index
    %c0_150 = arith.constant 0 : index
    %370 = vector.load %arg13[%c1_148, %c0_149, %c0_150] : memref<2x64x32xbf16, #tpu.memory_space<vmem>>, vector<1x64x32xbf16>
    %371 = vector.shape_cast %370 : vector<1x64x32xbf16> to vector<64x32xbf16>
    %cst_151 = arith.constant dense<0.000000e+00> : vector<8x32xf32>
    %372 = tpu.matmul %369, %371, %cst_151 {dimension_numbers = #tpu.dot_dimension_numbers<[1], [0], [0], [1], [0, 0, 1, 1], [], []>} : vector<8x64xbf16>, vector<64x32xbf16>, vector<8x32xf32> -> vector<8x32xf32>
    %373 = arith.addf %332, %372 : vector<8x32xf32>
    %c1_152 = arith.constant 1 : index
    %c0_153 = arith.constant 0 : index
    %c0_154 = arith.constant 0 : index
    %374 = vector.load %arg14[%c1_152, %c0_153, %c0_154] : memref<2x1x32xf32, #tpu.memory_space<vmem>>, vector<1x1x32xf32>
    %375 = vector.shape_cast %374 : vector<1x1x32xf32> to vector<1x32xf32>
    %376 = vector.broadcast %375 : vector<1x32xf32> to vector<8x32xf32>
    %377 = arith.addf %373, %376 : vector<8x32xf32>
    %378 = arith.truncf %377 : vector<8x32xf32> to vector<8x32xbf16>
    %c0_155 = arith.constant 0 : index
    %c0_156 = arith.constant 0 : index
    %379 = vector.load %arg15[%c0_155, %c0_156] : memref<32x128xbf16, #tpu.memory_space<vmem>>, vector<32x128xbf16>
    %cst_157 = arith.constant dense<0.000000e+00> : vector<8x128xf32>
    %380 = tpu.matmul %378, %379, %cst_157 {dimension_numbers = #tpu.dot_dimension_numbers<[1], [0], [0], [1], [0, 0, 1, 1], [], []>} : vector<8x32xbf16>, vector<32x128xbf16>, vector<8x128xf32> -> vector<8x128xf32>
    %c0_158 = arith.constant 0 : index
    %c0_159 = arith.constant 0 : index
    %381 = vector.load %arg16[%c0_158, %c0_159] : memref<1x128xf32, #tpu.memory_space<vmem>>, vector<1x128xf32>
    %382 = vector.broadcast %381 : vector<1x128xf32> to vector<8x128xf32>
    %383 = arith.addf %380, %382 : vector<8x128xf32>
    %c0_160 = arith.constant 0 : index
    %c0_161 = arith.constant 0 : index
    %c0_162 = arith.constant 0 : index
    %384 = vector.load %arg17[%c0_160, %c0_161, %c0_162] : memref<1x8x128xf32, #tpu.memory_space<vmem>>, vector<1x8x128xf32>
    %385 = vector.shape_cast %384 : vector<1x8x128xf32> to vector<8x128xf32>
    %386 = vector.shape_cast %383 : vector<8x128xf32> to vector<1x8x128xf32>
    tpu.vector_store %arg17[%c0_160, %c0_161, %c0_162], %386 {strides = array<i32>} : memref<1x8x128xf32, #tpu.memory_space<vmem>>, vector<1x8x128xf32>,
    return
  }
  func.func @transform_0(%arg0: i32) -> (i32, i32, i32) {
    %c0_i32 = arith.constant 0 : i32
    %c0_i32_0 = arith.constant 0 : i32
    %c0_i32_1 = arith.constant 0 : i32
    return %arg0, %c0_i32, %c0_i32_0 : i32, i32, i32
  }
  func.func @transform_1(%arg0: i32) -> (i32, i32, i32) {
    %c0_i32 = arith.constant 0 : i32
    %c0_i32_0 = arith.constant 0 : i32
    %c0_i32_1 = arith.constant 0 : i32
    return %arg0, %c0_i32, %c0_i32_0 : i32, i32, i32
  }
  func.func @transform_2(%arg0: i32) -> (i32, i32, i32) {
    %c0_i32 = arith.constant 0 : i32
    %c0_i32_0 = arith.constant 0 : i32
    %c0_i32_1 = arith.constant 0 : i32
    %c0_i32_2 = arith.constant 0 : i32
    return %c0_i32, %c0_i32_0, %c0_i32_1 : i32, i32, i32
  }
  func.func @transform_3(%arg0: i32) -> (i32, i32, i32) {
    %c0_i32 = arith.constant 0 : i32
    %c0_i32_0 = arith.constant 0 : i32
    %c0_i32_1 = arith.constant 0 : i32
    %c0_i32_2 = arith.constant 0 : i32
    return %c0_i32, %c0_i32_0, %c0_i32_1 : i32, i32, i32
  }
  func.func @transform_4(%arg0: i32) -> (i32, i32, i32) {
    %c0_i32 = arith.constant 0 : i32
    %c0_i32_0 = arith.constant 0 : i32
    %c0_i32_1 = arith.constant 0 : i32
    %c0_i32_2 = arith.constant 0 : i32
    return %c0_i32, %c0_i32_0, %c0_i32_1 : i32, i32, i32
  }
  func.func @transform_5(%arg0: i32) -> (i32, i32, i32) {
    %c0_i32 = arith.constant 0 : i32
    %c0_i32_0 = arith.constant 0 : i32
    %c0_i32_1 = arith.constant 0 : i32
    %c0_i32_2 = arith.constant 0 : i32
    return %c0_i32, %c0_i32_0, %c0_i32_1 : i32, i32, i32
  }
  func.func @transform_6(%arg0: i32) -> (i32, i32, i32, i32) {
    %c0_i32 = arith.constant 0 : i32
    %c0_i32_0 = arith.constant 0 : i32
    %c0_i32_1 = arith.constant 0 : i32
    %c0_i32_2 = arith.constant 0 : i32
    %c0_i32_3 = arith.constant 0 : i32
    return %c0_i32, %c0_i32_0, %c0_i32_1, %c0_i32_2 : i32, i32, i32, i32
  }
  func.func @transform_7(%arg0: i32) -> (i32, i32, i32) {
    %c0_i32 = arith.constant 0 : i32
    %c0_i32_0 = arith.constant 0 : i32
    %c0_i32_1 = arith.constant 0 : i32
    %c0_i32_2 = arith.constant 0 : i32
    return %c0_i32, %c0_i32_0, %c0_i32_1 : i32, i32, i32
  }
  func.func @transform_8(%arg0: i32) -> (i32, i32, i32) {
    %c0_i32 = arith.constant 0 : i32
    %c0_i32_0 = arith.constant 0 : i32
    %c0_i32_1 = arith.constant 0 : i32
    %c0_i32_2 = arith.constant 0 : i32
    return %c0_i32, %c0_i32_0, %c0_i32_1 : i32, i32, i32
  }
  func.func @transform_9(%arg0: i32) -> (i32, i32, i32) {
    %c0_i32 = arith.constant 0 : i32
    %c0_i32_0 = arith.constant 0 : i32
    %c0_i32_1 = arith.constant 0 : i32
    %c0_i32_2 = arith.constant 0 : i32
    return %c0_i32, %c0_i32_0, %c0_i32_1 : i32, i32, i32
  }
  func.func @transform_10(%arg0: i32) -> (i32, i32, i32) {
    %c0_i32 = arith.constant 0 : i32
    %c0_i32_0 = arith.constant 0 : i32
    %c0_i32_1 = arith.constant 0 : i32
    %c0_i32_2 = arith.constant 0 : i32
    return %c0_i32, %c0_i32_0, %c0_i32_1 : i32, i32, i32
  }
  func.func @transform_11(%arg0: i32) -> (i32, i32, i32) {
    %c0_i32 = arith.constant 0 : i32
    %c0_i32_0 = arith.constant 0 : i32
    %c0_i32_1 = arith.constant 0 : i32
    %c0_i32_2 = arith.constant 0 : i32
    return %c0_i32, %c0_i32_0, %c0_i32_1 : i32, i32, i32
  }
  func.func @transform_12(%arg0: i32) -> (i32, i32, i32) {
    %c0_i32 = arith.constant 0 : i32
    %c0_i32_0 = arith.constant 0 : i32
    %c0_i32_1 = arith.constant 0 : i32
    %c0_i32_2 = arith.constant 0 : i32
    return %c0_i32, %c0_i32_0, %c0_i32_1 : i32, i32, i32
  }
  func.func @transform_13(%arg0: i32) -> (i32, i32, i32) {
    %c0_i32 = arith.constant 0 : i32
    %c0_i32_0 = arith.constant 0 : i32
    %c0_i32_1 = arith.constant 0 : i32
    %c0_i32_2 = arith.constant 0 : i32
    return %c0_i32, %c0_i32_0, %c0_i32_1 : i32, i32, i32
  }
  func.func @transform_14(%arg0: i32) -> (i32, i32) {
    %c0_i32 = arith.constant 0 : i32
    %c0_i32_0 = arith.constant 0 : i32
    %c0_i32_1 = arith.constant 0 : i32
    return %c0_i32, %c0_i32_0 : i32, i32
  }
  func.func @transform_15(%arg0: i32) -> (i32, i32) {
    %c0_i32 = arith.constant 0 : i32
    %c0_i32_0 = arith.constant 0 : i32
    %c0_i32_1 = arith.constant 0 : i32
    return %c0_i32, %c0_i32_0 : i32, i32
  }
  func.func @transform_16(%arg0: i32) -> (i32, i32, i32) {
    %c0_i32 = arith.constant 0 : i32
    %c0_i32_0 = arith.constant 0 : i32
    %c0_i32_1 = arith.constant 0 : i32
    return %arg0, %c0_i32, %c0_i32_0 : i32, i32, i32
  }
}

</mosaic_0001>

<llo_original>
// kernel: model_forward.1
$region0: #{model_forward.1}
  #allocation0 [shape = 'u32[]', space=smem, size = 0x4, offset = 0x4, fixed_abs, tag = 'smem constant byte address 0x4 - core index']
  #allocation1 [shape = 'u32[144,128]{1,0:T(1,128)}', space=vmem, size = 0x12000, scoped, tag = 'internal scratch']
  %s0 = inlined_call_operand.vmem [shape: f32[2,8,32], index: 0, kind: input, shape index: {}]
  %s1 = inlined_call_operand.vmem [shape: s32[2,1,8], index: 1, kind: input, shape index: {}]
  %s2 = inlined_call_operand.vmem [shape: f32[2,1,32], index: 2, kind: input, shape index: {}]
  %s3 = inlined_call_operand.vmem [shape: f32[2,1,32], index: 3, kind: input, shape index: {}]
  %s4 = inlined_call_operand.vmem [shape: bf16[2,32,96], index: 4, kind: input, shape index: {}]
  %s5 = inlined_call_operand.vmem [shape: f32[2,1,96], index: 5, kind: input, shape index: {}]
  %s6 = inlined_call_operand.vmem [shape: bf16[2,4,8,32], index: 6, kind: input, shape index: {}]
  %s7 = inlined_call_operand.vmem [shape: f32[2,1,32], index: 7, kind: input, shape index: {}]
  %s8 = inlined_call_operand.vmem [shape: f32[2,1,32], index: 8, kind: input, shape index: {}]
  %s9 = inlined_call_operand.vmem [shape: f32[2,1,32], index: 9, kind: input, shape index: {}]
  %s10 = inlined_call_operand.vmem [shape: bf16[2,32,64], index: 10, kind: input, shape index: {}]
  %s11 = inlined_call_operand.vmem [shape: f32[2,1,64], index: 11, kind: input, shape index: {}]
  %s12 = inlined_call_operand.vmem [shape: bf16[2,64,32], index: 12, kind: input, shape index: {}]
  %s13 = inlined_call_operand.vmem [shape: f32[2,1,32], index: 13, kind: input, shape index: {}]
  %s14 = inlined_call_operand.vmem [shape: bf16[32,128], index: 14, kind: input, shape index: {}]
  %s15 = inlined_call_operand.vmem [shape: f32[1,128], index: 15, kind: input, shape index: {}]
  %s16 = inlined_call_operand.hbm [shape: f32[2,8,128], index: 16, kind: output, shape index: {}]
  %s17 = sld [smem:[#allocation0]]
  $region97: #{model_forward.1} parent=0
    _
  %s19 = ssub.s32 1, %s17
  %s20 = scalar_select 0, %s19, %s17
  $region1: #{model_forward.1} parent=0
    #allocation2 [shape = 'u8[8192]{0}', space=vmem, size = 0x2000, scoped, tag = 'output window, operand 0']
    #allocation3 [shape = 's32[2]{0}', space=sflag, size = 0x8, scoped, tag = 'scoped memory for model_forward.1']
    %21 = vsyncpa [#allocation3], 0
    %s22 = scalar_lea.sflag [#allocation3], 1
    %23 = vsyncpa %s22, 0
    loop: start=0, step=1, limit=4
    $region2: #{model_forward.1} parent=1 // loop_pre_header
      _
    $region3: #{model_forward.1} parent=1 // loop_header
      %s25 = sphi 0, %s29
      %p26 = scmp.ge.s32.totalorder %s25, 4
      %s35 = sphi 0, %s37
      %s38 = sphi 0, %s35
      %s39 = sphi 0, %s38
      %s55 = sphi 0, %s39
      %s61 = sphi 0, %s63
      %s64 = sphi 0, %s61
      %s65 = sphi 0, %s64
      %s81 = sphi 0, %s65
      %s85 = sphi 0, %s85
      %s87 = sphi 0, %s85
      %s88 = sphi 0, %s87
      %s102 = sphi 0, %s88
      %s106 = sphi 0, %s106
      %s108 = sphi 0, %s106
      %s109 = sphi 0, %s108
      %s123 = sphi 0, %s109
      %s127 = sphi 0, %s127
      %s129 = sphi 0, %s127
      %s130 = sphi 0, %s129
      %s144 = sphi 0, %s130
      %s148 = sphi 0, %s148
      %s150 = sphi 0, %s148
      %s151 = sphi 0, %s150
      %s165 = sphi 0, %s151
      %s169 = sphi 0, %s169
      %s171 = sphi 0, %s169
      %s172 = sphi 0, %s171
      %s186 = sphi 0, %s172
      %s190 = sphi 0, %s190
      %s192 = sphi 0, %s190
      %s193 = sphi 0, %s192
      %s207 = sphi 0, %s193
      %s211 = sphi 0, %s211
      %s213 = sphi 0, %s211
      %s214 = sphi 0, %s213
      %s228 = sphi 0, %s214
      %s232 = sphi 0, %s232
      %s234 = sphi 0, %s232
      %s235 = sphi 0, %s234
      %s249 = sphi 0, %s235
      %s253 = sphi 0, %s253
      %s255 = sphi 0, %s253
      %s256 = sphi 0, %s255
      %s270 = sphi 0, %s256
      %s274 = sphi 0, %s274
      %s276 = sphi 0, %s274
      %s277 = sphi 0, %s276
      %s291 = sphi 0, %s277
      %s295 = sphi 0, %s295
      %s297 = sphi 0, %s295
      %s298 = sphi 0, %s297
      %s312 = sphi 0, %s298
      %s316 = sphi 0, %s316
      %s318 = sphi 0, %s316
      %s319 = sphi 0, %s318
      %s333 = sphi 0, %s319
      %s337 = sphi 0, %s337
      %s339 = sphi 0, %s337
      %s340 = sphi 0, %s339
      %s354 = sphi 0, %s340
      %s358 = sphi 0, %s358
      %s360 = sphi 0, %s358
      %s361 = sphi 0, %s360
      %s375 = sphi 0, %s361
      %s381 = sphi 0, %s383
      %s384 = sphi 0, %s381
      %s385 = sphi 0, %s384
      %s401 = sphi 0, %s385
    $region4: #{model_forward.1} parent=1 // loop_header_branch
      %28 = sbr.rel (%p26) target = $region8
    $region5: #{model_forward.1} parent=1 // loop_body
      %s30 = ssub.s32 %s25, 1
      %s31 = ssub.s32 %s25, 2
      %s32 = sadd.s32 %s25, 1
      %s33 = ssub.s32 %s25, %s32
      %p34 = scmp.eq.s32.totalorder %s33, 0
      %s36 = sadd.s32 %s35, 1
      %s37 = scalar_select %p34, %s35, %s36
      %p40 = pneg %p34
      %p41 = scmp.eq.s32.totalorder %s25, 1
      %p42 = por %p40, %p41
      %p43 = scmp.ne.s32.totalorder %s35, %s38
      %p44 = scmp.eq.s32.totalorder %s25, 0
      %p45 = por %p43, %p44
      %p46 = scmp.ne.s32.totalorder %s35, %s38
      %p47 = scmp.eq.s32.totalorder %s30, 1
      %p48 = por %p46, %p47
      %p49 = scmp.ne.s32.totalorder %s38, %s39
      %p50 = scmp.eq.s32.totalorder %s30, 0
      %p51 = por %p49, %p50
      %p52 = scmp.ne.s32.totalorder %s38, %s39
      %p53 = scmp.eq.s32.totalorder %s31, 1
      %p54 = por %p52, %p53
      %p56 = scmp.ne.s32.totalorder %s39, %s55
      %p57 = scmp.eq.s32.totalorder %s31, 0
      %p58 = por %p56, %p57
      %s59 = ssub.s32 %s25, %s32
      %p60 = scmp.eq.s32.totalorder %s59, 0
      %s62 = sadd.s32 %s61, 1
      %s63 = scalar_select %p60, %s61, %s62
      %p66 = pneg %p60
      %p67 = scmp.eq.s32.totalorder %s25, 1
      %p68 = por %p66, %p67
      %p69 = scmp.ne.s32.totalorder %s61, %s64
      %p70 = scmp.eq.s32.totalorder %s25, 0
      %p71 = por %p69, %p70
      %p72 = scmp.ne.s32.totalorder %s61, %s64
      %p73 = scmp.eq.s32.totalorder %s30, 1
      %p74 = por %p72, %p73
      %p75 = scmp.ne.s32.totalorder %s64, %s65
      %p76 = scmp.eq.s32.totalorder %s30, 0
      %p77 = por %p75, %p76
      %p78 = scmp.ne.s32.totalorder %s64, %s65
      %p79 = scmp.eq.s32.totalorder %s31, 1
      %p80 = por %p78, %p79
      %p82 = scmp.ne.s32.totalorder %s65, %s81
      %p83 = scmp.eq.s32.totalorder %s31, 0
      %p84 = por %p82, %p83
      %s86 = sadd.s32 %s85, 1
      %p89 = scmp.eq.s32.totalorder %s25, 1
      %p90 = scmp.ne.s32.totalorder %s85, %s87
      %p91 = scmp.eq.s32.totalorder %s25, 0
      %p92 = por %p90, %p91
      %p93 = scmp.ne.s32.totalorder %s85, %s87
      %p94 = scmp.eq.s32.totalorder %s30, 1
      %p95 = por %p93, %p94
      %p96 = scmp.ne.s32.totalorder %s87, %s88
      %p97 = scmp.eq.s32.totalorder %s30, 0
      %p98 = por %p96, %p97
      %p99 = scmp.ne.s32.totalorder %s87, %s88
      %p100 = scmp.eq.s32.totalorder %s31, 1
      %p101 = por %p99, %p100
      %p103 = scmp.ne.s32.totalorder %s88, %s102
      %p104 = scmp.eq.s32.totalorder %s31, 0
      %p105 = por %p103, %p104
      %s107 = sadd.s32 %s106, 1
      %p110 = scmp.eq.s32.totalorder %s25, 1
      %p111 = scmp.ne.s32.totalorder %s106, %s108
      %p112 = scmp.eq.s32.totalorder %s25, 0
      %p113 = por %p111, %p112
      %p114 = scmp.ne.s32.totalorder %s106, %s108
      %p115 = scmp.eq.s32.totalorder %s30, 1
      %p116 = por %p114, %p115
      %p117 = scmp.ne.s32.totalorder %s108, %s109
      %p118 = scmp.eq.s32.totalorder %s30, 0
      %p119 = por %p117, %p118
      %p120 = scmp.ne.s32.totalorder %s108, %s109
      %p121 = scmp.eq.s32.totalorder %s31, 1
      %p122 = por %p120, %p121
      %p124 = scmp.ne.s32.totalorder %s109, %s123
      %p125 = scmp.eq.s32.totalorder %s31, 0
      %p126 = por %p124, %p125
      %s128 = sadd.s32 %s127, 1
      %p131 = scmp.eq.s32.totalorder %s25, 1
      %p132 = scmp.ne.s32.totalorder %s127, %s129
      %p133 = scmp.eq.s32.totalorder %s25, 0
      %p134 = por %p132, %p133
      %p135 = scmp.ne.s32.totalorder %s127, %s129
      %p136 = scmp.eq.s32.totalorder %s30, 1
      %p137 = por %p135, %p136
      %p138 = scmp.ne.s32.totalorder %s129, %s130
      %p139 = scmp.eq.s32.totalorder %s30, 0
      %p140 = por %p138, %p139
      %p141 = scmp.ne.s32.totalorder %s129, %s130
      %p142 = scmp.eq.s32.totalorder %s31, 1
      %p143 = por %p141, %p142
      %p145 = scmp.ne.s32.totalorder %s130, %s144
      %p146 = scmp.eq.s32.totalorder %s31, 0
      %p147 = por %p145, %p146
      %s149 = sadd.s32 %s148, 1
      %p152 = scmp.eq.s32.totalorder %s25, 1
      %p153 = scmp.ne.s32.totalorder %s148, %s150
      %p154 = scmp.eq.s32.totalorder %s25, 0
      %p155 = por %p153, %p154
      %p156 = scmp.ne.s32.totalorder %s148, %s150
      %p157 = scmp.eq.s32.totalorder %s30, 1
      %p158 = por %p156, %p157
      %p159 = scmp.ne.s32.totalorder %s150, %s151
      %p160 = scmp.eq.s32.totalorder %s30, 0
      %p161 = por %p159, %p160
      %p162 = scmp.ne.s32.totalorder %s150, %s151
      %p163 = scmp.eq.s32.totalorder %s31, 1
      %p164 = por %p162, %p163
      %p166 = scmp.ne.s32.totalorder %s151, %s165
      %p167 = scmp.eq.s32.totalorder %s31, 0
      %p168 = por %p166, %p167
      %s170 = sadd.s32 %s169, 1
      %p173 = scmp.eq.s32.totalorder %s25, 1
      %p174 = scmp.ne.s32.totalorder %s169, %s171
      %p175 = scmp.eq.s32.totalorder %s25, 0
      %p176 = por %p174, %p175
      %p177 = scmp.ne.s32.totalorder %s169, %s171
      %p178 = scmp.eq.s32.totalorder %s30, 1
      %p179 = por %p177, %p178
      %p180 = scmp.ne.s32.totalorder %s171, %s172
      %p181 = scmp.eq.s32.totalorder %s30, 0
      %p182 = por %p180, %p181
      %p183 = scmp.ne.s32.totalorder %s171, %s172
      %p184 = scmp.eq.s32.totalorder %s31, 1
      %p185 = por %p183, %p184
      %p187 = scmp.ne.s32.totalorder %s172, %s186
      %p188 = scmp.eq.s32.totalorder %s31, 0
      %p189 = por %p187, %p188
      %s191 = sadd.s32 %s190, 1
      %p194 = scmp.eq.s32.totalorder %s25, 1
      %p195 = scmp.ne.s32.totalorder %s190, %s192
      %p196 = scmp.eq.s32.totalorder %s25, 0
      %p197 = por %p195, %p196
      %p198 = scmp.ne.s32.totalorder %s190, %s192
      %p199 = scmp.eq.s32.totalorder %s30, 1
      %p200 = por %p198, %p199
      %p201 = scmp.ne.s32.totalorder %s192, %s193
      %p202 = scmp.eq.s32.totalorder %s30, 0
      %p203 = por %p201, %p202
      %p204 = scmp.ne.s32.totalorder %s192, %s193
      %p205 = scmp.eq.s32.totalorder %s31, 1
      %p206 = por %p204, %p205
      %p208 = scmp.ne.s32.totalorder %s193, %s207
      %p209 = scmp.eq.s32.totalorder %s31, 0
      %p210 = por %p208, %p209
      %s212 = sadd.s32 %s211, 1
      %p215 = scmp.eq.s32.totalorder %s25, 1
      %p216 = scmp.ne.s32.totalorder %s211, %s213
      %p217 = scmp.eq.s32.totalorder %s25, 0
      %p218 = por %p216, %p217
      %p219 = scmp.ne.s32.totalorder %s211, %s213
      %p220 = scmp.eq.s32.totalorder %s30, 1
      %p221 = por %p219, %p220
      %p222 = scmp.ne.s32.totalorder %s213, %s214
      %p223 = scmp.eq.s32.totalorder %s30, 0
      %p224 = por %p222, %p223
      %p225 = scmp.ne.s32.totalorder %s213, %s214
      %p226 = scmp.eq.s32.totalorder %s31, 1
      %p227 = por %p225, %p226
      %p229 = scmp.ne.s32.totalorder %s214, %s228
      %p230 = scmp.eq.s32.totalorder %s31, 0
      %p231 = por %p229, %p230
      %s233 = sadd.s32 %s232, 1
      %p236 = scmp.eq.s32.totalorder %s25, 1
      %p237 = scmp.ne.s32.totalorder %s232, %s234
      %p238 = scmp.eq.s32.totalorder %s25, 0
      %p239 = por %p237, %p238
      %p240 = scmp.ne.s32.totalorder %s232, %s234
      %p241 = scmp.eq.s32.totalorder %s30, 1
      %p242 = por %p240, %p241
      %p243 = scmp.ne.s32.totalorder %s234, %s235
      %p244 = scmp.eq.s32.totalorder %s30, 0
      %p245 = por %p243, %p244
      %p246 = scmp.ne.s32.totalorder %s234, %s235
      %p247 = scmp.eq.s32.totalorder %s31, 1
      %p248 = por %p246, %p247
      %p250 = scmp.ne.s32.totalorder %s235, %s249
      %p251 = scmp.eq.s32.totalorder %s31, 0
      %p252 = por %p250, %p251
      %s254 = sadd.s32 %s253, 1
      %p257 = scmp.eq.s32.totalorder %s25, 1
      %p258 = scmp.ne.s32.totalorder %s253, %s255
      %p259 = scmp.eq.s32.totalorder %s25, 0
      %p260 = por %p258, %p259
      %p261 = scmp.ne.s32.totalorder %s253, %s255
      %p262 = scmp.eq.s32.totalorder %s30, 1
      %p263 = por %p261, %p262
      %p264 = scmp.ne.s32.totalorder %s255, %s256
      %p265 = scmp.eq.s32.totalorder %s30, 0
      %p266 = por %p264, %p265
      %p267 = scmp.ne.s32.totalorder %s255, %s256
      %p268 = scmp.eq.s32.totalorder %s31, 1
      %p269 = por %p267, %p268
      %p271 = scmp.ne.s32.totalorder %s256, %s270
      %p272 = scmp.eq.s32.totalorder %s31, 0
      %p273 = por %p271, %p272
      %s275 = sadd.s32 %s274, 1
      %p278 = scmp.eq.s32.totalorder %s25, 1
      %p279 = scmp.ne.s32.totalorder %s274, %s276
      %p280 = scmp.eq.s32.totalorder %s25, 0
      %p281 = por %p279, %p280
      %p282 = scmp.ne.s32.totalorder %s274, %s276
      %p283 = scmp.eq.s32.totalorder %s30, 1
      %p284 = por %p282, %p283
      %p285 = scmp.ne.s32.totalorder %s276, %s277
      %p286 = scmp.eq.s32.totalorder %s30, 0
      %p287 = por %p285, %p286
      %p288 = scmp.ne.s32.totalorder %s276, %s277
      %p289 = scmp.eq.s32.totalorder %s31, 1
      %p290 = por %p288, %p289
      %p292 = scmp.ne.s32.totalorder %s277, %s291
      %p293 = scmp.eq.s32.totalorder %s31, 0
      %p294 = por %p292, %p293
      %s296 = sadd.s32 %s295, 1
      %p299 = scmp.eq.s32.totalorder %s25, 1
      %p300 = scmp.ne.s32.totalorder %s295, %s297
      %p301 = scmp.eq.s32.totalorder %s25, 0
      %p302 = por %p300, %p301
      %p303 = scmp.ne.s32.totalorder %s295, %s297
      %p304 = scmp.eq.s32.totalorder %s30, 1
      %p305 = por %p303, %p304
      %p306 = scmp.ne.s32.totalorder %s297, %s298
      %p307 = scmp.eq.s32.totalorder %s30, 0
      %p308 = por %p306, %p307
      %p309 = scmp.ne.s32.totalorder %s297, %s298
      %p310 = scmp.eq.s32.totalorder %s31, 1
      %p311 = por %p309, %p310
      %p313 = scmp.ne.s32.totalorder %s298, %s312
      %p314 = scmp.eq.s32.totalorder %s31, 0
      %p315 = por %p313, %p314
      %s317 = sadd.s32 %s316, 1
      %p320 = scmp.eq.s32.totalorder %s25, 1
      %p321 = scmp.ne.s32.totalorder %s316, %s318
      %p322 = scmp.eq.s32.totalorder %s25, 0
      %p323 = por %p321, %p322
      %p324 = scmp.ne.s32.totalorder %s316, %s318
      %p325 = scmp.eq.s32.totalorder %s30, 1
      %p326 = por %p324, %p325
      %p327 = scmp.ne.s32.totalorder %s318, %s319
      %p328 = scmp.eq.s32.totalorder %s30, 0
      %p329 = por %p327, %p328
      %p330 = scmp.ne.s32.totalorder %s318, %s319
      %p331 = scmp.eq.s32.totalorder %s31, 1
      %p332 = por %p330, %p331
      %p334 = scmp.ne.s32.totalorder %s319, %s333
      %p335 = scmp.eq.s32.totalorder %s31, 0
      %p336 = por %p334, %p335
      %s338 = sadd.s32 %s337, 1
      %p341 = scmp.eq.s32.totalorder %s25, 1
      %p342 = scmp.ne.s32.totalorder %s337, %s339
      %p343 = scmp.eq.s32.totalorder %s25, 0
      %p344 = por %p342, %p343
      %p345 = scmp.ne.s32.totalorder %s337, %s339
      %p346 = scmp.eq.s32.totalorder %s30, 1
      %p347 = por %p345, %p346
      %p348 = scmp.ne.s32.totalorder %s339, %s340
      %p349 = scmp.eq.s32.totalorder %s30, 0
      %p350 = por %p348, %p349
      %p351 = scmp.ne.s32.totalorder %s339, %s340
      %p352 = scmp.eq.s32.totalorder %s31, 1
      %p353 = por %p351, %p352
      %p355 = scmp.ne.s32.totalorder %s340, %s354
      %p356 = scmp.eq.s32.totalorder %s31, 0
      %p357 = por %p355, %p356
      %s359 = sadd.s32 %s358, 1
      %p362 = scmp.eq.s32.totalorder %s25, 1
      %p363 = scmp.ne.s32.totalorder %s358, %s360
      %p364 = scmp.eq.s32.totalorder %s25, 0
      %p365 = por %p363, %p364
      %p366 = scmp.ne.s32.totalorder %s358, %s360
      %p367 = scmp.eq.s32.totalorder %s30, 1
      %p368 = por %p366, %p367
      %p369 = scmp.ne.s32.totalorder %s360, %s361
      %p370 = scmp.eq.s32.totalorder %s30, 0
      %p371 = por %p369, %p370
      %p372 = scmp.ne.s32.totalorder %s360, %s361
      %p373 = scmp.eq.s32.totalorder %s31, 1
      %p374 = por %p372, %p373
      %p376 = scmp.ne.s32.totalorder %s361, %s375
      %p377 = scmp.eq.s32.totalorder %s31, 0
      %p378 = por %p376, %p377
      %s379 = ssub.s32 %s25, %s32
      %p380 = scmp.eq.s32.totalorder %s379, 0
      %s382 = sadd.s32 %s381, 1
      %s383 = scalar_select %p380, %s381, %s382
      %p386 = pneg %p380
      %p387 = scmp.eq.s32.totalorder %s25, 1
      %p388 = por %p386, %p387
      %p389 = scmp.ne.s32.totalorder %s381, %s384
      %p390 = scmp.eq.s32.totalorder %s25, 0
      %p391 = por %p389, %p390
      %p392 = scmp.ne.s32.totalorder %s381, %s384
      %p393 = scmp.eq.s32.totalorder %s30, 1
      %p394 = por %p392, %p393
      %p395 = scmp.ne.s32.totalorder %s384, %s385
      %p396 = scmp.eq.s32.totalorder %s30, 0
      %p397 = por %p395, %p396
      %p398 = scmp.ne.s32.totalorder %s384, %s385
      %p399 = scmp.eq.s32.totalorder %s31, 1
      %p400 = por %p398, %p399
      %p402 = scmp.ne.s32.totalorder %s385, %s401
      %p403 = scmp.eq.s32.totalorder %s31, 0
      %p404 = por %p402, %p403
      %p405 = scmp.le.s32.totalorder 1, %s25
      %p406 = scmp.lt.s32.totalorder %s25, 3
      %p407 = pnand %p405, %p406
      %p408 = pneg %p407
      // Predicated region
      $region9: #{model_forward.1} parent=5 // pred_check
        _
      $region10: #{model_forward.1} parent=5 // pred_check_branch
        %410 = sbr.rel (%p407) target = $region12
      $region11: #{model_forward.1} parent=5 // pred_region
        %s411 = ssub.s32 %s25, 1
        // Predicated region
        $region13: #{model_forward.1} parent=11 // pred_check
          %p412 = pneg %p98
        $region14: #{model_forward.1} parent=11 // pred_check_branch
          %414 = sbr.rel (%p412) target = $region16
        $region15: #{model_forward.1} parent=11 // pred_region
          _
        $region16: #{model_forward.1} parent=11 // pred_fallthru
          _
        // Predicated region
        $region17: #{model_forward.1} parent=11 // pred_check
          %p415 = pneg %p119
        $region18: #{model_forward.1} parent=11 // pred_check_branch
          %417 = sbr.rel (%p415) target = $region20
        $region19: #{model_forward.1} parent=11 // pred_region
          _
        $region20: #{model_forward.1} parent=11 // pred_fallthru
          _
        // Predicated region
        $region21: #{model_forward.1} parent=11 // pred_check
          %p418 = pneg %p140
        $region22: #{model_forward.1} parent=11 // pred_check_branch
          %420 = sbr.rel (%p418) target = $region24
        $region23: #{model_forward.1} parent=11 // pred_region
          _
        $region24: #{model_forward.1} parent=11 // pred_fallthru
          _
        // Predicated region
        $region25: #{model_forward.1} parent=11 // pred_check
          %p421 = pneg %p161
        $region26: #{model_forward.1} parent=11 // pred_check_branch
          %423 = sbr.rel (%p421) target = $region28
        $region27: #{model_forward.1} parent=11 // pred_region
          _
        $region28: #{model_forward.1} parent=11 // pred_fallthru
          _
        // Predicated region
        $region29: #{model_forward.1} parent=11 // pred_check
          %p424 = pneg %p182
        $region30: #{model_forward.1} parent=11 // pred_check_branch
          %426 = sbr.rel (%p424) target = $region32
        $region31: #{model_forward.1} parent=11 // pred_region
          _
        $region32: #{model_forward.1} parent=11 // pred_fallthru
          _
        // Predicated region
        $region33: #{model_forward.1} parent=11 // pred_check
          %p427 = pneg %p203
        $region34: #{model_forward.1} parent=11 // pred_check_branch
          %429 = sbr.rel (%p427) target = $region36
        $region35: #{model_forward.1} parent=11 // pred_region
          _
        $region36: #{model_forward.1} parent=11 // pred_fallthru
          _
        // Predicated region
        $region37: #{model_forward.1} parent=11 // pred_check
          %p430 = pneg %p224
        $region38: #{model_forward.1} parent=11 // pred_check_branch
          %432 = sbr.rel (%p430) target = $region40
        $region39: #{model_forward.1} parent=11 // pred_region
          _
        $region40: #{model_forward.1} parent=11 // pred_fallthru
          _
        // Predicated region
        $region41: #{model_forward.1} parent=11 // pred_check
          %p433 = pneg %p245
        $region42: #{model_forward.1} parent=11 // pred_check_branch
          %435 = sbr.rel (%p433) target = $region44
        $region43: #{model_forward.1} parent=11 // pred_region
          _
        $region44: #{model_forward.1} parent=11 // pred_fallthru
          _
        // Predicated region
        $region45: #{model_forward.1} parent=11 // pred_check
          %p436 = pneg %p266
        $region46: #{model_forward.1} parent=11 // pred_check_branch
          %438 = sbr.rel (%p436) target = $region48
        $region47: #{model_forward.1} parent=11 // pred_region
          _
        $region48: #{model_forward.1} parent=11 // pred_fallthru
          _
        // Predicated region
        $region49: #{model_forward.1} parent=11 // pred_check
          %p439 = pneg %p287
        $region50: #{model_forward.1} parent=11 // pred_check_branch
          %441 = sbr.rel (%p439) target = $region52
        $region51: #{model_forward.1} parent=11 // pred_region
          _
        $region52: #{model_forward.1} parent=11 // pred_fallthru
          _
        // Predicated region
        $region53: #{model_forward.1} parent=11 // pred_check
          %p442 = pneg %p308
        $region54: #{model_forward.1} parent=11 // pred_check_branch
          %444 = sbr.rel (%p442) target = $region56
        $region55: #{model_forward.1} parent=11 // pred_region
          _
        $region56: #{model_forward.1} parent=11 // pred_fallthru
          _
        // Predicated region
        $region57: #{model_forward.1} parent=11 // pred_check
          %p445 = pneg %p329
        $region58: #{model_forward.1} parent=11 // pred_check_branch
          %447 = sbr.rel (%p445) target = $region60
        $region59: #{model_forward.1} parent=11 // pred_region
          _
        $region60: #{model_forward.1} parent=11 // pred_fallthru
          _
        // Predicated region
        $region61: #{model_forward.1} parent=11 // pred_check
          %p448 = pneg %p350
        $region62: #{model_forward.1} parent=11 // pred_check_branch
          %450 = sbr.rel (%p448) target = $region64
        $region63: #{model_forward.1} parent=11 // pred_region
          _
        $region64: #{model_forward.1} parent=11 // pred_fallthru
          _
        // Predicated region
        $region65: #{model_forward.1} parent=11 // pred_check
          %p451 = pneg %p371
        $region66: #{model_forward.1} parent=11 // pred_check_branch
          %453 = sbr.rel (%p451) target = $region68
        $region67: #{model_forward.1} parent=11 // pred_region
          _
        $region68: #{model_forward.1} parent=11 // pred_fallthru
          _
      $region12: #{model_forward.1} parent=5 // pred_fallthru
        _
      %p454 = scmp.lt.s32.totalorder %s25, 2
      // Predicated region
      $region69: #{model_forward.1} parent=5 // pred_check
        %p455 = pneg %p454
      $region70: #{model_forward.1} parent=5 // pred_check_branch
        %457 = sbr.rel (%p455) target = $region72
      $region71: #{model_forward.1} parent=5 // pred_region
        // Predicated region
        $region73: #{model_forward.1} parent=71 // pred_check
          %p458 = pneg %p45
        $region74: #{model_forward.1} parent=71 // pred_check_branch
          %460 = sbr.rel (%p458) target = $region76
        $region75: #{model_forward.1} parent=71 // pred_region
          %p461 = scmp.lt.s32.totalorder %s25, 1
          %s462 = scalar_select %p461, %s25, 1
          %s463 = smul.addr %s462, 8
          %s464 = scalar_lea.vmem %s0, %s463
        $region76: #{model_forward.1} parent=71 // pred_fallthru
          _
        // Predicated region
        $region77: #{model_forward.1} parent=71 // pred_check
          %p465 = pneg %p71
        $region78: #{model_forward.1} parent=71 // pred_check_branch
          %467 = sbr.rel (%p465) target = $region80
        $region79: #{model_forward.1} parent=71 // pred_region
          %p468 = scmp.lt.s32.totalorder %s25, 1
          %s469 = scalar_select %p468, %s25, 1
          %s470 = scalar_lea.vmem %s1, %s469
        $region80: #{model_forward.1} parent=71 // pred_fallthru
          _
      $region72: #{model_forward.1} parent=5 // pred_fallthru
        _
      %p471 = scmp.le.s32.totalorder 1, %s25
      %p472 = scmp.lt.s32.totalorder %s25, 3
      %p473 = pnand %p471, %p472
      %p474 = pneg %p473
      // Predicated region
      $region81: #{model_forward.1} parent=5 // pred_check
        _
      $region82: #{model_forward.1} parent=5 // pred_check_branch
        %476 = sbr.rel (%p473) target = $region84
      $region83: #{model_forward.1} parent=5 // pred_region
        %s477 = ssub.s32 %s25, 1
        %p478 = scmp.lt.s32.totalorder %s30, 1
        %s479 = scalar_select %p478, %s30, 1
        %s480 = smul.addr %s479, 8
        %s481 = scalar_lea.vmem %s0, %s480
        %p482 = pneg %p51
        %p483 = pneg %p48
        %p484 = scmp.lt.s32.totalorder %s30, 1
        %s485 = scalar_select %p484, %s30, 1
        %s486 = scalar_lea.vmem %s1, %s485
        %p487 = pneg %p77
        %p488 = pneg %p74
        %p489 = pneg %p98
        %p490 = pneg %p95
        %p491 = pneg %p119
        %p492 = pneg %p116
        %p493 = pneg %p140
        %p494 = pneg %p137
        %p495 = pneg %p161
        %p496 = pneg %p158
        %p497 = pneg %p182
        %p498 = pneg %p179
        %p499 = pneg %p203
        %p500 = pneg %p200
        %p501 = pneg %p224
        %p502 = pneg %p221
        %p503 = pneg %p245
        %p504 = pneg %p242
        %p505 = pneg %p266
        %p506 = pneg %p263
        %p507 = pneg %p287
        %p508 = pneg %p284
        %p509 = pneg %p308
        %p510 = pneg %p305
        %p511 = pneg %p329
        %p512 = pneg %p326
        %p513 = pneg %p350
        %p514 = pneg %p347
        %p515 = pneg %p371
        %p516 = pneg %p368
        %p517 = pneg %p397
        %p518 = pneg %p394
        %s519 = sand.u32 %s384, 1
        %s520 = scalar_lea.sflag [#allocation3], %s519
        %s521 = sand.u32 %s384, 1
        %s522 = smul.addr %s521, 8
        %s523 = scalar_lea.vmem [#allocation2], %s522
        %p524 = scmp.lt.s32.totalorder %s30, 1
        %s525 = scalar_select %p524, %s30, 1
        %s526 = smul.addr %s525, 8
        %s527 = scalar_lea.vmem %s0, %s526
        %p528 = scmp.lt.s32.totalorder %s30, 1
        %s529 = scalar_select %p528, %s30, 1
        %s530 = scalar_lea.vmem %s1, %s529
        %v532 = vld [vmem:[%s527] sm:$0xff]
        %v533 = vlaneseq
        %v534 = vshrl.u32 %v533, 7
        %v535 = vlaneseq
        %v536 = vand.u32 %v535, 127
        %v537 = vld [vmem:[%s530] sm:$0x1]
        %vm538 = vcmp.eq.s32.totalorder %v537, 0
        %vm539 = vcmp.gt.s32.totalorder %v536, %v534
        %v540 = vsel %vm538, 1, 0
        %v541 = vlaneseq
        %v542 = vshrl.u32 %v541, 7
        %v543 = vsub.s32 0, %v542
        %v544 = vrot.slane %v540, %v543
        %vm545 = vcmp.eq.s32.totalorder %v544, 1
        %vm546 = vmor %vm539, %vm545
        %v547 = vsel %vm546, -1e+30, 0.0
        %v548 = vld [vmem:[%s2] sm:$0x1]
        %v549 = vld [vmem:[%s3] sm:$0x1]
        %vm550 = vcmask 261120
        %v551 = vsel %vm550, %v532, 0.0
        %552 = vadd.xlane.f32.xlu0 %v551
        %v553 = vpop.xlane.xlu0 %552
        %v554 = vrcp.pop 32.0
        %v555 = vmul.f32 %v553, %v554
        %v556 = vsub.f32 %v532, %v555
        %v557 = vmul.f32 %v556, %v556
        %v558 = vsel %vm550, %v557, 0.0
        %559 = vadd.xlane.f32.xlu0 %v558
        %v560 = vpop.xlane.xlu0 %559
        %v561 = vmul.f32 %v560, %v554
        %v562 = vadd.f32 %v561, 1e-05
        %v563 = vrsqrt.pop %v562
        %v564 = vmul.f32 %v556, %v563
        %v566 = vlaneseq
        %v567 = vshrl.u32 %v566, 7
        %v568 = vsub.s32 0, %v567
        %v569 = vrot.slane %v548, %v568
        %v571 = vmul.f32 %v564, %v569
        %v573 = vlaneseq
        %v574 = vshrl.u32 %v573, 7
        %v575 = vsub.s32 0, %v574
        %v576 = vrot.slane %v549, %v575
        %v578 = vadd.f32 %v571, %v576
        %v579 = vpack.c.bf16 %v578, %v578
        %v580 = vld [vmem:[%s4] sm:$0xf]
        %v581 = vld [vmem:[%s4 + $0x4] sm:$0xf]
        %v582 = vld [vmem:[%s4 + $0x8] sm:$0xf]
        %v583 = vld [vmem:[%s4 + $0xc] sm:$0xf]
        %v584 = vld [vmem:[%s5] sm:$0x1]
        %v586 = vlaneseq
        %v587 = vshrl.u32 %v586, 7
        %v588 = vsub.s32 0, %v587
        %v589 = vrot.slane %v584, %v588
        %v595 = vunpack.c.l.b16 %v580
        %v596 = vunpack.c.l.b16 %v581
        %v597 = vunpack.c.l.b16 %v582
        %v598 = vunpack.c.l.b16 %v583
        %v599 = vpack.c.b16 %v596, %v595
        %v600 = vpack.c.b16 %v598, %v597
        %v604 = vsel %vm550, %v579, 0
        %606 = vmatprep.subr.bf16.mxu0 0
        %607 = vmatpush1.bf16.msra.mxu0 0
        %608 = vmatprep.subr.bf16.mxu0 0
        %609 = vmatpush1.bf16.msra.mxu0 0
        %610 = vmatprep.subr.bf16.mxu0 0
        %611 = vmatpush1.bf16.msra.mxu0 0
        %612 = vmatprep.subr.bf16.mxu0 0
        %613 = vmatpush1.bf16.msra.mxu0 0
        %614 = vmatprep.subr.bf16.mxu0 0
        %615 = vmatpush1.bf16.msra.mxu0 0
        %616 = vmatprep.subr.bf16.mxu0 0
        %617 = vmatpush1.bf16.msra.mxu0 0
        %618 = vmatprep.subr.bf16.mxu0 0
        %619 = vmatpush1.bf16.msra.mxu0 %v600
        %620 = vmatprep.subr.bf16.mxu0 0
        %621 = vmatpush1.bf16.msra.mxu0 %v599
        %622 = vmatprep.subr.bf16.mxu0 0
        %623 = vmatpush2.bf16.msra.mxu0 0
        %624 = vmatprep.subr.bf16.mxu0 0
        %625 = vmatpush2.bf16.msra.mxu0 0
        %626 = vmatprep.subr.bf16.mxu0 0
        %627 = vmatpush2.bf16.msra.mxu0 0
        %628 = vmatprep.subr.bf16.mxu0 0
        %629 = vmatpush2.bf16.msra.mxu0 0
        %630 = vmatprep.subr.bf16.mxu0 0
        %631 = vmatpush2.bf16.msra.mxu0 0
        %632 = vmatprep.subr.bf16.mxu0 0
        %633 = vmatpush2.bf16.msra.mxu0 0
        %634 = vmatprep.subr.bf16.mxu0 0
        %635 = vmatpush2.bf16.msra.mxu0 0
        %636 = vmatprep.subr.bf16.mxu0 0
        %637 = vmatpush2.bf16.msra.mxu0 0
        %638 = vmatprep.mubr.bf16.mxu0 0
        %639 = vmatmul.mubr.bf16.gmra.mxu0 %v604
        %v640 = vpop.f32.mrf.mxu0
        %v641 = vadd.f32 %v589, %v640
        %v642 = vpop.f32.mrf.mxu0
        %v643 = vpop.f32.mrf.mxu0
        %v644 = vpop.f32.mrf.mxu0
        %645 = vdwg.mxu0
        %v646 = vpack.c.bf16 %v641, %v641
        %v647 = vld [vmem:[%s6] sm:$0xf]
        %v648 = vld [vmem:[%s6 + $0x4] sm:$0xf]
        %v649 = vld [vmem:[%s6 + $0x8] sm:$0xf]
        %v650 = vld [vmem:[%s6 + $0xc] sm:$0xf]
        %v651 = vld [vmem:[%s7] sm:$0x1]
        %v653 = vlaneseq
        %v654 = vshrl.u32 %v653, 7
        %v655 = vsub.s32 0, %v654
        %v656 = vrot.slane %v651, %v655
        %v658 = vadd.f32 %v532, %v656
        %660 = vrot.lane.b32.xlu0 %v646, 96
        %v661 = vpop.permute.xlu0 %660
        %vm662 = vcmask 64512
        %v664 = vsel %vm662, %v646, 0
        %v667 = vsel %vm662, %v661, 0
        %669 = vmatprep.subr.bf16.mxu0 0
        %670 = vmatpush1.bf16.xpose.msra.mxu0 0
        %671 = vmatprep.subr.bf16.mxu0 0
        %672 = vmatpush1.bf16.xpose.msra.mxu0 0
        %673 = vmatprep.subr.bf16.mxu0 0
        %674 = vmatpush1.bf16.xpose.msra.mxu0 0
        %675 = vmatprep.subr.bf16.mxu0 0
        %676 = vmatpush1.bf16.xpose.msra.mxu0 0
        %677 = vmatprep.subr.bf16.mxu0 0
        %678 = vmatpush1.bf16.xpose.msra.mxu0 0
        %679 = vmatprep.subr.bf16.mxu0 0
        %680 = vmatpush1.bf16.xpose.msra.mxu0 0
        %681 = vmatprep.subr.bf16.mxu0 0
        %682 = vmatpush1.bf16.xpose.msra.mxu0 0
        %683 = vmatprep.subr.bf16.mxu0 0
        %684 = vmatpush1.bf16.xpose.msra.mxu0 %v667
        %685 = vmatprep.subr.bf16.mxu0 0
        %686 = vmatpush2.bf16.xpose.msra.mxu0 0
        %687 = vmatprep.subr.bf16.mxu0 0
        %688 = vmatpush2.bf16.xpose.msra.mxu0 0
        %689 = vmatprep.subr.bf16.mxu0 0
        %690 = vmatpush2.bf16.xpose.msra.mxu0 0
        %691 = vmatprep.subr.bf16.mxu0 0
        %692 = vmatpush2.bf16.xpose.msra.mxu0 0
        %693 = vmatprep.subr.bf16.mxu0 0
        %694 = vmatpush2.bf16.xpose.msra.mxu0 0
        %695 = vmatprep.subr.bf16.mxu0 0
        %696 = vmatpush2.bf16.xpose.msra.mxu0 0
        %697 = vmatprep.subr.bf16.mxu0 0
        %698 = vmatpush2.bf16.xpose.msra.mxu0 0
        %699 = vmatprep.subr.bf16.mxu0 0
        %700 = vmatpush2.bf16.xpose.msra.mxu0 0
        %701 = vmatprep.mubr.bf16.mxu0 0
        %702 = vmatmul.mubr.bf16.gmra.mxu0 %v664
        %v703 = vpop.f32.mrf.mxu0
        %v704 = vadd.f32 0.0, %v703
        %v705 = vpop.f32.mrf.mxu0
        %v706 = vpop.f32.mrf.mxu0
        %v707 = vpop.f32.mrf.mxu0
        %708 = vdwg.mxu0
        %v709 = vmul.f32 %v704, 0.35355338
        %v710 = vadd.f32 %v709, %v547
        %v711 = vsel %vm662, %v710, -inf
        %712 = vmax.xlane.f32.xlu0 %v711
        %v713 = vpop.xlane.xlu0 %712
        %v714 = vsub.f32 %v710, %v713
        %v715 = vmul.f32 %v714, 1.442695
        %v716 = vpow.pop %v715
        %v717 = vsel %vm662, %v716, 0.0
        %718 = vadd.xlane.f32.xlu0 %v717
        %v719 = vpop.xlane.xlu0 %718
        %v720 = vrcp.pop %v719
        %v721 = vpack.c.bf16 %v716, %v716
        %722 = vrot.lane.b32.xlu0 %v646, 64
        %v723 = vpop.permute.xlu0 %722
        %v725 = vsel %vm662, %v721, 0
        %vm727 = vcmask 1043456
        %v729 = vsel %vm727, %v723, 0
        %731 = vmatprep.subr.bf16.mxu0 0
        %732 = vmatpush1.bf16.msra.mxu0 0
        %733 = vmatprep.subr.bf16.mxu0 0
        %734 = vmatpush1.bf16.msra.mxu0 0
        %735 = vmatprep.subr.bf16.mxu0 0
        %736 = vmatpush1.bf16.msra.mxu0 0
        %737 = vmatprep.subr.bf16.mxu0 0
        %738 = vmatpush1.bf16.msra.mxu0 0
        %739 = vmatprep.subr.bf16.mxu0 0
        %740 = vmatpush1.bf16.msra.mxu0 0
        %741 = vmatprep.subr.bf16.mxu0 0
        %742 = vmatpush1.bf16.msra.mxu0 0
        %743 = vmatprep.subr.bf16.mxu0 0
        %744 = vmatpush1.bf16.msra.mxu0 0
        %745 = vmatprep.subr.bf16.mxu0 0
        %746 = vmatpush1.bf16.msra.mxu0 %v729
        %747 = vmatprep.subr.bf16.mxu0 0
        %748 = vmatpush2.bf16.msra.mxu0 0
        %749 = vmatprep.subr.bf16.mxu0 0
        %750 = vmatpush2.bf16.msra.mxu0 0
        %751 = vmatprep.subr.bf16.mxu0 0
        %752 = vmatpush2.bf16.msra.mxu0 0
        %753 = vmatprep.subr.bf16.mxu0 0
        %754 = vmatpush2.bf16.msra.mxu0 0
        %755 = vmatprep.subr.bf16.mxu0 0
        %756 = vmatpush2.bf16.msra.mxu0 0
        %757 = vmatprep.subr.bf16.mxu0 0
        %758 = vmatpush2.bf16.msra.mxu0 0
        %759 = vmatprep.subr.bf16.mxu0 0
        %760 = vmatpush2.bf16.msra.mxu0 0
        %761 = vmatprep.subr.bf16.mxu0 0
        %762 = vmatpush2.bf16.msra.mxu0 0
        %763 = vmatprep.mubr.bf16.mxu0 0
        %764 = vmatmul.mubr.bf16.gmra.mxu0 %v725
        %v765 = vpop.f32.mrf.mxu0
        %v766 = vadd.f32 0.0, %v765
        %v767 = vpop.f32.mrf.mxu0
        %v768 = vpop.f32.mrf.mxu0
        %v769 = vpop.f32.mrf.mxu0
        %770 = vdwg.mxu0
        %v771 = vmul.f32 %v766, %v720
        %v772 = vpack.c.bf16 %v771, %v771
        %v774 = vsel %vm662, %v772, 0
        %v777 = vsel %vm727, %v647, 0
        %779 = vmatprep.subr.bf16.mxu0 0
        %780 = vmatpush1.bf16.msra.mxu0 0
        %781 = vmatprep.subr.bf16.mxu0 0
        %782 = vmatpush1.bf16.msra.mxu0 0
        %783 = vmatprep.subr.bf16.mxu0 0
        %784 = vmatpush1.bf16.msra.mxu0 0
        %785 = vmatprep.subr.bf16.mxu0 0
        %786 = vmatpush1.bf16.msra.mxu0 0
        %787 = vmatprep.subr.bf16.mxu0 0
        %788 = vmatpush1.bf16.msra.mxu0 0
        %789 = vmatprep.subr.bf16.mxu0 0
        %790 = vmatpush1.bf16.msra.mxu0 0
        %791 = vmatprep.subr.bf16.mxu0 0
        %792 = vmatpush1.bf16.msra.mxu0 0
        %793 = vmatprep.subr.bf16.mxu0 0
        %794 = vmatpush1.bf16.msra.mxu0 %v777
        %795 = vmatprep.subr.bf16.mxu0 0
        %796 = vmatpush2.bf16.msra.mxu0 0
        %797 = vmatprep.subr.bf16.mxu0 0
        %798 = vmatpush2.bf16.msra.mxu0 0
        %799 = vmatprep.subr.bf16.mxu0 0
        %800 = vmatpush2.bf16.msra.mxu0 0
        %801 = vmatprep.subr.bf16.mxu0 0
        %802 = vmatpush2.bf16.msra.mxu0 0
        %803 = vmatprep.subr.bf16.mxu0 0
        %804 = vmatpush2.bf16.msra.mxu0 0
        %805 = vmatprep.subr.bf16.mxu0 0
        %806 = vmatpush2.bf16.msra.mxu0 0
        %807 = vmatprep.subr.bf16.mxu0 0
        %808 = vmatpush2.bf16.msra.mxu0 0
        %809 = vmatprep.subr.bf16.mxu0 0
        %810 = vmatpush2.bf16.msra.mxu0 0
        %811 = vmatprep.mubr.bf16.mxu0 0
        %812 = vmatmul.mubr.bf16.gmra.mxu0 %v774
        %v813 = vpop.f32.mrf.mxu0
        %v814 = vadd.f32 0.0, %v813
        %v815 = vpop.f32.mrf.mxu0
        %v816 = vpop.f32.mrf.mxu0
        %v817 = vpop.f32.mrf.mxu0
        %818 = vdwg.mxu0
        %v819 = vadd.f32 %v658, %v814
        %820 = vrot.lane.b32.xlu0 %v646, 120
        %v821 = vpop.permute.xlu0 %820
        %822 = vrot.lane.b32.xlu0 %v646, 88
        %v823 = vpop.permute.xlu0 %822
        %v825 = vsel %vm662, %v821, 0
        %v828 = vsel %vm662, %v823, 0
        %830 = vmatprep.subr.bf16.mxu0 0
        %831 = vmatpush1.bf16.xpose.msra.mxu0 0
        %832 = vmatprep.subr.bf16.mxu0 0
        %833 = vmatpush1.bf16.xpose.msra.mxu0 0
        %834 = vmatprep.subr.bf16.mxu0 0
        %835 = vmatpush1.bf16.xpose.msra.mxu0 0
        %836 = vmatprep.subr.bf16.mxu0 0
        %837 = vmatpush1.bf16.xpose.msra.mxu0 0
        %838 = vmatprep.subr.bf16.mxu0 0
        %839 = vmatpush1.bf16.xpose.msra.mxu0 0
        %840 = vmatprep.subr.bf16.mxu0 0
        %841 = vmatpush1.bf16.xpose.msra.mxu0 0
        %842 = vmatprep.subr.bf16.mxu0 0
        %843 = vmatpush1.bf16.xpose.msra.mxu0 0
        %844 = vmatprep.subr.bf16.mxu0 0
        %845 = vmatpush1.bf16.xpose.msra.mxu0 %v828
        %846 = vmatprep.subr.bf16.mxu0 0
        %847 = vmatpush2.bf16.xpose.msra.mxu0 0
        %848 = vmatprep.subr.bf16.mxu0 0
        %849 = vmatpush2.bf16.xpose.msra.mxu0 0
        %850 = vmatprep.subr.bf16.mxu0 0
        %851 = vmatpush2.bf16.xpose.msra.mxu0 0
        %852 = vmatprep.subr.bf16.mxu0 0
        %853 = vmatpush2.bf16.xpose.msra.mxu0 0
        %854 = vmatprep.subr.bf16.mxu0 0
        %855 = vmatpush2.bf16.xpose.msra.mxu0 0
        %856 = vmatprep.subr.bf16.mxu0 0
        %857 = vmatpush2.bf16.xpose.msra.mxu0 0
        %858 = vmatprep.subr.bf16.mxu0 0
        %859 = vmatpush2.bf16.xpose.msra.mxu0 0
        %860 = vmatprep.subr.bf16.mxu0 0
        %861 = vmatpush2.bf16.xpose.msra.mxu0 0
        %862 = vmatprep.mubr.bf16.mxu0 0
        %863 = vmatmul.mubr.bf16.gmra.mxu0 %v825
        %v864 = vpop.f32.mrf.mxu0
        %v865 = vadd.f32 0.0, %v864
        %v866 = vpop.f32.mrf.mxu0
        %v867 = vpop.f32.mrf.mxu0
        %v868 = vpop.f32.mrf.mxu0
        %869 = vdwg.mxu0
        %v870 = vmul.f32 %v865, 0.35355338
        %v871 = vadd.f32 %v870, %v547
        %v872 = vsel %vm662, %v871, -inf
        %873 = vmax.xlane.f32.xlu0 %v872
        %v874 = vpop.xlane.xlu0 %873
        %v875 = vsub.f32 %v871, %v874
        %v876 = vmul.f32 %v875, 1.442695
        %v877 = vpow.pop %v876
        %v878 = vsel %vm662, %v877, 0.0
        %879 = vadd.xlane.f32.xlu0 %v878
        %v880 = vpop.xlane.xlu0 %879
        %v881 = vrcp.pop %v880
        %v882 = vpack.c.bf16 %v877, %v877
        %883 = vrot.lane.b32.xlu0 %v646, 56
        %v884 = vpop.permute.xlu0 %883
        %v886 = vsel %vm662, %v882, 0
        %v889 = vsel %vm727, %v884, 0
        %891 = vmatprep.subr.bf16.mxu0 0
        %892 = vmatpush1.bf16.msra.mxu0 0
        %893 = vmatprep.subr.bf16.mxu0 0
        %894 = vmatpush1.bf16.msra.mxu0 0
        %895 = vmatprep.subr.bf16.mxu0 0
        %896 = vmatpush1.bf16.msra.mxu0 0
        %897 = vmatprep.subr.bf16.mxu0 0
        %898 = vmatpush1.bf16.msra.mxu0 0
        %899 = vmatprep.subr.bf16.mxu0 0
        %900 = vmatpush1.bf16.msra.mxu0 0
        %901 = vmatprep.subr.bf16.mxu0 0
        %902 = vmatpush1.bf16.msra.mxu0 0
        %903 = vmatprep.subr.bf16.mxu0 0
        %904 = vmatpush1.bf16.msra.mxu0 0
        %905 = vmatprep.subr.bf16.mxu0 0
        %906 = vmatpush1.bf16.msra.mxu0 %v889
        %907 = vmatprep.subr.bf16.mxu0 0
        %908 = vmatpush2.bf16.msra.mxu0 0
        %909 = vmatprep.subr.bf16.mxu0 0
        %910 = vmatpush2.bf16.msra.mxu0 0
        %911 = vmatprep.subr.bf16.mxu0 0
        %912 = vmatpush2.bf16.msra.mxu0 0
        %913 = vmatprep.subr.bf16.mxu0 0
        %914 = vmatpush2.bf16.msra.mxu0 0
        %915 = vmatprep.subr.bf16.mxu0 0
        %916 = vmatpush2.bf16.msra.mxu0 0
        %917 = vmatprep.subr.bf16.mxu0 0
        %918 = vmatpush2.bf16.msra.mxu0 0
        %919 = vmatprep.subr.bf16.mxu0 0
        %920 = vmatpush2.bf16.msra.mxu0 0
        %921 = vmatprep.subr.bf16.mxu0 0
        %922 = vmatpush2.bf16.msra.mxu0 0
        %923 = vmatprep.mubr.bf16.mxu0 0
        %924 = vmatmul.mubr.bf16.gmra.mxu0 %v886
        %v925 = vpop.f32.mrf.mxu0
        %v926 = vadd.f32 0.0, %v925
        %v927 = vpop.f32.mrf.mxu0
        %v928 = vpop.f32.mrf.mxu0
        %v929 = vpop.f32.mrf.mxu0
        %930 = vdwg.mxu0
        %v931 = vmul.f32 %v926, %v881
        %v932 = vpack.c.bf16 %v931, %v931
        %v934 = vsel %vm662, %v932, 0
        %v937 = vsel %vm727, %v648, 0
        %939 = vmatprep.subr.bf16.mxu0 0
        %940 = vmatpush1.bf16.msra.mxu0 0
        %941 = vmatprep.subr.bf16.mxu0 0
        %942 = vmatpush1.bf16.msra.mxu0 0
        %943 = vmatprep.subr.bf16.mxu0 0
        %944 = vmatpush1.bf16.msra.mxu0 0
        %945 = vmatprep.subr.bf16.mxu0 0
        %946 = vmatpush1.bf16.msra.mxu0 0
        %947 = vmatprep.subr.bf16.mxu0 0
        %948 = vmatpush1.bf16.msra.mxu0 0
        %949 = vmatprep.subr.bf16.mxu0 0
        %950 = vmatpush1.bf16.msra.mxu0 0
        %951 = vmatprep.subr.bf16.mxu0 0
        %952 = vmatpush1.bf16.msra.mxu0 0
        %953 = vmatprep.subr.bf16.mxu0 0
        %954 = vmatpush1.bf16.msra.mxu0 %v937
        %955 = vmatprep.subr.bf16.mxu0 0
        %956 = vmatpush2.bf16.msra.mxu0 0
        %957 = vmatprep.subr.bf16.mxu0 0
        %958 = vmatpush2.bf16.msra.mxu0 0
        %959 = vmatprep.subr.bf16.mxu0 0
        %960 = vmatpush2.bf16.msra.mxu0 0
        %961 = vmatprep.subr.bf16.mxu0 0
        %962 = vmatpush2.bf16.msra.mxu0 0
        %963 = vmatprep.subr.bf16.mxu0 0
        %964 = vmatpush2.bf16.msra.mxu0 0
        %965 = vmatprep.subr.bf16.mxu0 0
        %966 = vmatpush2.bf16.msra.mxu0 0
        %967 = vmatprep.subr.bf16.mxu0 0
        %968 = vmatpush2.bf16.msra.mxu0 0
        %969 = vmatprep.subr.bf16.mxu0 0
        %970 = vmatpush2.bf16.msra.mxu0 0
        %971 = vmatprep.mubr.bf16.mxu0 0
        %972 = vmatmul.mubr.bf16.gmra.mxu0 %v934
        %v973 = vpop.f32.mrf.mxu0
        %v974 = vadd.f32 0.0, %v973
        %v975 = vpop.f32.mrf.mxu0
        %v976 = vpop.f32.mrf.mxu0
        %v977 = vpop.f32.mrf.mxu0
        %978 = vdwg.mxu0
        %v979 = vadd.f32 %v819, %v974
        %980 = vrot.lane.b32.xlu0 %v646, 112
        %v981 = vpop.permute.xlu0 %980
        %982 = vrot.lane.b32.xlu0 %v646, 80
        %v983 = vpop.permute.xlu0 %982
        %v985 = vsel %vm662, %v981, 0
        %v988 = vsel %vm662, %v983, 0
        %990 = vmatprep.subr.bf16.mxu0 0
        %991 = vmatpush1.bf16.xpose.msra.mxu0 0
        %992 = vmatprep.subr.bf16.mxu0 0
        %993 = vmatpush1.bf16.xpose.msra.mxu0 0
        %994 = vmatprep.subr.bf16.mxu0 0
        %995 = vmatpush1.bf16.xpose.msra.mxu0 0
        %996 = vmatprep.subr.bf16.mxu0 0
        %997 = vmatpush1.bf16.xpose.msra.mxu0 0
        %998 = vmatprep.subr.bf16.mxu0 0
        %999 = vmatpush1.bf16.xpose.msra.mxu0 0
        %1000 = vmatprep.subr.bf16.mxu0 0
        %1001 = vmatpush1.bf16.xpose.msra.mxu0 0
        %1002 = vmatprep.subr.bf16.mxu0 0
        %1003 = vmatpush1.bf16.xpose.msra.mxu0 0
        %1004 = vmatprep.subr.bf16.mxu0 0
        %1005 = vmatpush1.bf16.xpose.msra.mxu0 %v988
        %1006 = vmatprep.subr.bf16.mxu0 0
        %1007 = vmatpush2.bf16.xpose.msra.mxu0 0
        %1008 = vmatprep.subr.bf16.mxu0 0
        %1009 = vmatpush2.bf16.xpose.msra.mxu0 0
        %1010 = vmatprep.subr.bf16.mxu0 0
        %1011 = vmatpush2.bf16.xpose.msra.mxu0 0
        %1012 = vmatprep.subr.bf16.mxu0 0
        %1013 = vmatpush2.bf16.xpose.msra.mxu0 0
        %1014 = vmatprep.subr.bf16.mxu0 0
        %1015 = vmatpush2.bf16.xpose.msra.mxu0 0
        %1016 = vmatprep.subr.bf16.mxu0 0
        %1017 = vmatpush2.bf16.xpose.msra.mxu0 0
        %1018 = vmatprep.subr.bf16.mxu0 0
        %1019 = vmatpush2.bf16.xpose.msra.mxu0 0
        %1020 = vmatprep.subr.bf16.mxu0 0
        %1021 = vmatpush2.bf16.xpose.msra.mxu0 0
        %1022 = vmatprep.mubr.bf16.mxu0 0
        %1023 = vmatmul.mubr.bf16.gmra.mxu0 %v985
        %v1024 = vpop.f32.mrf.mxu0
        %v1025 = vadd.f32 0.0, %v1024
        %v1026 = vpop.f32.mrf.mxu0
        %v1027 = vpop.f32.mrf.mxu0
        %v1028 = vpop.f32.mrf.mxu0
        %1029 = vdwg.mxu0
        %v1030 = vmul.f32 %v1025, 0.35355338
        %v1031 = vadd.f32 %v1030, %v547
        %v1032 = vsel %vm662, %v1031, -inf
        %1033 = vmax.xlane.f32.xlu0 %v1032
        %v1034 = vpop.xlane.xlu0 %1033
        %v1035 = vsub.f32 %v1031, %v1034
        %v1036 = vmul.f32 %v1035, 1.442695
        %v1037 = vpow.pop %v1036
        %v1038 = vsel %vm662, %v1037, 0.0
        %1039 = vadd.xlane.f32.xlu0 %v1038
        %v1040 = vpop.xlane.xlu0 %1039
        %v1041 = vrcp.pop %v1040
        %v1042 = vpack.c.bf16 %v1037, %v1037
        %1043 = vrot.lane.b32.xlu0 %v646, 48
        %v1044 = vpop.permute.xlu0 %1043
        %v1046 = vsel %vm662, %v1042, 0
        %v1049 = vsel %vm727, %v1044, 0
        %1051 = vmatprep.subr.bf16.mxu0 0
        %1052 = vmatpush1.bf16.msra.mxu0 0
        %1053 = vmatprep.subr.bf16.mxu0 0
        %1054 = vmatpush1.bf16.msra.mxu0 0
        %1055 = vmatprep.subr.bf16.mxu0 0
        %1056 = vmatpush1.bf16.msra.mxu0 0
        %1057 = vmatprep.subr.bf16.mxu0 0
        %1058 = vmatpush1.bf16.msra.mxu0 0
        %1059 = vmatprep.subr.bf16.mxu0 0
        %1060 = vmatpush1.bf16.msra.mxu0 0
        %1061 = vmatprep.subr.bf16.mxu0 0
        %1062 = vmatpush1.bf16.msra.mxu0 0
        %1063 = vmatprep.subr.bf16.mxu0 0
        %1064 = vmatpush1.bf16.msra.mxu0 0
        %1065 = vmatprep.subr.bf16.mxu0 0
        %1066 = vmatpush1.bf16.msra.mxu0 %v1049
        %1067 = vmatprep.subr.bf16.mxu0 0
        %1068 = vmatpush2.bf16.msra.mxu0 0
        %1069 = vmatprep.subr.bf16.mxu0 0
        %1070 = vmatpush2.bf16.msra.mxu0 0
        %1071 = vmatprep.subr.bf16.mxu0 0
        %1072 = vmatpush2.bf16.msra.mxu0 0
        %1073 = vmatprep.subr.bf16.mxu0 0
        %1074 = vmatpush2.bf16.msra.mxu0 0
        %1075 = vmatprep.subr.bf16.mxu0 0
        %1076 = vmatpush2.bf16.msra.mxu0 0
        %1077 = vmatprep.subr.bf16.mxu0 0
        %1078 = vmatpush2.bf16.msra.mxu0 0
        %1079 = vmatprep.subr.bf16.mxu0 0
        %1080 = vmatpush2.bf16.msra.mxu0 0
        %1081 = vmatprep.subr.bf16.mxu0 0
        %1082 = vmatpush2.bf16.msra.mxu0 0
        %1083 = vmatprep.mubr.bf16.mxu0 0
        %1084 = vmatmul.mubr.bf16.gmra.mxu0 %v1046
        %v1085 = vpop.f32.mrf.mxu0
        %v1086 = vadd.f32 0.0, %v1085
        %v1087 = vpop.f32.mrf.mxu0
        %v1088 = vpop.f32.mrf.mxu0
        %v1089 = vpop.f32.mrf.mxu0
        %1090 = vdwg.mxu0
        %v1091 = vmul.f32 %v1086, %v1041
        %v1092 = vpack.c.bf16 %v1091, %v1091
        %v1094 = vsel %vm662, %v1092, 0
        %v1097 = vsel %vm727, %v649, 0
        %1099 = vmatprep.subr.bf16.mxu0 0
        %1100 = vmatpush1.bf16.msra.mxu0 0
        %1101 = vmatprep.subr.bf16.mxu0 0
        %1102 = vmatpush1.bf16.msra.mxu0 0
        %1103 = vmatprep.subr.bf16.mxu0 0
        %1104 = vmatpush1.bf16.msra.mxu0 0
        %1105 = vmatprep.subr.bf16.mxu0 0
        %1106 = vmatpush1.bf16.msra.mxu0 0
        %1107 = vmatprep.subr.bf16.mxu0 0
        %1108 = vmatpush1.bf16.msra.mxu0 0
        %1109 = vmatprep.subr.bf16.mxu0 0
        %1110 = vmatpush1.bf16.msra.mxu0 0
        %1111 = vmatprep.subr.bf16.mxu0 0
        %1112 = vmatpush1.bf16.msra.mxu0 0
        %1113 = vmatprep.subr.bf16.mxu0 0
        %1114 = vmatpush1.bf16.msra.mxu0 %v1097
        %1115 = vmatprep.subr.bf16.mxu0 0
        %1116 = vmatpush2.bf16.msra.mxu0 0
        %1117 = vmatprep.subr.bf16.mxu0 0
        %1118 = vmatpush2.bf16.msra.mxu0 0
        %1119 = vmatprep.subr.bf16.mxu0 0
        %1120 = vmatpush2.bf16.msra.mxu0 0
        %1121 = vmatprep.subr.bf16.mxu0 0
        %1122 = vmatpush2.bf16.msra.mxu0 0
        %1123 = vmatprep.subr.bf16.mxu0 0
        %1124 = vmatpush2.bf16.msra.mxu0 0
        %1125 = vmatprep.subr.bf16.mxu0 0
        %1126 = vmatpush2.bf16.msra.mxu0 0
        %1127 = vmatprep.subr.bf16.mxu0 0
        %1128 = vmatpush2.bf16.msra.mxu0 0
        %1129 = vmatprep.subr.bf16.mxu0 0
        %1130 = vmatpush2.bf16.msra.mxu0 0
        %1131 = vmatprep.mubr.bf16.mxu0 0
        %1132 = vmatmul.mubr.bf16.gmra.mxu0 %v1094
        %v1133 = vpop.f32.mrf.mxu0
        %v1134 = vadd.f32 0.0, %v1133
        %v1135 = vpop.f32.mrf.mxu0
        %v1136 = vpop.f32.mrf.mxu0
        %v1137 = vpop.f32.mrf.mxu0
        %1138 = vdwg.mxu0
        %v1139 = vadd.f32 %v979, %v1134
        %1140 = vrot.lane.b32.xlu0 %v646, 104
        %v1141 = vpop.permute.xlu0 %1140
        %1142 = vrot.lane.b32.xlu0 %v646, 72
        %v1143 = vpop.permute.xlu0 %1142
        %v1145 = vsel %vm662, %v1141, 0
        %v1148 = vsel %vm662, %v1143, 0
        %1150 = vmatprep.subr.bf16.mxu0 0
        %1151 = vmatpush1.bf16.xpose.msra.mxu0 0
        %1152 = vmatprep.subr.bf16.mxu0 0
        %1153 = vmatpush1.bf16.xpose.msra.mxu0 0
        %1154 = vmatprep.subr.bf16.mxu0 0
        %1155 = vmatpush1.bf16.xpose.msra.mxu0 0
        %1156 = vmatprep.subr.bf16.mxu0 0
        %1157 = vmatpush1.bf16.xpose.msra.mxu0 0
        %1158 = vmatprep.subr.bf16.mxu0 0
        %1159 = vmatpush1.bf16.xpose.msra.mxu0 0
        %1160 = vmatprep.subr.bf16.mxu0 0
        %1161 = vmatpush1.bf16.xpose.msra.mxu0 0
        %1162 = vmatprep.subr.bf16.mxu0 0
        %1163 = vmatpush1.bf16.xpose.msra.mxu0 0
        %1164 = vmatprep.subr.bf16.mxu0 0
        %1165 = vmatpush1.bf16.xpose.msra.mxu0 %v1148
        %1166 = vmatprep.subr.bf16.mxu0 0
        %1167 = vmatpush2.bf16.xpose.msra.mxu0 0
        %1168 = vmatprep.subr.bf16.mxu0 0
        %1169 = vmatpush2.bf16.xpose.msra.mxu0 0
        %1170 = vmatprep.subr.bf16.mxu0 0
        %1171 = vmatpush2.bf16.xpose.msra.mxu0 0
        %1172 = vmatprep.subr.bf16.mxu0 0
        %1173 = vmatpush2.bf16.xpose.msra.mxu0 0
        %1174 = vmatprep.subr.bf16.mxu0 0
        %1175 = vmatpush2.bf16.xpose.msra.mxu0 0
        %1176 = vmatprep.subr.bf16.mxu0 0
        %1177 = vmatpush2.bf16.xpose.msra.mxu0 0
        %1178 = vmatprep.subr.bf16.mxu0 0
        %1179 = vmatpush2.bf16.xpose.msra.mxu0 0
        %1180 = vmatprep.subr.bf16.mxu0 0
        %1181 = vmatpush2.bf16.xpose.msra.mxu0 0
        %1182 = vmatprep.mubr.bf16.mxu0 0
        %1183 = vmatmul.mubr.bf16.gmra.mxu0 %v1145
        %v1184 = vpop.f32.mrf.mxu0
        %v1185 = vadd.f32 0.0, %v1184
        %v1186 = vpop.f32.mrf.mxu0
        %v1187 = vpop.f32.mrf.mxu0
        %v1188 = vpop.f32.mrf.mxu0
        %1189 = vdwg.mxu0
        %v1190 = vmul.f32 %v1185, 0.35355338
        %v1191 = vadd.f32 %v1190, %v547
        %v1192 = vsel %vm662, %v1191, -inf
        %1193 = vmax.xlane.f32.xlu0 %v1192
        %v1194 = vpop.xlane.xlu0 %1193
        %v1195 = vsub.f32 %v1191, %v1194
        %v1196 = vmul.f32 %v1195, 1.442695
        %v1197 = vpow.pop %v1196
        %v1198 = vsel %vm662, %v1197, 0.0
        %1199 = vadd.xlane.f32.xlu0 %v1198
        %v1200 = vpop.xlane.xlu0 %1199
        %v1201 = vrcp.pop %v1200
        %v1202 = vpack.c.bf16 %v1197, %v1197
        %1203 = vrot.lane.b32.xlu0 %v646, 40
        %v1204 = vpop.permute.xlu0 %1203
        %v1206 = vsel %vm662, %v1202, 0
        %v1209 = vsel %vm727, %v1204, 0
        %1211 = vmatprep.subr.bf16.mxu0 0
        %1212 = vmatpush1.bf16.msra.mxu0 0
        %1213 = vmatprep.subr.bf16.mxu0 0
        %1214 = vmatpush1.bf16.msra.mxu0 0
        %1215 = vmatprep.subr.bf16.mxu0 0
        %1216 = vmatpush1.bf16.msra.mxu0 0
        %1217 = vmatprep.subr.bf16.mxu0 0
        %1218 = vmatpush1.bf16.msra.mxu0 0
        %1219 = vmatprep.subr.bf16.mxu0 0
        %1220 = vmatpush1.bf16.msra.mxu0 0
        %1221 = vmatprep.subr.bf16.mxu0 0
        %1222 = vmatpush1.bf16.msra.mxu0 0
        %1223 = vmatprep.subr.bf16.mxu0 0
        %1224 = vmatpush1.bf16.msra.mxu0 0
        %1225 = vmatprep.subr.bf16.mxu0 0
        %1226 = vmatpush1.bf16.msra.mxu0 %v1209
        %1227 = vmatprep.subr.bf16.mxu0 0
        %1228 = vmatpush2.bf16.msra.mxu0 0
        %1229 = vmatprep.subr.bf16.mxu0 0
        %1230 = vmatpush2.bf16.msra.mxu0 0
        %1231 = vmatprep.subr.bf16.mxu0 0
        %1232 = vmatpush2.bf16.msra.mxu0 0
        %1233 = vmatprep.subr.bf16.mxu0 0
        %1234 = vmatpush2.bf16.msra.mxu0 0
        %1235 = vmatprep.subr.bf16.mxu0 0
        %1236 = vmatpush2.bf16.msra.mxu0 0
        %1237 = vmatprep.subr.bf16.mxu0 0
        %1238 = vmatpush2.bf16.msra.mxu0 0
        %1239 = vmatprep.subr.bf16.mxu0 0
        %1240 = vmatpush2.bf16.msra.mxu0 0
        %1241 = vmatprep.subr.bf16.mxu0 0
        %1242 = vmatpush2.bf16.msra.mxu0 0
        %1243 = vmatprep.mubr.bf16.mxu0 0
        %1244 = vmatmul.mubr.bf16.gmra.mxu0 %v1206
        %v1245 = vpop.f32.mrf.mxu0
        %v1246 = vadd.f32 0.0, %v1245
        %v1247 = vpop.f32.mrf.mxu0
        %v1248 = vpop.f32.mrf.mxu0
        %v1249 = vpop.f32.mrf.mxu0
        %1250 = vdwg.mxu0
        %v1251 = vmul.f32 %v1246, %v1201
        %v1252 = vpack.c.bf16 %v1251, %v1251
        %v1254 = vsel %vm662, %v1252, 0
        %v1257 = vsel %vm727, %v650, 0
        %1259 = vmatprep.subr.bf16.mxu0 0
        %1260 = vmatpush1.bf16.msra.mxu0 0
        %1261 = vmatprep.subr.bf16.mxu0 0
        %1262 = vmatpush1.bf16.msra.mxu0 0
        %1263 = vmatprep.subr.bf16.mxu0 0
        %1264 = vmatpush1.bf16.msra.mxu0 0
        %1265 = vmatprep.subr.bf16.mxu0 0
        %1266 = vmatpush1.bf16.msra.mxu0 0
        %1267 = vmatprep.subr.bf16.mxu0 0
        %1268 = vmatpush1.bf16.msra.mxu0 0
        %1269 = vmatprep.subr.bf16.mxu0 0
        %1270 = vmatpush1.bf16.msra.mxu0 0
        %1271 = vmatprep.subr.bf16.mxu0 0
        %1272 = vmatpush1.bf16.msra.mxu0 0
        %1273 = vmatprep.subr.bf16.mxu0 0
        %1274 = vmatpush1.bf16.msra.mxu0 %v1257
        %1275 = vmatprep.subr.bf16.mxu0 0
        %1276 = vmatpush2.bf16.msra.mxu0 0
        %1277 = vmatprep.subr.bf16.mxu0 0
        %1278 = vmatpush2.bf16.msra.mxu0 0
        %1279 = vmatprep.subr.bf16.mxu0 0
        %1280 = vmatpush2.bf16.msra.mxu0 0
        %1281 = vmatprep.subr.bf16.mxu0 0
        %1282 = vmatpush2.bf16.msra.mxu0 0
        %1283 = vmatprep.subr.bf16.mxu0 0
        %1284 = vmatpush2.bf16.msra.mxu0 0
        %1285 = vmatprep.subr.bf16.mxu0 0
        %1286 = vmatpush2.bf16.msra.mxu0 0
        %1287 = vmatprep.subr.bf16.mxu0 0
        %1288 = vmatpush2.bf16.msra.mxu0 0
        %1289 = vmatprep.subr.bf16.mxu0 0
        %1290 = vmatpush2.bf16.msra.mxu0 0
        %1291 = vmatprep.mubr.bf16.mxu0 0
        %1292 = vmatmul.mubr.bf16.gmra.mxu0 %v1254
        %v1293 = vpop.f32.mrf.mxu0
        %v1294 = vadd.f32 0.0, %v1293
        %v1295 = vpop.f32.mrf.mxu0
        %v1296 = vpop.f32.mrf.mxu0
        %v1297 = vpop.f32.mrf.mxu0
        %1298 = vdwg.mxu0
        %v1299 = vadd.f32 %v1139, %v1294
        %v1300 = vld [vmem:[%s8] sm:$0x1]
        %v1301 = vld [vmem:[%s9] sm:$0x1]
        %v1302 = vsel %vm550, %v1299, 0.0
        %1303 = vadd.xlane.f32.xlu0 %v1302
        %v1304 = vpop.xlane.xlu0 %1303
        %v1305 = vmul.f32 %v1304, %v554
        %v1306 = vsub.f32 %v1299, %v1305
        %v1307 = vmul.f32 %v1306, %v1306
        %v1308 = vsel %vm550, %v1307, 0.0
        %1309 = vadd.xlane.f32.xlu0 %v1308
        %v1310 = vpop.xlane.xlu0 %1309
        %v1311 = vmul.f32 %v1310, %v554
        %v1312 = vadd.f32 %v1311, 1e-05
        %v1313 = vrsqrt.pop %v1312
        %v1314 = vmul.f32 %v1306, %v1313
        %v1316 = vlaneseq
        %v1317 = vshrl.u32 %v1316, 7
        %v1318 = vsub.s32 0, %v1317
        %v1319 = vrot.slane %v1300, %v1318
        %v1321 = vmul.f32 %v1314, %v1319
        %v1323 = vlaneseq
        %v1324 = vshrl.u32 %v1323, 7
        %v1325 = vsub.s32 0, %v1324
        %v1326 = vrot.slane %v1301, %v1325
        %v1328 = vadd.f32 %v1321, %v1326
        %v1329 = vpack.c.bf16 %v1328, %v1328
        %v1330 = vld [vmem:[%s10] sm:$0xf]
        %v1331 = vld [vmem:[%s10 + $0x4] sm:$0xf]
        %v1332 = vld [vmem:[%s10 + $0x8] sm:$0xf]
        %v1333 = vld [vmem:[%s10 + $0xc] sm:$0xf]
        %v1334 = vld [vmem:[%s11] sm:$0x1]
        %v1336 = vlaneseq
        %v1337 = vshrl.u32 %v1336, 7
        %v1338 = vsub.s32 0, %v1337
        %v1339 = vrot.slane %v1334, %v1338
        %v1345 = vunpack.c.l.b16 %v1330
        %v1346 = vunpack.c.l.b16 %v1331
        %v1347 = vunpack.c.l.b16 %v1332
        %v1348 = vunpack.c.l.b16 %v1333
        %v1349 = vpack.c.b16 %v1346, %v1345
        %v1350 = vpack.c.b16 %v1348, %v1347
        %v1354 = vsel %vm550, %v1329, 0
        %1356 = vmatprep.subr.bf16.mxu0 0
        %1357 = vmatpush1.bf16.msra.mxu0 0
        %1358 = vmatprep.subr.bf16.mxu0 0
        %1359 = vmatpush1.bf16.msra.mxu0 0
        %1360 = vmatprep.subr.bf16.mxu0 0
        %1361 = vmatpush1.bf16.msra.mxu0 0
        %1362 = vmatprep.subr.bf16.mxu0 0
        %1363 = vmatpush1.bf16.msra.mxu0 0
        %1364 = vmatprep.subr.bf16.mxu0 0
        %1365 = vmatpush1.bf16.msra.mxu0 0
        %1366 = vmatprep.subr.bf16.mxu0 0
        %1367 = vmatpush1.bf16.msra.mxu0 0
        %1368 = vmatprep.subr.bf16.mxu0 0
        %1369 = vmatpush1.bf16.msra.mxu0 %v1350
        %1370 = vmatprep.subr.bf16.mxu0 0
        %1371 = vmatpush1.bf16.msra.mxu0 %v1349
        %1372 = vmatprep.subr.bf16.mxu0 0
        %1373 = vmatpush2.bf16.msra.mxu0 0
        %1374 = vmatprep.subr.bf16.mxu0 0
        %1375 = vmatpush2.bf16.msra.mxu0 0
        %1376 = vmatprep.subr.bf16.mxu0 0
        %1377 = vmatpush2.bf16.msra.mxu0 0
        %1378 = vmatprep.subr.bf16.mxu0 0
        %1379 = vmatpush2.bf16.msra.mxu0 0
        %1380 = vmatprep.subr.bf16.mxu0 0
        %1381 = vmatpush2.bf16.msra.mxu0 0
        %1382 = vmatprep.subr.bf16.mxu0 0
        %1383 = vmatpush2.bf16.msra.mxu0 0
        %1384 = vmatprep.subr.bf16.mxu0 0
        %1385 = vmatpush2.bf16.msra.mxu0 0
        %1386 = vmatprep.subr.bf16.mxu0 0
        %1387 = vmatpush2.bf16.msra.mxu0 0
        %1388 = vmatprep.mubr.bf16.mxu0 0
        %1389 = vmatmul.mubr.bf16.gmra.mxu0 %v1354
        %v1390 = vpop.f32.mrf.mxu0
        %v1391 = vadd.f32 %v1339, %v1390
        %v1392 = vpop.f32.mrf.mxu0
        %v1393 = vpop.f32.mrf.mxu0
        %v1394 = vpop.f32.mrf.mxu0
        %1395 = vdwg.mxu0
        %v1396 = vmax.f32 %v1391, 0.0
        %v1397 = vpack.c.bf16 %v1396, %v1396
        %v1398 = vld [vmem:[%s12] sm:$0xf]
        %v1399 = vld [vmem:[%s12 + $0x4] sm:$0xf]
        %v1400 = vld [vmem:[%s12 + $0x8] sm:$0xf]
        %v1401 = vld [vmem:[%s12 + $0xc] sm:$0xf]
        %v1402 = vld [vmem:[%s12 + $0x10] sm:$0xf]
        %v1403 = vld [vmem:[%s12 + $0x14] sm:$0xf]
        %v1404 = vld [vmem:[%s12 + $0x18] sm:$0xf]
        %v1405 = vld [vmem:[%s12 + $0x1c] sm:$0xf]
        %v1414 = vunpack.c.l.b16 %v1398
        %v1415 = vunpack.c.l.b16 %v1399
        %v1416 = vunpack.c.l.b16 %v1400
        %v1417 = vunpack.c.l.b16 %v1401
        %v1418 = vunpack.c.l.b16 %v1402
        %v1419 = vunpack.c.l.b16 %v1403
        %v1420 = vunpack.c.l.b16 %v1404
        %v1421 = vunpack.c.l.b16 %v1405
        %v1422 = vpack.c.b16 %v1415, %v1414
        %v1423 = vpack.c.b16 %v1417, %v1416
        %v1424 = vpack.c.b16 %v1419, %v1418
        %v1425 = vpack.c.b16 %v1421, %v1420
        %vm1430 = vcmask 523264
        %v1432 = vsel %vm1430, %v1397, 0
        %1434 = vmatprep.subr.bf16.mxu0 0
        %1435 = vmatpush1.bf16.msra.mxu0 0
        %1436 = vmatprep.subr.bf16.mxu0 0
        %1437 = vmatpush1.bf16.msra.mxu0 0
        %1438 = vmatprep.subr.bf16.mxu0 0
        %1439 = vmatpush1.bf16.msra.mxu0 0
        %1440 = vmatprep.subr.bf16.mxu0 0
        %1441 = vmatpush1.bf16.msra.mxu0 0
        %1442 = vmatprep.subr.bf16.mxu0 0
        %1443 = vmatpush1.bf16.msra.mxu0 %v1425
        %1444 = vmatprep.subr.bf16.mxu0 0
        %1445 = vmatpush1.bf16.msra.mxu0 %v1424
        %1446 = vmatprep.subr.bf16.mxu0 0
        %1447 = vmatpush1.bf16.msra.mxu0 %v1423
        %1448 = vmatprep.subr.bf16.mxu0 0
        %1449 = vmatpush1.bf16.msra.mxu0 %v1422
        %1450 = vmatprep.subr.bf16.mxu0 0
        %1451 = vmatpush2.bf16.msra.mxu0 0
        %1452 = vmatprep.subr.bf16.mxu0 0
        %1453 = vmatpush2.bf16.msra.mxu0 0
        %1454 = vmatprep.subr.bf16.mxu0 0
        %1455 = vmatpush2.bf16.msra.mxu0 0
        %1456 = vmatprep.subr.bf16.mxu0 0
        %1457 = vmatpush2.bf16.msra.mxu0 0
        %1458 = vmatprep.subr.bf16.mxu0 0
        %1459 = vmatpush2.bf16.msra.mxu0 0
        %1460 = vmatprep.subr.bf16.mxu0 0
        %1461 = vmatpush2.bf16.msra.mxu0 0
        %1462 = vmatprep.subr.bf16.mxu0 0
        %1463 = vmatpush2.bf16.msra.mxu0 0
        %1464 = vmatprep.subr.bf16.mxu0 0
        %1465 = vmatpush2.bf16.msra.mxu0 0
        %1466 = vmatprep.mubr.bf16.mxu0 0
        %1467 = vmatmul.mubr.bf16.gmra.mxu0 %v1432
        %v1468 = vpop.f32.mrf.mxu0
        %v1469 = vadd.f32 0.0, %v1468
        %v1470 = vpop.f32.mrf.mxu0
        %v1471 = vpop.f32.mrf.mxu0
        %v1472 = vpop.f32.mrf.mxu0
        %1473 = vdwg.mxu0
        %v1474 = vadd.f32 %v1299, %v1469
        %v1475 = vld [vmem:[%s13] sm:$0x1]
        %v1477 = vlaneseq
        %v1478 = vshrl.u32 %v1477, 7
        %v1479 = vsub.s32 0, %v1478
        %v1480 = vrot.slane %v1475, %v1479
        %v1482 = vadd.f32 %v1474, %v1480
        %s1483 = scalar_lea.vmem %s2, 1
        %v1484 = vld [vmem:[%s1483] sm:$0x1]
        %s1485 = scalar_lea.vmem %s3, 1
        %v1486 = vld [vmem:[%s1485] sm:$0x1]
        %v1487 = vsel %vm550, %v1482, 0.0
        %1488 = vadd.xlane.f32.xlu0 %v1487
        %v1489 = vpop.xlane.xlu0 %1488
        %v1490 = vmul.f32 %v1489, %v554
        %v1491 = vsub.f32 %v1482, %v1490
        %v1492 = vmul.f32 %v1491, %v1491
        %v1493 = vsel %vm550, %v1492, 0.0
        %1494 = vadd.xlane.f32.xlu0 %v1493
        %v1495 = vpop.xlane.xlu0 %1494
        %v1496 = vmul.f32 %v1495, %v554
        %v1497 = vadd.f32 %v1496, 1e-05
        %v1498 = vrsqrt.pop %v1497
        %v1499 = vmul.f32 %v1491, %v1498
        %v1501 = vlaneseq
        %v1502 = vshrl.u32 %v1501, 7
        %v1503 = vsub.s32 0, %v1502
        %v1504 = vrot.slane %v1484, %v1503
        %v1506 = vmul.f32 %v1499, %v1504
        %v1508 = vlaneseq
        %v1509 = vshrl.u32 %v1508, 7
        %v1510 = vsub.s32 0, %v1509
        %v1511 = vrot.slane %v1486, %v1510
        %v1513 = vadd.f32 %v1506, %v1511
        %v1514 = vpack.c.bf16 %v1513, %v1513
        %s1515 = scalar_lea.vmem %s4, 16
        %v1516 = vld [vmem:[%s1515] sm:$0xf]
        %v1517 = vld [vmem:[%s1515 + $0x4] sm:$0xf]
        %v1518 = vld [vmem:[%s1515 + $0x8] sm:$0xf]
        %v1519 = vld [vmem:[%s1515 + $0xc] sm:$0xf]
        %s1520 = scalar_lea.vmem %s5, 1
        %v1521 = vld [vmem:[%s1520] sm:$0x1]
        %v1523 = vlaneseq
        %v1524 = vshrl.u32 %v1523, 7
        %v1525 = vsub.s32 0, %v1524
        %v1526 = vrot.slane %v1521, %v1525
        %v1532 = vunpack.c.l.b16 %v1516
        %v1533 = vunpack.c.l.b16 %v1517
        %v1534 = vunpack.c.l.b16 %v1518
        %v1535 = vunpack.c.l.b16 %v1519
        %v1536 = vpack.c.b16 %v1533, %v1532
        %v1537 = vpack.c.b16 %v1535, %v1534
        %v1541 = vsel %vm550, %v1514, 0
        %1543 = vmatprep.subr.bf16.mxu0 0
        %1544 = vmatpush1.bf16.msra.mxu0 0
        %1545 = vmatprep.subr.bf16.mxu0 0
        %1546 = vmatpush1.bf16.msra.mxu0 0
        %1547 = vmatprep.subr.bf16.mxu0 0
        %1548 = vmatpush1.bf16.msra.mxu0 0
        %1549 = vmatprep.subr.bf16.mxu0 0
        %1550 = vmatpush1.bf16.msra.mxu0 0
        %1551 = vmatprep.subr.bf16.mxu0 0
        %1552 = vmatpush1.bf16.msra.mxu0 0
        %1553 = vmatprep.subr.bf16.mxu0 0
        %1554 = vmatpush1.bf16.msra.mxu0 0
        %1555 = vmatprep.subr.bf16.mxu0 0
        %1556 = vmatpush1.bf16.msra.mxu0 %v1537
        %1557 = vmatprep.subr.bf16.mxu0 0
        %1558 = vmatpush1.bf16.msra.mxu0 %v1536
        %1559 = vmatprep.subr.bf16.mxu0 0
        %1560 = vmatpush2.bf16.msra.mxu0 0
        %1561 = vmatprep.subr.bf16.mxu0 0
        %1562 = vmatpush2.bf16.msra.mxu0 0
        %1563 = vmatprep.subr.bf16.mxu0 0
        %1564 = vmatpush2.bf16.msra.mxu0 0
        %1565 = vmatprep.subr.bf16.mxu0 0
        %1566 = vmatpush2.bf16.msra.mxu0 0
        %1567 = vmatprep.subr.bf16.mxu0 0
        %1568 = vmatpush2.bf16.msra.mxu0 0
        %1569 = vmatprep.subr.bf16.mxu0 0
        %1570 = vmatpush2.bf16.msra.mxu0 0
        %1571 = vmatprep.subr.bf16.mxu0 0
        %1572 = vmatpush2.bf16.msra.mxu0 0
        %1573 = vmatprep.subr.bf16.mxu0 0
        %1574 = vmatpush2.bf16.msra.mxu0 0
        %1575 = vmatprep.mubr.bf16.mxu0 0
        %1576 = vmatmul.mubr.bf16.gmra.mxu0 %v1541
        %v1577 = vpop.f32.mrf.mxu0
        %v1578 = vadd.f32 %v1526, %v1577
        %v1579 = vpop.f32.mrf.mxu0
        %v1580 = vpop.f32.mrf.mxu0
        %v1581 = vpop.f32.mrf.mxu0
        %1582 = vdwg.mxu0
        %v1583 = vpack.c.bf16 %v1578, %v1578
        %s1584 = scalar_lea.vmem %s6, 16
        %v1585 = vld [vmem:[%s1584] sm:$0xf]
        %v1586 = vld [vmem:[%s1584 + $0x4] sm:$0xf]
        %v1587 = vld [vmem:[%s1584 + $0x8] sm:$0xf]
        %v1588 = vld [vmem:[%s1584 + $0xc] sm:$0xf]
        %s1589 = scalar_lea.vmem %s7, 1
        %v1590 = vld [vmem:[%s1589] sm:$0x1]
        %v1592 = vlaneseq
        %v1593 = vshrl.u32 %v1592, 7
        %v1594 = vsub.s32 0, %v1593
        %v1595 = vrot.slane %v1590, %v1594
        %v1597 = vadd.f32 %v1482, %v1595
        %1599 = vrot.lane.b32.xlu0 %v1583, 96
        %v1600 = vpop.permute.xlu0 %1599
        %v1602 = vsel %vm662, %v1583, 0
        %v1605 = vsel %vm662, %v1600, 0
        %1607 = vmatprep.subr.bf16.mxu0 0
        %1608 = vmatpush1.bf16.xpose.msra.mxu0 0
        %1609 = vmatprep.subr.bf16.mxu0 0
        %1610 = vmatpush1.bf16.xpose.msra.mxu0 0
        %1611 = vmatprep.subr.bf16.mxu0 0
        %1612 = vmatpush1.bf16.xpose.msra.mxu0 0
        %1613 = vmatprep.subr.bf16.mxu0 0
        %1614 = vmatpush1.bf16.xpose.msra.mxu0 0
        %1615 = vmatprep.subr.bf16.mxu0 0
        %1616 = vmatpush1.bf16.xpose.msra.mxu0 0
        %1617 = vmatprep.subr.bf16.mxu0 0
        %1618 = vmatpush1.bf16.xpose.msra.mxu0 0
        %1619 = vmatprep.subr.bf16.mxu0 0
        %1620 = vmatpush1.bf16.xpose.msra.mxu0 0
        %1621 = vmatprep.subr.bf16.mxu0 0
        %1622 = vmatpush1.bf16.xpose.msra.mxu0 %v1605
        %1623 = vmatprep.subr.bf16.mxu0 0
        %1624 = vmatpush2.bf16.xpose.msra.mxu0 0
        %1625 = vmatprep.subr.bf16.mxu0 0
        %1626 = vmatpush2.bf16.xpose.msra.mxu0 0
        %1627 = vmatprep.subr.bf16.mxu0 0
        %1628 = vmatpush2.bf16.xpose.msra.mxu0 0
        %1629 = vmatprep.subr.bf16.mxu0 0
        %1630 = vmatpush2.bf16.xpose.msra.mxu0 0
        %1631 = vmatprep.subr.bf16.mxu0 0
        %1632 = vmatpush2.bf16.xpose.msra.mxu0 0
        %1633 = vmatprep.subr.bf16.mxu0 0
        %1634 = vmatpush2.bf16.xpose.msra.mxu0 0
        %1635 = vmatprep.subr.bf16.mxu0 0
        %1636 = vmatpush2.bf16.xpose.msra.mxu0 0
        %1637 = vmatprep.subr.bf16.mxu0 0
        %1638 = vmatpush2.bf16.xpose.msra.mxu0 0
        %1639 = vmatprep.mubr.bf16.mxu0 0
        %1640 = vmatmul.mubr.bf16.gmra.mxu0 %v1602
        %v1641 = vpop.f32.mrf.mxu0
        %v1642 = vadd.f32 0.0, %v1641
        %v1643 = vpop.f32.mrf.mxu0
        %v1644 = vpop.f32.mrf.mxu0
        %v1645 = vpop.f32.mrf.mxu0
        %1646 = vdwg.mxu0
        %v1647 = vmul.f32 %v1642, 0.35355338
        %v1648 = vadd.f32 %v1647, %v547
        %v1649 = vsel %vm662, %v1648, -inf
        %1650 = vmax.xlane.f32.xlu0 %v1649
        %v1651 = vpop.xlane.xlu0 %1650
        %v1652 = vsub.f32 %v1648, %v1651
        %v1653 = vmul.f32 %v1652, 1.442695
        %v1654 = vpow.pop %v1653
        %v1655 = vsel %vm662, %v1654, 0.0
        %1656 = vadd.xlane.f32.xlu0 %v1655
        %v1657 = vpop.xlane.xlu0 %1656
        %v1658 = vrcp.pop %v1657
        %v1659 = vpack.c.bf16 %v1654, %v1654
        %1660 = vrot.lane.b32.xlu0 %v1583, 64
        %v1661 = vpop.permute.xlu0 %1660
        %v1663 = vsel %vm662, %v1659, 0
        %v1666 = vsel %vm727, %v1661, 0
        %1668 = vmatprep.subr.bf16.mxu0 0
        %1669 = vmatpush1.bf16.msra.mxu0 0
        %1670 = vmatprep.subr.bf16.mxu0 0
        %1671 = vmatpush1.bf16.msra.mxu0 0
        %1672 = vmatprep.subr.bf16.mxu0 0
        %1673 = vmatpush1.bf16.msra.mxu0 0
        %1674 = vmatprep.subr.bf16.mxu0 0
        %1675 = vmatpush1.bf16.msra.mxu0 0
        %1676 = vmatprep.subr.bf16.mxu0 0
        %1677 = vmatpush1.bf16.msra.mxu0 0
        %1678 = vmatprep.subr.bf16.mxu0 0
        %1679 = vmatpush1.bf16.msra.mxu0 0
        %1680 = vmatprep.subr.bf16.mxu0 0
        %1681 = vmatpush1.bf16.msra.mxu0 0
        %1682 = vmatprep.subr.bf16.mxu0 0
        %1683 = vmatpush1.bf16.msra.mxu0 %v1666
        %1684 = vmatprep.subr.bf16.mxu0 0
        %1685 = vmatpush2.bf16.msra.mxu0 0
        %1686 = vmatprep.subr.bf16.mxu0 0
        %1687 = vmatpush2.bf16.msra.mxu0 0
        %1688 = vmatprep.subr.bf16.mxu0 0
        %1689 = vmatpush2.bf16.msra.mxu0 0
        %1690 = vmatprep.subr.bf16.mxu0 0
        %1691 = vmatpush2.bf16.msra.mxu0 0
        %1692 = vmatprep.subr.bf16.mxu0 0
        %1693 = vmatpush2.bf16.msra.mxu0 0
        %1694 = vmatprep.subr.bf16.mxu0 0
        %1695 = vmatpush2.bf16.msra.mxu0 0
        %1696 = vmatprep.subr.bf16.mxu0 0
        %1697 = vmatpush2.bf16.msra.mxu0 0
        %1698 = vmatprep.subr.bf16.mxu0 0
        %1699 = vmatpush2.bf16.msra.mxu0 0
        %1700 = vmatprep.mubr.bf16.mxu0 0
        %1701 = vmatmul.mubr.bf16.gmra.mxu0 %v1663
        %v1702 = vpop.f32.mrf.mxu0
        %v1703 = vadd.f32 0.0, %v1702
        %v1704 = vpop.f32.mrf.mxu0
        %v1705 = vpop.f32.mrf.mxu0
        %v1706 = vpop.f32.mrf.mxu0
        %1707 = vdwg.mxu0
        %v1708 = vmul.f32 %v1703, %v1658
        %v1709 = vpack.c.bf16 %v1708, %v1708
        %v1711 = vsel %vm662, %v1709, 0
        %v1714 = vsel %vm727, %v1585, 0
        %1716 = vmatprep.subr.bf16.mxu0 0
        %1717 = vmatpush1.bf16.msra.mxu0 0
        %1718 = vmatprep.subr.bf16.mxu0 0
        %1719 = vmatpush1.bf16.msra.mxu0 0
        %1720 = vmatprep.subr.bf16.mxu0 0
        %1721 = vmatpush1.bf16.msra.mxu0 0
        %1722 = vmatprep.subr.bf16.mxu0 0
        %1723 = vmatpush1.bf16.msra.mxu0 0
        %1724 = vmatprep.subr.bf16.mxu0 0
        %1725 = vmatpush1.bf16.msra.mxu0 0
        %1726 = vmatprep.subr.bf16.mxu0 0
        %1727 = vmatpush1.bf16.msra.mxu0 0
        %1728 = vmatprep.subr.bf16.mxu0 0
        %1729 = vmatpush1.bf16.msra.mxu0 0
        %1730 = vmatprep.subr.bf16.mxu0 0
        %1731 = vmatpush1.bf16.msra.mxu0 %v1714
        %1732 = vmatprep.subr.bf16.mxu0 0
        %1733 = vmatpush2.bf16.msra.mxu0 0
        %1734 = vmatprep.subr.bf16.mxu0 0
        %1735 = vmatpush2.bf16.msra.mxu0 0
        %1736 = vmatprep.subr.bf16.mxu0 0
        %1737 = vmatpush2.bf16.msra.mxu0 0
        %1738 = vmatprep.subr.bf16.mxu0 0
        %1739 = vmatpush2.bf16.msra.mxu0 0
        %1740 = vmatprep.subr.bf16.mxu0 0
        %1741 = vmatpush2.bf16.msra.mxu0 0
        %1742 = vmatprep.subr.bf16.mxu0 0
        %1743 = vmatpush2.bf16.msra.mxu0 0
        %1744 = vmatprep.subr.bf16.mxu0 0
        %1745 = vmatpush2.bf16.msra.mxu0 0
        %1746 = vmatprep.subr.bf16.mxu0 0
        %1747 = vmatpush2.bf16.msra.mxu0 0
        %1748 = vmatprep.mubr.bf16.mxu0 0
        %1749 = vmatmul.mubr.bf16.gmra.mxu0 %v1711
        %v1750 = vpop.f32.mrf.mxu0
        %v1751 = vadd.f32 0.0, %v1750
        %v1752 = vpop.f32.mrf.mxu0
        %v1753 = vpop.f32.mrf.mxu0
        %v1754 = vpop.f32.mrf.mxu0
        %1755 = vdwg.mxu0
        %v1756 = vadd.f32 %v1597, %v1751
        %1757 = vrot.lane.b32.xlu0 %v1583, 120
        %v1758 = vpop.permute.xlu0 %1757
        %1759 = vrot.lane.b32.xlu0 %v1583, 88
        %v1760 = vpop.permute.xlu0 %1759
        %v1762 = vsel %vm662, %v1758, 0
        %v1765 = vsel %vm662, %v1760, 0
        %1767 = vmatprep.subr.bf16.mxu0 0
        %1768 = vmatpush1.bf16.xpose.msra.mxu0 0
        %1769 = vmatprep.subr.bf16.mxu0 0
        %1770 = vmatpush1.bf16.xpose.msra.mxu0 0
        %1771 = vmatprep.subr.bf16.mxu0 0
        %1772 = vmatpush1.bf16.xpose.msra.mxu0 0
        %1773 = vmatprep.subr.bf16.mxu0 0
        %1774 = vmatpush1.bf16.xpose.msra.mxu0 0
        %1775 = vmatprep.subr.bf16.mxu0 0
        %1776 = vmatpush1.bf16.xpose.msra.mxu0 0
        %1777 = vmatprep.subr.bf16.mxu0 0
        %1778 = vmatpush1.bf16.xpose.msra.mxu0 0
        %1779 = vmatprep.subr.bf16.mxu0 0
        %1780 = vmatpush1.bf16.xpose.msra.mxu0 0
        %1781 = vmatprep.subr.bf16.mxu0 0
        %1782 = vmatpush1.bf16.xpose.msra.mxu0 %v1765
        %1783 = vmatprep.subr.bf16.mxu0 0
        %1784 = vmatpush2.bf16.xpose.msra.mxu0 0
        %1785 = vmatprep.subr.bf16.mxu0 0
        %1786 = vmatpush2.bf16.xpose.msra.mxu0 0
        %1787 = vmatprep.subr.bf16.mxu0 0
        %1788 = vmatpush2.bf16.xpose.msra.mxu0 0
        %1789 = vmatprep.subr.bf16.mxu0 0
        %1790 = vmatpush2.bf16.xpose.msra.mxu0 0
        %1791 = vmatprep.subr.bf16.mxu0 0
        %1792 = vmatpush2.bf16.xpose.msra.mxu0 0
        %1793 = vmatprep.subr.bf16.mxu0 0
        %1794 = vmatpush2.bf16.xpose.msra.mxu0 0
        %1795 = vmatprep.subr.bf16.mxu0 0
        %1796 = vmatpush2.bf16.xpose.msra.mxu0 0
        %1797 = vmatprep.subr.bf16.mxu0 0
        %1798 = vmatpush2.bf16.xpose.msra.mxu0 0
        %1799 = vmatprep.mubr.bf16.mxu0 0
        %1800 = vmatmul.mubr.bf16.gmra.mxu0 %v1762
        %v1801 = vpop.f32.mrf.mxu0
        %v1802 = vadd.f32 0.0, %v1801
        %v1803 = vpop.f32.mrf.mxu0
        %v1804 = vpop.f32.mrf.mxu0
        %v1805 = vpop.f32.mrf.mxu0
        %1806 = vdwg.mxu0
        %v1807 = vmul.f32 %v1802, 0.35355338
        %v1808 = vadd.f32 %v1807, %v547
        %v1809 = vsel %vm662, %v1808, -inf
        %1810 = vmax.xlane.f32.xlu0 %v1809
        %v1811 = vpop.xlane.xlu0 %1810
        %v1812 = vsub.f32 %v1808, %v1811
        %v1813 = vmul.f32 %v1812, 1.442695
        %v1814 = vpow.pop %v1813
        %v1815 = vsel %vm662, %v1814, 0.0
        %1816 = vadd.xlane.f32.xlu0 %v1815
        %v1817 = vpop.xlane.xlu0 %1816
        %v1818 = vrcp.pop %v1817
        %v1819 = vpack.c.bf16 %v1814, %v1814
        %1820 = vrot.lane.b32.xlu0 %v1583, 56
        %v1821 = vpop.permute.xlu0 %1820
        %v1823 = vsel %vm662, %v1819, 0
        %v1826 = vsel %vm727, %v1821, 0
        %1828 = vmatprep.subr.bf16.mxu0 0
        %1829 = vmatpush1.bf16.msra.mxu0 0
        %1830 = vmatprep.subr.bf16.mxu0 0
        %1831 = vmatpush1.bf16.msra.mxu0 0
        %1832 = vmatprep.subr.bf16.mxu0 0
        %1833 = vmatpush1.bf16.msra.mxu0 0
        %1834 = vmatprep.subr.bf16.mxu0 0
        %1835 = vmatpush1.bf16.msra.mxu0 0
        %1836 = vmatprep.subr.bf16.mxu0 0
        %1837 = vmatpush1.bf16.msra.mxu0 0
        %1838 = vmatprep.subr.bf16.mxu0 0
        %1839 = vmatpush1.bf16.msra.mxu0 0
        %1840 = vmatprep.subr.bf16.mxu0 0
        %1841 = vmatpush1.bf16.msra.mxu0 0
        %1842 = vmatprep.subr.bf16.mxu0 0
        %1843 = vmatpush1.bf16.msra.mxu0 %v1826
        %1844 = vmatprep.subr.bf16.mxu0 0
        %1845 = vmatpush2.bf16.msra.mxu0 0
        %1846 = vmatprep.subr.bf16.mxu0 0
        %1847 = vmatpush2.bf16.msra.mxu0 0
        %1848 = vmatprep.subr.bf16.mxu0 0
        %1849 = vmatpush2.bf16.msra.mxu0 0
        %1850 = vmatprep.subr.bf16.mxu0 0
        %1851 = vmatpush2.bf16.msra.mxu0 0
        %1852 = vmatprep.subr.bf16.mxu0 0
        %1853 = vmatpush2.bf16.msra.mxu0 0
        %1854 = vmatprep.subr.bf16.mxu0 0
        %1855 = vmatpush2.bf16.msra.mxu0 0
        %1856 = vmatprep.subr.bf16.mxu0 0
        %1857 = vmatpush2.bf16.msra.mxu0 0
        %1858 = vmatprep.subr.bf16.mxu0 0
        %1859 = vmatpush2.bf16.msra.mxu0 0
        %1860 = vmatprep.mubr.bf16.mxu0 0
        %1861 = vmatmul.mubr.bf16.gmra.mxu0 %v1823
        %v1862 = vpop.f32.mrf.mxu0
        %v1863 = vadd.f32 0.0, %v1862
        %v1864 = vpop.f32.mrf.mxu0
        %v1865 = vpop.f32.mrf.mxu0
        %v1866 = vpop.f32.mrf.mxu0
        %1867 = vdwg.mxu0
        %v1868 = vmul.f32 %v1863, %v1818
        %v1869 = vpack.c.bf16 %v1868, %v1868
        %v1871 = vsel %vm662, %v1869, 0
        %v1874 = vsel %vm727, %v1586, 0
        %1876 = vmatprep.subr.bf16.mxu0 0
        %1877 = vmatpush1.bf16.msra.mxu0 0
        %1878 = vmatprep.subr.bf16.mxu0 0
        %1879 = vmatpush1.bf16.msra.mxu0 0
        %1880 = vmatprep.subr.bf16.mxu0 0
        %1881 = vmatpush1.bf16.msra.mxu0 0
        %1882 = vmatprep.subr.bf16.mxu0 0
        %1883 = vmatpush1.bf16.msra.mxu0 0
        %1884 = vmatprep.subr.bf16.mxu0 0
        %1885 = vmatpush1.bf16.msra.mxu0 0
        %1886 = vmatprep.subr.bf16.mxu0 0
        %1887 = vmatpush1.bf16.msra.mxu0 0
        %1888 = vmatprep.subr.bf16.mxu0 0
        %1889 = vmatpush1.bf16.msra.mxu0 0
        %1890 = vmatprep.subr.bf16.mxu0 0
        %1891 = vmatpush1.bf16.msra.mxu0 %v1874
        %1892 = vmatprep.subr.bf16.mxu0 0
        %1893 = vmatpush2.bf16.msra.mxu0 0
        %1894 = vmatprep.subr.bf16.mxu0 0
        %1895 = vmatpush2.bf16.msra.mxu0 0
        %1896 = vmatprep.subr.bf16.mxu0 0
        %1897 = vmatpush2.bf16.msra.mxu0 0
        %1898 = vmatprep.subr.bf16.mxu0 0
        %1899 = vmatpush2.bf16.msra.mxu0 0
        %1900 = vmatprep.subr.bf16.mxu0 0
        %1901 = vmatpush2.bf16.msra.mxu0 0
        %1902 = vmatprep.subr.bf16.mxu0 0
        %1903 = vmatpush2.bf16.msra.mxu0 0
        %1904 = vmatprep.subr.bf16.mxu0 0
        %1905 = vmatpush2.bf16.msra.mxu0 0
        %1906 = vmatprep.subr.bf16.mxu0 0
        %1907 = vmatpush2.bf16.msra.mxu0 0
        %1908 = vmatprep.mubr.bf16.mxu0 0
        %1909 = vmatmul.mubr.bf16.gmra.mxu0 %v1871
        %v1910 = vpop.f32.mrf.mxu0
        %v1911 = vadd.f32 0.0, %v1910
        %v1912 = vpop.f32.mrf.mxu0
        %v1913 = vpop.f32.mrf.mxu0
        %v1914 = vpop.f32.mrf.mxu0
        %1915 = vdwg.mxu0
        %v1916 = vadd.f32 %v1756, %v1911
        %1917 = vrot.lane.b32.xlu0 %v1583, 112
        %v1918 = vpop.permute.xlu0 %1917
        %1919 = vrot.lane.b32.xlu0 %v1583, 80
        %v1920 = vpop.permute.xlu0 %1919
        %v1922 = vsel %vm662, %v1918, 0
        %v1925 = vsel %vm662, %v1920, 0
        %1927 = vmatprep.subr.bf16.mxu0 0
        %1928 = vmatpush1.bf16.xpose.msra.mxu0 0
        %1929 = vmatprep.subr.bf16.mxu0 0
        %1930 = vmatpush1.bf16.xpose.msra.mxu0 0
        %1931 = vmatprep.subr.bf16.mxu0 0
        %1932 = vmatpush1.bf16.xpose.msra.mxu0 0
        %1933 = vmatprep.subr.bf16.mxu0 0
        %1934 = vmatpush1.bf16.xpose.msra.mxu0 0
        %1935 = vmatprep.subr.bf16.mxu0 0
        %1936 = vmatpush1.bf16.xpose.msra.mxu0 0
        %1937 = vmatprep.subr.bf16.mxu0 0
        %1938 = vmatpush1.bf16.xpose.msra.mxu0 0
        %1939 = vmatprep.subr.bf16.mxu0 0
        %1940 = vmatpush1.bf16.xpose.msra.mxu0 0
        %1941 = vmatprep.subr.bf16.mxu0 0
        %1942 = vmatpush1.bf16.xpose.msra.mxu0 %v1925
        %1943 = vmatprep.subr.bf16.mxu0 0
        %1944 = vmatpush2.bf16.xpose.msra.mxu0 0
        %1945 = vmatprep.subr.bf16.mxu0 0
        %1946 = vmatpush2.bf16.xpose.msra.mxu0 0
        %1947 = vmatprep.subr.bf16.mxu0 0
        %1948 = vmatpush2.bf16.xpose.msra.mxu0 0
        %1949 = vmatprep.subr.bf16.mxu0 0
        %1950 = vmatpush2.bf16.xpose.msra.mxu0 0
        %1951 = vmatprep.subr.bf16.mxu0 0
        %1952 = vmatpush2.bf16.xpose.msra.mxu0 0
        %1953 = vmatprep.subr.bf16.mxu0 0
        %1954 = vmatpush2.bf16.xpose.msra.mxu0 0
        %1955 = vmatprep.subr.bf16.mxu0 0
        %1956 = vmatpush2.bf16.xpose.msra.mxu0 0
        %1957 = vmatprep.subr.bf16.mxu0 0
        %1958 = vmatpush2.bf16.xpose.msra.mxu0 0
        %1959 = vmatprep.mubr.bf16.mxu0 0
        %1960 = vmatmul.mubr.bf16.gmra.mxu0 %v1922
        %v1961 = vpop.f32.mrf.mxu0
        %v1962 = vadd.f32 0.0, %v1961
        %v1963 = vpop.f32.mrf.mxu0
        %v1964 = vpop.f32.mrf.mxu0
        %v1965 = vpop.f32.mrf.mxu0
        %1966 = vdwg.mxu0
        %v1967 = vmul.f32 %v1962, 0.35355338
        %v1968 = vadd.f32 %v1967, %v547
        %v1969 = vsel %vm662, %v1968, -inf
        %1970 = vmax.xlane.f32.xlu0 %v1969
        %v1971 = vpop.xlane.xlu0 %1970
        %v1972 = vsub.f32 %v1968, %v1971
        %v1973 = vmul.f32 %v1972, 1.442695
        %v1974 = vpow.pop %v1973
        %v1975 = vsel %vm662, %v1974, 0.0
        %1976 = vadd.xlane.f32.xlu0 %v1975
        %v1977 = vpop.xlane.xlu0 %1976
        %v1978 = vrcp.pop %v1977
        %v1979 = vpack.c.bf16 %v1974, %v1974
        %1980 = vrot.lane.b32.xlu0 %v1583, 48
        %v1981 = vpop.permute.xlu0 %1980
        %v1983 = vsel %vm662, %v1979, 0
        %v1986 = vsel %vm727, %v1981, 0
        %1988 = vmatprep.subr.bf16.mxu0 0
        %1989 = vmatpush1.bf16.msra.mxu0 0
        %1990 = vmatprep.subr.bf16.mxu0 0
        %1991 = vmatpush1.bf16.msra.mxu0 0
        %1992 = vmatprep.subr.bf16.mxu0 0
        %1993 = vmatpush1.bf16.msra.mxu0 0
        %1994 = vmatprep.subr.bf16.mxu0 0
        %1995 = vmatpush1.bf16.msra.mxu0 0
        %1996 = vmatprep.subr.bf16.mxu0 0
        %1997 = vmatpush1.bf16.msra.mxu0 0
        %1998 = vmatprep.subr.bf16.mxu0 0
        %1999 = vmatpush1.bf16.msra.mxu0 0
        %2000 = vmatprep.subr.bf16.mxu0 0
        %2001 = vmatpush1.bf16.msra.mxu0 0
        %2002 = vmatprep.subr.bf16.mxu0 0
        %2003 = vmatpush1.bf16.msra.mxu0 %v1986
        %2004 = vmatprep.subr.bf16.mxu0 0
        %2005 = vmatpush2.bf16.msra.mxu0 0
        %2006 = vmatprep.subr.bf16.mxu0 0
        %2007 = vmatpush2.bf16.msra.mxu0 0
        %2008 = vmatprep.subr.bf16.mxu0 0
        %2009 = vmatpush2.bf16.msra.mxu0 0
        %2010 = vmatprep.subr.bf16.mxu0 0
        %2011 = vmatpush2.bf16.msra.mxu0 0
        %2012 = vmatprep.subr.bf16.mxu0 0
        %2013 = vmatpush2.bf16.msra.mxu0 0
        %2014 = vmatprep.subr.bf16.mxu0 0
        %2015 = vmatpush2.bf16.msra.mxu0 0
        %2016 = vmatprep.subr.bf16.mxu0 0
        %2017 = vmatpush2.bf16.msra.mxu0 0
        %2018 = vmatprep.subr.bf16.mxu0 0
        %2019 = vmatpush2.bf16.msra.mxu0 0
        %2020 = vmatprep.mubr.bf16.mxu0 0
        %2021 = vmatmul.mubr.bf16.gmra.mxu0 %v1983
        %v2022 = vpop.f32.mrf.mxu0
        %v2023 = vadd.f32 0.0, %v2022
        %v2024 = vpop.f32.mrf.mxu0
        %v2025 = vpop.f32.mrf.mxu0
        %v2026 = vpop.f32.mrf.mxu0
        %2027 = vdwg.mxu0
        %v2028 = vmul.f32 %v2023, %v1978
        %v2029 = vpack.c.bf16 %v2028, %v2028
        %v2031 = vsel %vm662, %v2029, 0
        %v2034 = vsel %vm727, %v1587, 0
        %2036 = vmatprep.subr.bf16.mxu0 0
        %2037 = vmatpush1.bf16.msra.mxu0 0
        %2038 = vmatprep.subr.bf16.mxu0 0
        %2039 = vmatpush1.bf16.msra.mxu0 0
        %2040 = vmatprep.subr.bf16.mxu0 0
        %2041 = vmatpush1.bf16.msra.mxu0 0
        %2042 = vmatprep.subr.bf16.mxu0 0
        %2043 = vmatpush1.bf16.msra.mxu0 0
        %2044 = vmatprep.subr.bf16.mxu0 0
        %2045 = vmatpush1.bf16.msra.mxu0 0
        %2046 = vmatprep.subr.bf16.mxu0 0
        %2047 = vmatpush1.bf16.msra.mxu0 0
        %2048 = vmatprep.subr.bf16.mxu0 0
        %2049 = vmatpush1.bf16.msra.mxu0 0
        %2050 = vmatprep.subr.bf16.mxu0 0
        %2051 = vmatpush1.bf16.msra.mxu0 %v2034
        %2052 = vmatprep.subr.bf16.mxu0 0
        %2053 = vmatpush2.bf16.msra.mxu0 0
        %2054 = vmatprep.subr.bf16.mxu0 0
        %2055 = vmatpush2.bf16.msra.mxu0 0
        %2056 = vmatprep.subr.bf16.mxu0 0
        %2057 = vmatpush2.bf16.msra.mxu0 0
        %2058 = vmatprep.subr.bf16.mxu0 0
        %2059 = vmatpush2.bf16.msra.mxu0 0
        %2060 = vmatprep.subr.bf16.mxu0 0
        %2061 = vmatpush2.bf16.msra.mxu0 0
        %2062 = vmatprep.subr.bf16.mxu0 0
        %2063 = vmatpush2.bf16.msra.mxu0 0
        %2064 = vmatprep.subr.bf16.mxu0 0
        %2065 = vmatpush2.bf16.msra.mxu0 0
        %2066 = vmatprep.subr.bf16.mxu0 0
        %2067 = vmatpush2.bf16.msra.mxu0 0
        %2068 = vmatprep.mubr.bf16.mxu0 0
        %2069 = vmatmul.mubr.bf16.gmra.mxu0 %v2031
        %v2070 = vpop.f32.mrf.mxu0
        %v2071 = vadd.f32 0.0, %v2070
        %v2072 = vpop.f32.mrf.mxu0
        %v2073 = vpop.f32.mrf.mxu0
        %v2074 = vpop.f32.mrf.mxu0
        %2075 = vdwg.mxu0
        %v2076 = vadd.f32 %v1916, %v2071
        %2077 = vrot.lane.b32.xlu0 %v1583, 104
        %v2078 = vpop.permute.xlu0 %2077
        %2079 = vrot.lane.b32.xlu0 %v1583, 72
        %v2080 = vpop.permute.xlu0 %2079
        %v2082 = vsel %vm662, %v2078, 0
        %v2085 = vsel %vm662, %v2080, 0
        %2087 = vmatprep.subr.bf16.mxu0 0
        %2088 = vmatpush1.bf16.xpose.msra.mxu0 0
        %2089 = vmatprep.subr.bf16.mxu0 0
        %2090 = vmatpush1.bf16.xpose.msra.mxu0 0
        %2091 = vmatprep.subr.bf16.mxu0 0
        %2092 = vmatpush1.bf16.xpose.msra.mxu0 0
        %2093 = vmatprep.subr.bf16.mxu0 0
        %2094 = vmatpush1.bf16.xpose.msra.mxu0 0
        %2095 = vmatprep.subr.bf16.mxu0 0
        %2096 = vmatpush1.bf16.xpose.msra.mxu0 0
        %2097 = vmatprep.subr.bf16.mxu0 0
        %2098 = vmatpush1.bf16.xpose.msra.mxu0 0
        %2099 = vmatprep.subr.bf16.mxu0 0
        %2100 = vmatpush1.bf16.xpose.msra.mxu0 0
        %2101 = vmatprep.subr.bf16.mxu0 0
        %2102 = vmatpush1.bf16.xpose.msra.mxu0 %v2085
        %2103 = vmatprep.subr.bf16.mxu0 0
        %2104 = vmatpush2.bf16.xpose.msra.mxu0 0
        %2105 = vmatprep.subr.bf16.mxu0 0
        %2106 = vmatpush2.bf16.xpose.msra.mxu0 0
        %2107 = vmatprep.subr.bf16.mxu0 0
        %2108 = vmatpush2.bf16.xpose.msra.mxu0 0
        %2109 = vmatprep.subr.bf16.mxu0 0
        %2110 = vmatpush2.bf16.xpose.msra.mxu0 0
        %2111 = vmatprep.subr.bf16.mxu0 0
        %2112 = vmatpush2.bf16.xpose.msra.mxu0 0
        %2113 = vmatprep.subr.bf16.mxu0 0
        %2114 = vmatpush2.bf16.xpose.msra.mxu0 0
        %2115 = vmatprep.subr.bf16.mxu0 0
        %2116 = vmatpush2.bf16.xpose.msra.mxu0 0
        %2117 = vmatprep.subr.bf16.mxu0 0
        %2118 = vmatpush2.bf16.xpose.msra.mxu0 0
        %2119 = vmatprep.mubr.bf16.mxu0 0
        %2120 = vmatmul.mubr.bf16.gmra.mxu0 %v2082
        %v2121 = vpop.f32.mrf.mxu0
        %v2122 = vadd.f32 0.0, %v2121
        %v2123 = vpop.f32.mrf.mxu0
        %v2124 = vpop.f32.mrf.mxu0
        %v2125 = vpop.f32.mrf.mxu0
        %2126 = vdwg.mxu0
        %v2127 = vmul.f32 %v2122, 0.35355338
        %v2128 = vadd.f32 %v2127, %v547
        %v2129 = vsel %vm662, %v2128, -inf
        %2130 = vmax.xlane.f32.xlu0 %v2129
        %v2131 = vpop.xlane.xlu0 %2130
        %v2132 = vsub.f32 %v2128, %v2131
        %v2133 = vmul.f32 %v2132, 1.442695
        %v2134 = vpow.pop %v2133
        %v2135 = vsel %vm662, %v2134, 0.0
        %2136 = vadd.xlane.f32.xlu0 %v2135
        %v2137 = vpop.xlane.xlu0 %2136
        %v2138 = vrcp.pop %v2137
        %v2139 = vpack.c.bf16 %v2134, %v2134
        %2140 = vrot.lane.b32.xlu0 %v1583, 40
        %v2141 = vpop.permute.xlu0 %2140
        %v2143 = vsel %vm662, %v2139, 0
        %v2146 = vsel %vm727, %v2141, 0
        %2148 = vmatprep.subr.bf16.mxu0 0
        %2149 = vmatpush1.bf16.msra.mxu0 0
        %2150 = vmatprep.subr.bf16.mxu0 0
        %2151 = vmatpush1.bf16.msra.mxu0 0
        %2152 = vmatprep.subr.bf16.mxu0 0
        %2153 = vmatpush1.bf16.msra.mxu0 0
        %2154 = vmatprep.subr.bf16.mxu0 0
        %2155 = vmatpush1.bf16.msra.mxu0 0
        %2156 = vmatprep.subr.bf16.mxu0 0
        %2157 = vmatpush1.bf16.msra.mxu0 0
        %2158 = vmatprep.subr.bf16.mxu0 0
        %2159 = vmatpush1.bf16.msra.mxu0 0
        %2160 = vmatprep.subr.bf16.mxu0 0
        %2161 = vmatpush1.bf16.msra.mxu0 0
        %2162 = vmatprep.subr.bf16.mxu0 0
        %2163 = vmatpush1.bf16.msra.mxu0 %v2146
        %2164 = vmatprep.subr.bf16.mxu0 0
        %2165 = vmatpush2.bf16.msra.mxu0 0
        %2166 = vmatprep.subr.bf16.mxu0 0
        %2167 = vmatpush2.bf16.msra.mxu0 0
        %2168 = vmatprep.subr.bf16.mxu0 0
        %2169 = vmatpush2.bf16.msra.mxu0 0
        %2170 = vmatprep.subr.bf16.mxu0 0
        %2171 = vmatpush2.bf16.msra.mxu0 0
        %2172 = vmatprep.subr.bf16.mxu0 0
        %2173 = vmatpush2.bf16.msra.mxu0 0
        %2174 = vmatprep.subr.bf16.mxu0 0
        %2175 = vmatpush2.bf16.msra.mxu0 0
        %2176 = vmatprep.subr.bf16.mxu0 0
        %2177 = vmatpush2.bf16.msra.mxu0 0
        %2178 = vmatprep.subr.bf16.mxu0 0
        %2179 = vmatpush2.bf16.msra.mxu0 0
        %2180 = vmatprep.mubr.bf16.mxu0 0
        %2181 = vmatmul.mubr.bf16.gmra.mxu0 %v2143
        %v2182 = vpop.f32.mrf.mxu0
        %v2183 = vadd.f32 0.0, %v2182
        %v2184 = vpop.f32.mrf.mxu0
        %v2185 = vpop.f32.mrf.mxu0
        %v2186 = vpop.f32.mrf.mxu0
        %2187 = vdwg.mxu0
        %v2188 = vmul.f32 %v2183, %v2138
        %v2189 = vpack.c.bf16 %v2188, %v2188
        %v2191 = vsel %vm662, %v2189, 0
        %v2194 = vsel %vm727, %v1588, 0
        %2196 = vmatprep.subr.bf16.mxu0 0
        %2197 = vmatpush1.bf16.msra.mxu0 0
        %2198 = vmatprep.subr.bf16.mxu0 0
        %2199 = vmatpush1.bf16.msra.mxu0 0
        %2200 = vmatprep.subr.bf16.mxu0 0
        %2201 = vmatpush1.bf16.msra.mxu0 0
        %2202 = vmatprep.subr.bf16.mxu0 0
        %2203 = vmatpush1.bf16.msra.mxu0 0
        %2204 = vmatprep.subr.bf16.mxu0 0
        %2205 = vmatpush1.bf16.msra.mxu0 0
        %2206 = vmatprep.subr.bf16.mxu0 0
        %2207 = vmatpush1.bf16.msra.mxu0 0
        %2208 = vmatprep.subr.bf16.mxu0 0
        %2209 = vmatpush1.bf16.msra.mxu0 0
        %2210 = vmatprep.subr.bf16.mxu0 0
        %2211 = vmatpush1.bf16.msra.mxu0 %v2194
        %2212 = vmatprep.subr.bf16.mxu0 0
        %2213 = vmatpush2.bf16.msra.mxu0 0
        %2214 = vmatprep.subr.bf16.mxu0 0
        %2215 = vmatpush2.bf16.msra.mxu0 0
        %2216 = vmatprep.subr.bf16.mxu0 0
        %2217 = vmatpush2.bf16.msra.mxu0 0
        %2218 = vmatprep.subr.bf16.mxu0 0
        %2219 = vmatpush2.bf16.msra.mxu0 0
        %2220 = vmatprep.subr.bf16.mxu0 0
        %2221 = vmatpush2.bf16.msra.mxu0 0
        %2222 = vmatprep.subr.bf16.mxu0 0
        %2223 = vmatpush2.bf16.msra.mxu0 0
        %2224 = vmatprep.subr.bf16.mxu0 0
        %2225 = vmatpush2.bf16.msra.mxu0 0
        %2226 = vmatprep.subr.bf16.mxu0 0
        %2227 = vmatpush2.bf16.msra.mxu0 0
        %2228 = vmatprep.mubr.bf16.mxu0 0
        %2229 = vmatmul.mubr.bf16.gmra.mxu0 %v2191
        %v2230 = vpop.f32.mrf.mxu0
        %v2231 = vadd.f32 0.0, %v2230
        %v2232 = vpop.f32.mrf.mxu0
        %v2233 = vpop.f32.mrf.mxu0
        %v2234 = vpop.f32.mrf.mxu0
        %2235 = vdwg.mxu0
        %v2236 = vadd.f32 %v2076, %v2231
        %s2237 = scalar_lea.vmem %s8, 1
        %v2238 = vld [vmem:[%s2237] sm:$0x1]
        %s2239 = scalar_lea.vmem %s9, 1
        %v2240 = vld [vmem:[%s2239] sm:$0x1]
        %v2241 = vsel %vm550, %v2236, 0.0
        %2242 = vadd.xlane.f32.xlu0 %v2241
        %v2243 = vpop.xlane.xlu0 %2242
        %v2244 = vmul.f32 %v2243, %v554
        %v2245 = vsub.f32 %v2236, %v2244
        %v2246 = vmul.f32 %v2245, %v2245
        %v2247 = vsel %vm550, %v2246, 0.0
        %2248 = vadd.xlane.f32.xlu0 %v2247
        %v2249 = vpop.xlane.xlu0 %2248
        %v2250 = vmul.f32 %v2249, %v554
        %v2251 = vadd.f32 %v2250, 1e-05
        %v2252 = vrsqrt.pop %v2251
        %v2253 = vmul.f32 %v2245, %v2252
        %v2255 = vlaneseq
        %v2256 = vshrl.u32 %v2255, 7
        %v2257 = vsub.s32 0, %v2256
        %v2258 = vrot.slane %v2238, %v2257
        %v2260 = vmul.f32 %v2253, %v2258
        %v2262 = vlaneseq
        %v2263 = vshrl.u32 %v2262, 7
        %v2264 = vsub.s32 0, %v2263
        %v2265 = vrot.slane %v2240, %v2264
        %v2267 = vadd.f32 %v2260, %v2265
        %v2268 = vpack.c.bf16 %v2267, %v2267
        %s2269 = scalar_lea.vmem %s10, 16
        %v2270 = vld [vmem:[%s2269] sm:$0xf]
        %v2271 = vld [vmem:[%s2269 + $0x4] sm:$0xf]
        %v2272 = vld [vmem:[%s2269 + $0x8] sm:$0xf]
        %v2273 = vld [vmem:[%s2269 + $0xc] sm:$0xf]
        %s2274 = scalar_lea.vmem %s11, 1
        %v2275 = vld [vmem:[%s2274] sm:$0x1]
        %v2277 = vlaneseq
        %v2278 = vshrl.u32 %v2277, 7
        %v2279 = vsub.s32 0, %v2278
        %v2280 = vrot.slane %v2275, %v2279
        %v2286 = vunpack.c.l.b16 %v2270
        %v2287 = vunpack.c.l.b16 %v2271
        %v2288 = vunpack.c.l.b16 %v2272
        %v2289 = vunpack.c.l.b16 %v2273
        %v2290 = vpack.c.b16 %v2287, %v2286
        %v2291 = vpack.c.b16 %v2289, %v2288
        %v2295 = vsel %vm550, %v2268, 0
        %2297 = vmatprep.subr.bf16.mxu0 0
        %2298 = vmatpush1.bf16.msra.mxu0 0
        %2299 = vmatprep.subr.bf16.mxu0 0
        %2300 = vmatpush1.bf16.msra.mxu0 0
        %2301 = vmatprep.subr.bf16.mxu0 0
        %2302 = vmatpush1.bf16.msra.mxu0 0
        %2303 = vmatprep.subr.bf16.mxu0 0
        %2304 = vmatpush1.bf16.msra.mxu0 0
        %2305 = vmatprep.subr.bf16.mxu0 0
        %2306 = vmatpush1.bf16.msra.mxu0 0
        %2307 = vmatprep.subr.bf16.mxu0 0
        %2308 = vmatpush1.bf16.msra.mxu0 0
        %2309 = vmatprep.subr.bf16.mxu0 0
        %2310 = vmatpush1.bf16.msra.mxu0 %v2291
        %2311 = vmatprep.subr.bf16.mxu0 0
        %2312 = vmatpush1.bf16.msra.mxu0 %v2290
        %2313 = vmatprep.subr.bf16.mxu0 0
        %2314 = vmatpush2.bf16.msra.mxu0 0
        %2315 = vmatprep.subr.bf16.mxu0 0
        %2316 = vmatpush2.bf16.msra.mxu0 0
        %2317 = vmatprep.subr.bf16.mxu0 0
        %2318 = vmatpush2.bf16.msra.mxu0 0
        %2319 = vmatprep.subr.bf16.mxu0 0
        %2320 = vmatpush2.bf16.msra.mxu0 0
        %2321 = vmatprep.subr.bf16.mxu0 0
        %2322 = vmatpush2.bf16.msra.mxu0 0
        %2323 = vmatprep.subr.bf16.mxu0 0
        %2324 = vmatpush2.bf16.msra.mxu0 0
        %2325 = vmatprep.subr.bf16.mxu0 0
        %2326 = vmatpush2.bf16.msra.mxu0 0
        %2327 = vmatprep.subr.bf16.mxu0 0
        %2328 = vmatpush2.bf16.msra.mxu0 0
        %2329 = vmatprep.mubr.bf16.mxu0 0
        %2330 = vmatmul.mubr.bf16.gmra.mxu0 %v2295
        %v2331 = vpop.f32.mrf.mxu0
        %v2332 = vadd.f32 %v2280, %v2331
        %v2333 = vpop.f32.mrf.mxu0
        %v2334 = vpop.f32.mrf.mxu0
        %v2335 = vpop.f32.mrf.mxu0
        %2336 = vdwg.mxu0
        %v2337 = vmax.f32 %v2332, 0.0
        %v2338 = vpack.c.bf16 %v2337, %v2337
        %s2339 = scalar_lea.vmem %s12, 32
        %v2340 = vld [vmem:[%s2339] sm:$0xf]
        %v2341 = vld [vmem:[%s2339 + $0x4] sm:$0xf]
        %v2342 = vld [vmem:[%s2339 + $0x8] sm:$0xf]
        %v2343 = vld [vmem:[%s2339 + $0xc] sm:$0xf]
        %v2344 = vld [vmem:[%s2339 + $0x10] sm:$0xf]
        %v2345 = vld [vmem:[%s2339 + $0x14] sm:$0xf]
        %v2346 = vld [vmem:[%s2339 + $0x18] sm:$0xf]
        %v2347 = vld [vmem:[%s2339 + $0x1c] sm:$0xf]
        %v2356 = vunpack.c.l.b16 %v2340
        %v2357 = vunpack.c.l.b16 %v2341
        %v2358 = vunpack.c.l.b16 %v2342
        %v2359 = vunpack.c.l.b16 %v2343
        %v2360 = vunpack.c.l.b16 %v2344
        %v2361 = vunpack.c.l.b16 %v2345
        %v2362 = vunpack.c.l.b16 %v2346
        %v2363 = vunpack.c.l.b16 %v2347
        %v2364 = vpack.c.b16 %v2357, %v2356
        %v2365 = vpack.c.b16 %v2359, %v2358
        %v2366 = vpack.c.b16 %v2361, %v2360
        %v2367 = vpack.c.b16 %v2363, %v2362
        %v2373 = vsel %vm1430, %v2338, 0
        %2375 = vmatprep.subr.bf16.mxu0 0
        %2376 = vmatpush1.bf16.msra.mxu0 0
        %2377 = vmatprep.subr.bf16.mxu0 0
        %2378 = vmatpush1.bf16.msra.mxu0 0
        %2379 = vmatprep.subr.bf16.mxu0 0
        %2380 = vmatpush1.bf16.msra.mxu0 0
        %2381 = vmatprep.subr.bf16.mxu0 0
        %2382 = vmatpush1.bf16.msra.mxu0 0
        %2383 = vmatprep.subr.bf16.mxu0 0
        %2384 = vmatpush1.bf16.msra.mxu0 %v2367
        %2385 = vmatprep.subr.bf16.mxu0 0
        %2386 = vmatpush1.bf16.msra.mxu0 %v2366
        %2387 = vmatprep.subr.bf16.mxu0 0
        %2388 = vmatpush1.bf16.msra.mxu0 %v2365
        %2389 = vmatprep.subr.bf16.mxu0 0
        %2390 = vmatpush1.bf16.msra.mxu0 %v2364
        %2391 = vmatprep.subr.bf16.mxu0 0
        %2392 = vmatpush2.bf16.msra.mxu0 0
        %2393 = vmatprep.subr.bf16.mxu0 0
        %2394 = vmatpush2.bf16.msra.mxu0 0
        %2395 = vmatprep.subr.bf16.mxu0 0
        %2396 = vmatpush2.bf16.msra.mxu0 0
        %2397 = vmatprep.subr.bf16.mxu0 0
        %2398 = vmatpush2.bf16.msra.mxu0 0
        %2399 = vmatprep.subr.bf16.mxu0 0
        %2400 = vmatpush2.bf16.msra.mxu0 0
        %2401 = vmatprep.subr.bf16.mxu0 0
        %2402 = vmatpush2.bf16.msra.mxu0 0
        %2403 = vmatprep.subr.bf16.mxu0 0
        %2404 = vmatpush2.bf16.msra.mxu0 0
        %2405 = vmatprep.subr.bf16.mxu0 0
        %2406 = vmatpush2.bf16.msra.mxu0 0
        %2407 = vmatprep.mubr.bf16.mxu0 0
        %2408 = vmatmul.mubr.bf16.gmra.mxu0 %v2373
        %v2409 = vpop.f32.mrf.mxu0
        %v2410 = vadd.f32 0.0, %v2409
        %v2411 = vpop.f32.mrf.mxu0
        %v2412 = vpop.f32.mrf.mxu0
        %v2413 = vpop.f32.mrf.mxu0
        %2414 = vdwg.mxu0
        %v2415 = vadd.f32 %v2236, %v2410
        %s2416 = scalar_lea.vmem %s13, 1
        %v2417 = vld [vmem:[%s2416] sm:$0x1]
        %v2419 = vlaneseq
        %v2420 = vshrl.u32 %v2419, 7
        %v2421 = vsub.s32 0, %v2420
        %v2422 = vrot.slane %v2417, %v2421
        %v2424 = vadd.f32 %v2415, %v2422
        %v2425 = vpack.c.bf16 %v2424, %v2424
        %v2426 = vld [vmem:[%s14] sm:$0xf]
        %v2427 = vld [vmem:[%s14 + $0x4] sm:$0xf]
        %v2428 = vld [vmem:[%s14 + $0x8] sm:$0xf]
        %v2429 = vld [vmem:[%s14 + $0xc] sm:$0xf]
        %v2430 = vld [vmem:[%s15] sm:$0x1]
        %v2432 = vlaneseq
        %v2433 = vshrl.u32 %v2432, 7
        %v2434 = vsub.s32 0, %v2433
        %v2435 = vrot.slane %v2430, %v2434
        %v2441 = vunpack.c.l.b16 %v2426
        %v2442 = vunpack.c.l.b16 %v2427
        %v2443 = vunpack.c.l.b16 %v2428
        %v2444 = vunpack.c.l.b16 %v2429
        %v2445 = vpack.c.b16 %v2442, %v2441
        %v2446 = vpack.c.b16 %v2444, %v2443
        %v2450 = vsel %vm550, %v2425, 0
        %2452 = vmatprep.subr.bf16.mxu0 0
        %2453 = vmatpush1.bf16.msra.mxu0 0
        %2454 = vmatprep.subr.bf16.mxu0 0
        %2455 = vmatpush1.bf16.msra.mxu0 0
        %2456 = vmatprep.subr.bf16.mxu0 0
        %2457 = vmatpush1.bf16.msra.mxu0 0
        %2458 = vmatprep.subr.bf16.mxu0 0
        %2459 = vmatpush1.bf16.msra.mxu0 0
        %2460 = vmatprep.subr.bf16.mxu0 0
        %2461 = vmatpush1.bf16.msra.mxu0 0
        %2462 = vmatprep.subr.bf16.mxu0 0
        %2463 = vmatpush1.bf16.msra.mxu0 0
        %2464 = vmatprep.subr.bf16.mxu0 0
        %2465 = vmatpush1.bf16.msra.mxu0 %v2446
        %2466 = vmatprep.subr.bf16.mxu0 0
        %2467 = vmatpush1.bf16.msra.mxu0 %v2445
        %2468 = vmatprep.subr.bf16.mxu0 0
        %2469 = vmatpush2.bf16.msra.mxu0 0
        %2470 = vmatprep.subr.bf16.mxu0 0
        %2471 = vmatpush2.bf16.msra.mxu0 0
        %2472 = vmatprep.subr.bf16.mxu0 0
        %2473 = vmatpush2.bf16.msra.mxu0 0
        %2474 = vmatprep.subr.bf16.mxu0 0
        %2475 = vmatpush2.bf16.msra.mxu0 0
        %2476 = vmatprep.subr.bf16.mxu0 0
        %2477 = vmatpush2.bf16.msra.mxu0 0
        %2478 = vmatprep.subr.bf16.mxu0 0
        %2479 = vmatpush2.bf16.msra.mxu0 0
        %2480 = vmatprep.subr.bf16.mxu0 0
        %2481 = vmatpush2.bf16.msra.mxu0 0
        %2482 = vmatprep.subr.bf16.mxu0 0
        %2483 = vmatpush2.bf16.msra.mxu0 0
        %2484 = vmatprep.mubr.bf16.mxu0 0
        %2485 = vmatmul.mubr.bf16.gmra.mxu0 %v2450
        %v2486 = vpop.f32.mrf.mxu0
        %v2487 = vadd.f32 %v2435, %v2486
        %v2488 = vpop.f32.mrf.mxu0
        %v2489 = vpop.f32.mrf.mxu0
        %v2490 = vpop.f32.mrf.mxu0
        %2491 = vdwg.mxu0
        %2492 = vst [vmem:[%s523] sm:$0xff] %v2487
        %s2493 = sand.u32 %s384, 1
        %s2494 = scalar_lea.sflag [#allocation3], %s2493
        %s2495 = sand.u32 %s384, 1
        %s2496 = smul.addr %s2495, 8
        %s2497 = scalar_lea.vmem [#allocation2], %s2496
        // Predicated region
        $region85: #{model_forward.1} parent=83 // pred_check
          %p2498 = pneg %p394
        $region86: #{model_forward.1} parent=83 // pred_check_branch
          %2500 = sbr.rel (%p2498) target = $region88
        $region87: #{model_forward.1} parent=83 // pred_region
          %s2502 = ssub.s32 128, 128
          %2503 = vsyncadd %s2494, %s2502
          %s2504 = smul.addr %s30, 128
          %s2505 = scalar_lea.hbm %s16, %s2504
          %s2507 = sshll.u32 %s2497, 4
          %s2508 = int_to_ptr.vmem [resolvable:$true] %s2507
          %2510 = dma.vmem_to_hbm [thread:$0]  %s2508, 128, %s2505, %s2494
        $region88: #{model_forward.1} parent=83 // pred_fallthru
          _
      $region84: #{model_forward.1} parent=5 // pred_fallthru
        _
      %p2511 = scmp.le.s32.totalorder 2, %s25
      // Predicated region
      $region89: #{model_forward.1} parent=5 // pred_check
        %p2512 = pneg %p2511
      $region90: #{model_forward.1} parent=5 // pred_check_branch
        %2514 = sbr.rel (%p2512) target = $region92
      $region91: #{model_forward.1} parent=5 // pred_region
        %s2515 = ssub.s32 %s25, 2
        // Predicated region
        $region93: #{model_forward.1} parent=91 // pred_check
          %p2516 = pneg %p400
        $region94: #{model_forward.1} parent=91 // pred_check_branch
          %2518 = sbr.rel (%p2516) target = $region96
        $region95: #{model_forward.1} parent=91 // pred_region
          %s2519 = sand.u32 %s385, 1
          %s2520 = scalar_lea.sflag [#allocation3], %s2519
          %s2521 = sand.u32 %s385, 1
          %s2522 = smul.addr %s2521, 8
          %s2523 = scalar_lea.vmem [#allocation2], %s2522
          %2524 = dma.done %s2520, 128
        $region96: #{model_forward.1} parent=91 // pred_fallthru
          _
      $region92: #{model_forward.1} parent=5 // pred_fallthru
        _
    $region6: #{model_forward.1} parent=1 // loop_footer
      %s29 = sadd.s32 1, %s25
    $region7: #{model_forward.1} parent=1 // loop_footer_branch
      %24 = sbr.rel target = $region3
    $region8: #{model_forward.1} parent=1 // loop_exit
      _
    %2525 = vsyncpa [#allocation3], 1
    %s2526 = scalar_lea.sflag [#allocation3], 1
    %2527 = vsyncpa %s2526, 1

</llo_original>
